<compile_context>
chip_gen: v5e
topology: v5e:2x2
jax: 0.10.0
libtpu: 0.0.40
codegen_flags: <defaults>
</compile_context>

<pallas_src>
import functools
import math

import jax
import jax.numpy as jnp
from jax.experimental import pallas as pl
from jax.experimental.pallas import tpu as pltpu


# ----------------------------------------------------------------------------
# In-kernel GroupNorm + ReLU on a channel-major (C, H*W) f32 slab.
# Groups are contiguous blocks of `cs` channel rows.  Big reductions are lane
# (XLU) reductions; per-group combines are tiny static-sliced scalar reduces.
# ----------------------------------------------------------------------------
def _group_norm_relu(acc, gamma_col, beta_col, cs, nc, eps):
    c = acc.shape[0]
    g = c // cs
    inv_n = 1.0 / nc

    s_ch = jnp.sum(acc, axis=1, keepdims=True)                         # (C, 1)
    mean_col = jnp.concatenate(
        [jnp.broadcast_to(jnp.sum(s_ch[i * cs:(i + 1) * cs, :], keepdims=True) * inv_n,
                          (cs, 1))
         for i in range(g)], axis=0)                                   # (C, 1)
    d = acc - mean_col
    sq_ch = jnp.sum(d * d, axis=1, keepdims=True)                      # (C, 1)
    rstd_col = jnp.concatenate(
        [jnp.broadcast_to(
            jax.lax.rsqrt(jnp.sum(sq_ch[i * cs:(i + 1) * cs, :], keepdims=True) * inv_n
                          + eps),
            (cs, 1))
         for i in range(g)], axis=0)                                   # (C, 1)
    y = d * rstd_col * gamma_col + beta_col
    return jnp.maximum(y, 0.0)


# ----------------------------------------------------------------------------
# Fused ConvSRU kernel: one batch element per grid step.
# ----------------------------------------------------------------------------
def _conv_sru_kernel(x_ref, mask_ref,
                     w1_ref, b1_ref, g1_ref, bt1_ref,
                     w2u_ref, b2u_ref, g2u_ref, bt2u_ref,
                     w2o_ref, b2o_ref, g2o_ref, bt2o_ref,
                     h_ref, hnew_ref, *, H, W, hidden, cs, eps):
    HW = H * W
    nc = float(HW * cs)
    masks = mask_ref[...]                                # (9, HW) bf16 {0,1}

    def shifted_taps(y):
        """9 border-masked shifted copies of a bf16 (C, H*W) flat map (pad=1 taps).

        tap (dy,dx): out[:, f] = y[:, f + (dy-1)*W + (dx-1)] where valid, else 0.
        Implemented as static lane-slice rotations (== jnp.roll) + mask multiply,
        i.e. pure lane/VPU work, no reshapes and no in-HBM padding.
        """
        outs = []
        k = 0
        for dy in range(3):
            for dx in range(3):
                off = (dy - 1) * W + (dx - 1)
                s = (-off) % HW
                if s == 0:
                    r = y
                else:
                    r = jnp.concatenate([y[:, HW - s:], y[:, :HW - s]], axis=1)
                outs.append(r * masks[k:k + 1, :])       # bf16 * bf16
                k += 1
        return outs

    # ---- conv1 (both gates fused along M) : single K=9*cin GEMM --------------
    x = x_ref[...]                                       # (cin, HW) bf16
    p1 = jnp.concatenate(shifted_taps(x), axis=0)        # (9*cin, HW) bf16
    acc1 = jnp.dot(w1_ref[...], p1,
                   preferred_element_type=jnp.float32) + b1_ref[...]     # (2*hid, HW)
    y1 = _group_norm_relu(acc1, g1_ref[...], bt1_ref[...], cs, nc, eps)
    y1 = y1.astype(jnp.bfloat16)                         # stays in VMEM/vregs

    # ---- conv2 per gate : single K=9*hidden GEMM each -----------------------
    taps2 = shifted_taps(y1)                             # 9 x (2*hid, HW) bf16
    p2u = jnp.concatenate([tp[:hidden, :] for tp in taps2], axis=0)      # (9*hid, HW)
    p2o = jnp.concatenate([tp[hidden:, :] for tp in taps2], axis=0)
    acc_u = jnp.dot(w2u_ref[...], p2u,
                    preferred_element_type=jnp.float32) + b2u_ref[...]   # (hid, HW)
    acc_o = jnp.dot(w2o_ref[...], p2o,
                    preferred_element_type=jnp.float32) + b2o_ref[...]
    u = jax.nn.sigmoid(_group_norm_relu(acc_u, g2u_ref[...], bt2u_ref[...], cs, nc, eps))
    tg = jnp.tanh(_group_norm_relu(acc_o, g2o_ref[...], bt2o_ref[...], cs, nc, eps))

    # ---- SRU combine: h*(1-u) + t*u, written lane-dense NCHW-native ---------
    h = h_ref[...]                                       # (hid, HW) f32
    hnew_ref[...] = h + u * (tg - h)


# ----------------------------------------------------------------------------
# JAX wrapper
# ----------------------------------------------------------------------------
def conv_sru_forward(params, x_nchw, h_nchw, hidden_size):
    B, cin, H, W = x_nchw.shape
    HW = H * W
    G = min(8, hidden_size)
    assert hidden_size % G == 0, "hidden_size must be divisible by GroupNorm groups"
    cs = hidden_size // G
    eps = 1e-5

    # NCHW-native, spatial-flattened views (reshapes only: no transpose, no pad).
    x_flat = x_nchw.reshape(B, cin, HW).astype(jnp.bfloat16)
    h_flat = h_nchw.reshape(B, hidden_size, HW).astype(jnp.float32)

    # Static border-validity masks for the 9 conv taps (handles pad=1 in-kernel).
    ii = jnp.arange(HW, dtype=jnp.int32)
    hh, ww = ii // W, ii % W
    masks = jnp.stack(
        [((hh + dy - 1 >= 0) & (hh + dy - 1 < H) &
          (ww + dx - 1 >= 0) & (ww + dx - 1 < W))
         for dy in range(3) for dx in range(3)]).astype(jnp.bfloat16)     # (9, HW)

    def prep_w(conv):     # (9, cin_, cout) -> (cout, 9*cin_) bf16, tap-major K
        w = conv["w"]
        k9, ci, co = w.shape
        return jnp.transpose(w, (2, 0, 1)).reshape(co, k9 * ci).astype(jnp.bfloat16)

    def col(v):           # (1, C) -> (C, 1) f32 column
        return v.reshape(-1, 1).astype(jnp.float32)

    up, og = params["update_gate"], params["out_gate"]

    # conv1 of both gates fused along the output-channel (M) axis.
    w1 = jnp.concatenate([prep_w(up["conv1"]), prep_w(og["conv1"])], axis=0)
    b1 = jnp.concatenate([col(up["conv1"]["b"]), col(og["conv1"]["b"])], axis=0)
    g1 = jnp.concatenate([col(up["conv1"]["gamma"]), col(og["conv1"]["gamma"])], axis=0)
    bt1 = jnp.concatenate([col(up["conv1"]["beta"]), col(og["conv1"]["beta"])], axis=0)

    def bcast(shape):
        return pl.BlockSpec(shape, lambda b, _s=shape: (0,) * len(_s))

    kernel = functools.partial(_conv_sru_kernel, H=H, W=W, hidden=hidden_size,
                               cs=cs, eps=eps)

    hn = pl.pallas_call(
        kernel,
        grid=(B,),
        out_shape=jax.ShapeDtypeStruct((B, hidden_size, HW), jnp.float32),
        in_specs=[
            pl.BlockSpec((None, cin, HW), lambda b: (b, 0, 0)),
            bcast((9, HW)),
            bcast((2 * hidden_size, 9 * cin)),
            bcast((2 * hidden_size, 1)),
            bcast((2 * hidden_size, 1)),
            bcast((2 * hidden_size, 1)),
            bcast((hidden_size, 9 * hidden_size)),
            bcast((hidden_size, 1)),
            bcast((hidden_size, 1)),
            bcast((hidden_size, 1)),
            bcast((hidden_size, 9 * hidden_size)),
            bcast((hidden_size, 1)),
            bcast((hidden_size, 1)),
            bcast((hidden_size, 1)),
            pl.BlockSpec((None, hidden_size, HW), lambda b: (b, 0, 0)),
        ],
        out_specs=pl.BlockSpec((None, hidden_size, HW), lambda b: (b, 0, 0)),
        compiler_params=pltpu.CompilerParams(
            dimension_semantics=("parallel",),
            vmem_limit_bytes=32 * 1024 * 1024),
    )(x_flat, masks,
      w1, b1, g1, bt1,
      prep_w(up["conv2"]), col(up["conv2"]["b"]),
      col(up["conv2"]["gamma"]), col(up["conv2"]["beta"]),
      prep_w(og["conv2"]), col(og["conv2"]["b"]),
      col(og["conv2"]["gamma"]), col(og["conv2"]["beta"]),
      h_flat)

    return hn.reshape(B, hidden_size, H, W)               # already NCHW-ordered


# ----------------------------------------------------------------------------
# Deterministic parameter init (semantically matches PyTorch Conv2d/GroupNorm
# defaults: uniform +-1/sqrt(fan_in) conv weight/bias, gamma=1, beta=0).
# Conv weights are stored tap-major (9, Cin, Cout).
# ----------------------------------------------------------------------------
def _init_conv_gn(key, cin, cout):
    k1, k2 = jax.random.split(key)
    bound = 1.0 / math.sqrt(9 * cin)
    w = jax.random.uniform(k1, (9, cin, cout), jnp.float32, -bound, bound)
    bias = jax.random.uniform(k2, (1, cout), jnp.float32, -bound, bound)
    return dict(w=w, b=bias,
                gamma=jnp.ones((1, cout), jnp.float32),
                beta=jnp.zeros((1, cout), jnp.float32))


def _init_unet_conv2(key, in_size, out_size):
    k1, k2 = jax.random.split(key)
    return dict(conv1=_init_conv_gn(k1, in_size, out_size),
                conv2=_init_conv_gn(k2, out_size, out_size))


def init_conv_sru(key, input_size, hidden_size):
    k1, k2 = jax.random.split(key)
    return dict(update_gate=_init_unet_conv2(k1, input_size, hidden_size),
                out_gate=_init_unet_conv2(k2, input_size, hidden_size))


if __name__ == "__main__":
    B, CIN, H, W = 2, 4, 16, 16
    HIDDEN = 32

    root = jax.random.PRNGKey(0)
    kp, kx, kh = jax.random.split(root, 3)

    params = init_conv_sru(kp, CIN, HIDDEN)
    x = jax.random.normal(kx, (B, CIN, H, W), jnp.float32)     # NCHW, like PyTorch
    h = jax.random.normal(kh, (B, HIDDEN, H, W), jnp.float32)  # NCHW hidden state

    fwd = jax.jit(functools.partial(conv_sru_forward, hidden_size=HIDDEN))
    h_new = fwd(params, x, h)
    jax.block_until_ready(h_new)

    assert h_new.shape == (B, HIDDEN, H, W)
    assert jnp.all(jnp.isfinite(h_new))
    print("KERNEL_OK")
</pallas_src>

<mosaic_0001>
module attributes {stable_mosaic.version = 11 : i64} {
  func.func @_conv_sru_kernel(%arg0: i32, %arg1: memref<1x4x256xbf16, #tpu.memory_space<vmem>>, %arg2: memref<9x256xbf16, #tpu.memory_space<vmem>>, %arg3: memref<64x36xbf16, #tpu.memory_space<vmem>>, %arg4: memref<64x1xf32, #tpu.memory_space<vmem>>, %arg5: memref<64x1xf32, #tpu.memory_space<vmem>>, %arg6: memref<64x1xf32, #tpu.memory_space<vmem>>, %arg7: memref<32x288xbf16, #tpu.memory_space<vmem>>, %arg8: memref<32x1xf32, #tpu.memory_space<vmem>>, %arg9: memref<32x1xf32, #tpu.memory_space<vmem>>, %arg10: memref<32x1xf32, #tpu.memory_space<vmem>>, %arg11: memref<32x288xbf16, #tpu.memory_space<vmem>>, %arg12: memref<32x1xf32, #tpu.memory_space<vmem>>, %arg13: memref<32x1xf32, #tpu.memory_space<vmem>>, %arg14: memref<32x1xf32, #tpu.memory_space<vmem>>, %arg15: memref<1x32x256xf32, #tpu.memory_space<vmem>>, %arg16: memref<1x32x256xf32, #tpu.memory_space<vmem>>) attributes {dimension_semantics = [#tpu.dimension_semantics<parallel>], iteration_bounds = array<i64: 2>, scalar_prefetch = 0 : i64, scratch_operands = 0 : i64, tpu.core_type = #tpu.core_type<tc>, window_params = [{transform_indices = @transform_0, window_bounds = array<i64: 1, 4, 256>}, {pipeline_mode = #tpu.pipeline_mode<synchronous>, transform_indices = @transform_1, window_bounds = array<i64: 9, 256>}, {pipeline_mode = #tpu.pipeline_mode<synchronous>, transform_indices = @transform_2, window_bounds = array<i64: 64, 36>}, {pipeline_mode = #tpu.pipeline_mode<synchronous>, transform_indices = @transform_3, window_bounds = array<i64: 64, 1>}, {pipeline_mode = #tpu.pipeline_mode<synchronous>, transform_indices = @transform_4, window_bounds = array<i64: 64, 1>}, {pipeline_mode = #tpu.pipeline_mode<synchronous>, transform_indices = @transform_5, window_bounds = array<i64: 64, 1>}, {pipeline_mode = #tpu.pipeline_mode<synchronous>, transform_indices = @transform_6, window_bounds = array<i64: 32, 288>}, {pipeline_mode = #tpu.pipeline_mode<synchronous>, transform_indices = @transform_7, window_bounds = array<i64: 32, 1>}, {pipeline_mode = #tpu.pipeline_mode<synchronous>, transform_indices = @transform_8, window_bounds = array<i64: 32, 1>}, {pipeline_mode = #tpu.pipeline_mode<synchronous>, transform_indices = @transform_9, window_bounds = array<i64: 32, 1>}, {pipeline_mode = #tpu.pipeline_mode<synchronous>, transform_indices = @transform_10, window_bounds = array<i64: 32, 288>}, {pipeline_mode = #tpu.pipeline_mode<synchronous>, transform_indices = @transform_11, window_bounds = array<i64: 32, 1>}, {pipeline_mode = #tpu.pipeline_mode<synchronous>, transform_indices = @transform_12, window_bounds = array<i64: 32, 1>}, {pipeline_mode = #tpu.pipeline_mode<synchronous>, transform_indices = @transform_13, window_bounds = array<i64: 32, 1>}, {transform_indices = @transform_14, window_bounds = array<i64: 1, 32, 256>}, {transform_indices = @transform_15, window_bounds = array<i64: 1, 32, 256>}]} {
    %c0 = arith.constant 0 : index
    %c0_0 = arith.constant 0 : index
    %0 = vector.load %arg2[%c0, %c0_0] : memref<9x256xbf16, #tpu.memory_space<vmem>>, vector<9x256xbf16>
    %c0_1 = arith.constant 0 : index
    %c0_2 = arith.constant 0 : index
    %c0_3 = arith.constant 0 : index
    %1 = vector.load %arg1[%c0_1, %c0_2, %c0_3] : memref<1x4x256xbf16, #tpu.memory_space<vmem>>, vector<1x4x256xbf16>
    %2 = vector.shape_cast %1 : vector<1x4x256xbf16> to vector<4x256xbf16>
    %3 = vector.extract_strided_slice %2 {offsets = [0, 239], sizes = [4, 17], strides = [1, 1]} : vector<4x256xbf16> to vector<4x17xbf16>
    %4 = vector.extract_strided_slice %2 {offsets = [0, 0], sizes = [4, 239], strides = [1, 1]} : vector<4x256xbf16> to vector<4x239xbf16>
    %5 = tpu.concatenate %3, %4 in 1 : vector<4x17xbf16>, vector<4x239xbf16> -> vector<4x256xbf16>
    %6 = vector.extract_strided_slice %0 {offsets = [0, 0], sizes = [1, 256], strides = [1, 1]} : vector<9x256xbf16> to vector<1x256xbf16>
    %7 = vector.broadcast %6 : vector<1x256xbf16> to vector<4x256xbf16>
    %8 = arith.mulf %5, %7 : vector<4x256xbf16>
    %9 = vector.extract_strided_slice %2 {offsets = [0, 240], sizes = [4, 16], strides = [1, 1]} : vector<4x256xbf16> to vector<4x16xbf16>
    %10 = vector.extract_strided_slice %2 {offsets = [0, 0], sizes = [4, 240], strides = [1, 1]} : vector<4x256xbf16> to vector<4x240xbf16>
    %11 = tpu.concatenate %9, %10 in 1 : vector<4x16xbf16>, vector<4x240xbf16> -> vector<4x256xbf16>
    %12 = vector.extract_strided_slice %0 {offsets = [1, 0], sizes = [1, 256], strides = [1, 1]} : vector<9x256xbf16> to vector<1x256xbf16>
    %13 = vector.broadcast %12 : vector<1x256xbf16> to vector<4x256xbf16>
    %14 = arith.mulf %11, %13 : vector<4x256xbf16>
    %15 = vector.extract_strided_slice %2 {offsets = [0, 241], sizes = [4, 15], strides = [1, 1]} : vector<4x256xbf16> to vector<4x15xbf16>
    %16 = vector.extract_strided_slice %2 {offsets = [0, 0], sizes = [4, 241], strides = [1, 1]} : vector<4x256xbf16> to vector<4x241xbf16>
    %17 = tpu.concatenate %15, %16 in 1 : vector<4x15xbf16>, vector<4x241xbf16> -> vector<4x256xbf16>
    %18 = vector.extract_strided_slice %0 {offsets = [2, 0], sizes = [1, 256], strides = [1, 1]} : vector<9x256xbf16> to vector<1x256xbf16>
    %19 = vector.broadcast %18 : vector<1x256xbf16> to vector<4x256xbf16>
    %20 = arith.mulf %17, %19 : vector<4x256xbf16>
    %21 = vector.extract_strided_slice %2 {offsets = [0, 255], sizes = [4, 1], strides = [1, 1]} : vector<4x256xbf16> to vector<4x1xbf16>
    %22 = vector.extract_strided_slice %2 {offsets = [0, 0], sizes = [4, 255], strides = [1, 1]} : vector<4x256xbf16> to vector<4x255xbf16>
    %23 = tpu.concatenate %21, %22 in 1 : vector<4x1xbf16>, vector<4x255xbf16> -> vector<4x256xbf16>
    %24 = vector.extract_strided_slice %0 {offsets = [3, 0], sizes = [1, 256], strides = [1, 1]} : vector<9x256xbf16> to vector<1x256xbf16>
    %25 = vector.broadcast %24 : vector<1x256xbf16> to vector<4x256xbf16>
    %26 = arith.mulf %23, %25 : vector<4x256xbf16>
    %27 = vector.extract_strided_slice %0 {offsets = [4, 0], sizes = [1, 256], strides = [1, 1]} : vector<9x256xbf16> to vector<1x256xbf16>
    %28 = vector.broadcast %27 : vector<1x256xbf16> to vector<4x256xbf16>
    %29 = arith.mulf %2, %28 : vector<4x256xbf16>
    %30 = vector.extract_strided_slice %2 {offsets = [0, 1], sizes = [4, 255], strides = [1, 1]} : vector<4x256xbf16> to vector<4x255xbf16>
    %31 = vector.extract_strided_slice %2 {offsets = [0, 0], sizes = [4, 1], strides = [1, 1]} : vector<4x256xbf16> to vector<4x1xbf16>
    %32 = tpu.concatenate %30, %31 in 1 : vector<4x255xbf16>, vector<4x1xbf16> -> vector<4x256xbf16>
    %33 = vector.extract_strided_slice %0 {offsets = [5, 0], sizes = [1, 256], strides = [1, 1]} : vector<9x256xbf16> to vector<1x256xbf16>
    %34 = vector.broadcast %33 : vector<1x256xbf16> to vector<4x256xbf16>
    %35 = arith.mulf %32, %34 : vector<4x256xbf16>
    %36 = vector.extract_strided_slice %2 {offsets = [0, 15], sizes = [4, 241], strides = [1, 1]} : vector<4x256xbf16> to vector<4x241xbf16>
    %37 = vector.extract_strided_slice %2 {offsets = [0, 0], sizes = [4, 15], strides = [1, 1]} : vector<4x256xbf16> to vector<4x15xbf16>
    %38 = tpu.concatenate %36, %37 in 1 : vector<4x241xbf16>, vector<4x15xbf16> -> vector<4x256xbf16>
    %39 = vector.extract_strided_slice %0 {offsets = [6, 0], sizes = [1, 256], strides = [1, 1]} : vector<9x256xbf16> to vector<1x256xbf16>
    %40 = vector.broadcast %39 : vector<1x256xbf16> to vector<4x256xbf16>
    %41 = arith.mulf %38, %40 : vector<4x256xbf16>
    %42 = vector.extract_strided_slice %2 {offsets = [0, 16], sizes = [4, 240], strides = [1, 1]} : vector<4x256xbf16> to vector<4x240xbf16>
    %43 = vector.extract_strided_slice %2 {offsets = [0, 0], sizes = [4, 16], strides = [1, 1]} : vector<4x256xbf16> to vector<4x16xbf16>
    %44 = tpu.concatenate %42, %43 in 1 : vector<4x240xbf16>, vector<4x16xbf16> -> vector<4x256xbf16>
    %45 = vector.extract_strided_slice %0 {offsets = [7, 0], sizes = [1, 256], strides = [1, 1]} : vector<9x256xbf16> to vector<1x256xbf16>
    %46 = vector.broadcast %45 : vector<1x256xbf16> to vector<4x256xbf16>
    %47 = arith.mulf %44, %46 : vector<4x256xbf16>
    %48 = vector.extract_strided_slice %2 {offsets = [0, 17], sizes = [4, 239], strides = [1, 1]} : vector<4x256xbf16> to vector<4x239xbf16>
    %49 = vector.extract_strided_slice %2 {offsets = [0, 0], sizes = [4, 17], strides = [1, 1]} : vector<4x256xbf16> to vector<4x17xbf16>
    %50 = tpu.concatenate %48, %49 in 1 : vector<4x239xbf16>, vector<4x17xbf16> -> vector<4x256xbf16>
    %51 = vector.extract_strided_slice %0 {offsets = [8, 0], sizes = [1, 256], strides = [1, 1]} : vector<9x256xbf16> to vector<1x256xbf16>
    %52 = vector.broadcast %51 : vector<1x256xbf16> to vector<4x256xbf16>
    %53 = arith.mulf %50, %52 : vector<4x256xbf16>
    %54 = tpu.concatenate %8, %14, %20, %26, %29, %35, %41, %47, %53 in 0 : vector<4x256xbf16>, vector<4x256xbf16>, vector<4x256xbf16>, vector<4x256xbf16>, vector<4x256xbf16>, vector<4x256xbf16>, vector<4x256xbf16>, vector<4x256xbf16>, vector<4x256xbf16> -> vector<36x256xbf16>
    %c0_4 = arith.constant 0 : index
    %c0_5 = arith.constant 0 : index
    %55 = vector.load %arg3[%c0_4, %c0_5] : memref<64x36xbf16, #tpu.memory_space<vmem>>, vector<64x36xbf16>
    %cst = arith.constant dense<0.000000e+00> : vector<64x256xf32>
    %56 = tpu.matmul %55, %54, %cst {dimension_numbers = #tpu.dot_dimension_numbers<[1], [0], [0], [1], [0, 0, 1, 1], [], []>} : vector<64x36xbf16>, vector<36x256xbf16>, vector<64x256xf32> -> vector<64x256xf32>
    %c0_6 = arith.constant 0 : index
    %c0_7 = arith.constant 0 : index
    %57 = vector.load %arg4[%c0_6, %c0_7] : memref<64x1xf32, #tpu.memory_space<vmem>>, vector<64x1xf32>
    %58 = vector.broadcast %57 : vector<64x1xf32> to vector<64x256xf32>
    %59 = arith.addf %56, %58 : vector<64x256xf32>
    %c0_8 = arith.constant 0 : index
    %c0_9 = arith.constant 0 : index
    %60 = vector.load %arg5[%c0_8, %c0_9] : memref<64x1xf32, #tpu.memory_space<vmem>>, vector<64x1xf32>
    %c0_10 = arith.constant 0 : index
    %c0_11 = arith.constant 0 : index
    %61 = vector.load %arg6[%c0_10, %c0_11] : memref<64x1xf32, #tpu.memory_space<vmem>>, vector<64x1xf32>
    %cst_12 = arith.constant dense<0.000000e+00> : vector<64xf32>
    %62 = vector.multi_reduction <add>, %59, %cst_12 [1] : vector<64x256xf32> to vector<64xf32>
    %63 = vector.shape_cast %62 : vector<64xf32> to vector<64x1xf32>
    %64 = vector.extract_strided_slice %63 {offsets = [0, 0], sizes = [4, 1], strides = [1, 1]} : vector<64x1xf32> to vector<4x1xf32>
    %65 = vector.shape_cast %64 : vector<4x1xf32> to vector<1x4x1xf32>
    %cst_13 = arith.constant dense<0.000000e+00> : vector<1xf32>
    %66 = vector.multi_reduction <add>, %65, %cst_13 [1, 2] : vector<1x4x1xf32> to vector<1xf32>
    %67 = vector.shape_cast %66 : vector<1xf32> to vector<1x1x1xf32>
    %68 = vector.extract %67[0, 0, 0] : f32 from vector<1x1x1xf32>
    %69 = vector.broadcast %68 : f32 to vector<1x1xf32>
    %cst_14 = arith.constant 9.765625E-4 : f32
    %70 = vector.broadcast %cst_14 : f32 to vector<1x1xf32>
    %71 = arith.mulf %69, %70 : vector<1x1xf32>
    %72 = vector.shape_cast %71 : vector<1x1xf32> to vector<1x1xf32>
    %73 = vector.broadcast %72 : vector<1x1xf32> to vector<4x1xf32>
    %74 = vector.extract_strided_slice %63 {offsets = [4, 0], sizes = [4, 1], strides = [1, 1]} : vector<64x1xf32> to vector<4x1xf32>
    %75 = vector.shape_cast %74 : vector<4x1xf32> to vector<1x4x1xf32>
    %cst_15 = arith.constant dense<0.000000e+00> : vector<1xf32>
    %76 = vector.multi_reduction <add>, %75, %cst_15 [1, 2] : vector<1x4x1xf32> to vector<1xf32>
    %77 = vector.shape_cast %76 : vector<1xf32> to vector<1x1x1xf32>
    %78 = vector.extract %77[0, 0, 0] : f32 from vector<1x1x1xf32>
    %79 = vector.broadcast %78 : f32 to vector<1x1xf32>
    %cst_16 = arith.constant 9.765625E-4 : f32
    %80 = vector.broadcast %cst_16 : f32 to vector<1x1xf32>
    %81 = arith.mulf %79, %80 : vector<1x1xf32>
    %82 = vector.shape_cast %81 : vector<1x1xf32> to vector<1x1xf32>
    %83 = vector.broadcast %82 : vector<1x1xf32> to vector<4x1xf32>
    %84 = vector.extract_strided_slice %63 {offsets = [8, 0], sizes = [4, 1], strides = [1, 1]} : vector<64x1xf32> to vector<4x1xf32>
    %85 = vector.shape_cast %84 : vector<4x1xf32> to vector<1x4x1xf32>
    %cst_17 = arith.constant dense<0.000000e+00> : vector<1xf32>
    %86 = vector.multi_reduction <add>, %85, %cst_17 [1, 2] : vector<1x4x1xf32> to vector<1xf32>
    %87 = vector.shape_cast %86 : vector<1xf32> to vector<1x1x1xf32>
    %88 = vector.extract %87[0, 0, 0] : f32 from vector<1x1x1xf32>
    %89 = vector.broadcast %88 : f32 to vector<1x1xf32>
    %cst_18 = arith.constant 9.765625E-4 : f32
    %90 = vector.broadcast %cst_18 : f32 to vector<1x1xf32>
    %91 = arith.mulf %89, %90 : vector<1x1xf32>
    %92 = vector.shape_cast %91 : vector<1x1xf32> to vector<1x1xf32>
    %93 = vector.broadcast %92 : vector<1x1xf32> to vector<4x1xf32>
    %94 = vector.extract_strided_slice %63 {offsets = [12, 0], sizes = [4, 1], strides = [1, 1]} : vector<64x1xf32> to vector<4x1xf32>
    %95 = vector.shape_cast %94 : vector<4x1xf32> to vector<1x4x1xf32>
    %cst_19 = arith.constant dense<0.000000e+00> : vector<1xf32>
    %96 = vector.multi_reduction <add>, %95, %cst_19 [1, 2] : vector<1x4x1xf32> to vector<1xf32>
    %97 = vector.shape_cast %96 : vector<1xf32> to vector<1x1x1xf32>
    %98 = vector.extract %97[0, 0, 0] : f32 from vector<1x1x1xf32>
    %99 = vector.broadcast %98 : f32 to vector<1x1xf32>
    %cst_20 = arith.constant 9.765625E-4 : f32
    %100 = vector.broadcast %cst_20 : f32 to vector<1x1xf32>
    %101 = arith.mulf %99, %100 : vector<1x1xf32>
    %102 = vector.shape_cast %101 : vector<1x1xf32> to vector<1x1xf32>
    %103 = vector.broadcast %102 : vector<1x1xf32> to vector<4x1xf32>
    %104 = vector.extract_strided_slice %63 {offsets = [16, 0], sizes = [4, 1], strides = [1, 1]} : vector<64x1xf32> to vector<4x1xf32>
    %105 = vector.shape_cast %104 : vector<4x1xf32> to vector<1x4x1xf32>
    %cst_21 = arith.constant dense<0.000000e+00> : vector<1xf32>
    %106 = vector.multi_reduction <add>, %105, %cst_21 [1, 2] : vector<1x4x1xf32> to vector<1xf32>
    %107 = vector.shape_cast %106 : vector<1xf32> to vector<1x1x1xf32>
    %108 = vector.extract %107[0, 0, 0] : f32 from vector<1x1x1xf32>
    %109 = vector.broadcast %108 : f32 to vector<1x1xf32>
    %cst_22 = arith.constant 9.765625E-4 : f32
    %110 = vector.broadcast %cst_22 : f32 to vector<1x1xf32>
    %111 = arith.mulf %109, %110 : vector<1x1xf32>
    %112 = vector.shape_cast %111 : vector<1x1xf32> to vector<1x1xf32>
    %113 = vector.broadcast %112 : vector<1x1xf32> to vector<4x1xf32>
    %114 = vector.extract_strided_slice %63 {offsets = [20, 0], sizes = [4, 1], strides = [1, 1]} : vector<64x1xf32> to vector<4x1xf32>
    %115 = vector.shape_cast %114 : vector<4x1xf32> to vector<1x4x1xf32>
    %cst_23 = arith.constant dense<0.000000e+00> : vector<1xf32>
    %116 = vector.multi_reduction <add>, %115, %cst_23 [1, 2] : vector<1x4x1xf32> to vector<1xf32>
    %117 = vector.shape_cast %116 : vector<1xf32> to vector<1x1x1xf32>
    %118 = vector.extract %117[0, 0, 0] : f32 from vector<1x1x1xf32>
    %119 = vector.broadcast %118 : f32 to vector<1x1xf32>
    %cst_24 = arith.constant 9.765625E-4 : f32
    %120 = vector.broadcast %cst_24 : f32 to vector<1x1xf32>
    %121 = arith.mulf %119, %120 : vector<1x1xf32>
    %122 = vector.shape_cast %121 : vector<1x1xf32> to vector<1x1xf32>
    %123 = vector.broadcast %122 : vector<1x1xf32> to vector<4x1xf32>
    %124 = vector.extract_strided_slice %63 {offsets = [24, 0], sizes = [4, 1], strides = [1, 1]} : vector<64x1xf32> to vector<4x1xf32>
    %125 = vector.shape_cast %124 : vector<4x1xf32> to vector<1x4x1xf32>
    %cst_25 = arith.constant dense<0.000000e+00> : vector<1xf32>
    %126 = vector.multi_reduction <add>, %125, %cst_25 [1, 2] : vector<1x4x1xf32> to vector<1xf32>
    %127 = vector.shape_cast %126 : vector<1xf32> to vector<1x1x1xf32>
    %128 = vector.extract %127[0, 0, 0] : f32 from vector<1x1x1xf32>
    %129 = vector.broadcast %128 : f32 to vector<1x1xf32>
    %cst_26 = arith.constant 9.765625E-4 : f32
    %130 = vector.broadcast %cst_26 : f32 to vector<1x1xf32>
    %131 = arith.mulf %129, %130 : vector<1x1xf32>
    %132 = vector.shape_cast %131 : vector<1x1xf32> to vector<1x1xf32>
    %133 = vector.broadcast %132 : vector<1x1xf32> to vector<4x1xf32>
    %134 = vector.extract_strided_slice %63 {offsets = [28, 0], sizes = [4, 1], strides = [1, 1]} : vector<64x1xf32> to vector<4x1xf32>
    %135 = vector.shape_cast %134 : vector<4x1xf32> to vector<1x4x1xf32>
    %cst_27 = arith.constant dense<0.000000e+00> : vector<1xf32>
    %136 = vector.multi_reduction <add>, %135, %cst_27 [1, 2] : vector<1x4x1xf32> to vector<1xf32>
    %137 = vector.shape_cast %136 : vector<1xf32> to vector<1x1x1xf32>
    %138 = vector.extract %137[0, 0, 0] : f32 from vector<1x1x1xf32>
    %139 = vector.broadcast %138 : f32 to vector<1x1xf32>
    %cst_28 = arith.constant 9.765625E-4 : f32
    %140 = vector.broadcast %cst_28 : f32 to vector<1x1xf32>
    %141 = arith.mulf %139, %140 : vector<1x1xf32>
    %142 = vector.shape_cast %141 : vector<1x1xf32> to vector<1x1xf32>
    %143 = vector.broadcast %142 : vector<1x1xf32> to vector<4x1xf32>
    %144 = vector.extract_strided_slice %63 {offsets = [32, 0], sizes = [4, 1], strides = [1, 1]} : vector<64x1xf32> to vector<4x1xf32>
    %145 = vector.shape_cast %144 : vector<4x1xf32> to vector<1x4x1xf32>
    %cst_29 = arith.constant dense<0.000000e+00> : vector<1xf32>
    %146 = vector.multi_reduction <add>, %145, %cst_29 [1, 2] : vector<1x4x1xf32> to vector<1xf32>
    %147 = vector.shape_cast %146 : vector<1xf32> to vector<1x1x1xf32>
    %148 = vector.extract %147[0, 0, 0] : f32 from vector<1x1x1xf32>
    %149 = vector.broadcast %148 : f32 to vector<1x1xf32>
    %cst_30 = arith.constant 9.765625E-4 : f32
    %150 = vector.broadcast %cst_30 : f32 to vector<1x1xf32>
    %151 = arith.mulf %149, %150 : vector<1x1xf32>
    %152 = vector.shape_cast %151 : vector<1x1xf32> to vector<1x1xf32>
    %153 = vector.broadcast %152 : vector<1x1xf32> to vector<4x1xf32>
    %154 = vector.extract_strided_slice %63 {offsets = [36, 0], sizes = [4, 1], strides = [1, 1]} : vector<64x1xf32> to vector<4x1xf32>
    %155 = vector.shape_cast %154 : vector<4x1xf32> to vector<1x4x1xf32>
    %cst_31 = arith.constant dense<0.000000e+00> : vector<1xf32>
    %156 = vector.multi_reduction <add>, %155, %cst_31 [1, 2] : vector<1x4x1xf32> to vector<1xf32>
    %157 = vector.shape_cast %156 : vector<1xf32> to vector<1x1x1xf32>
    %158 = vector.extract %157[0, 0, 0] : f32 from vector<1x1x1xf32>
    %159 = vector.broadcast %158 : f32 to vector<1x1xf32>
    %cst_32 = arith.constant 9.765625E-4 : f32
    %160 = vector.broadcast %cst_32 : f32 to vector<1x1xf32>
    %161 = arith.mulf %159, %160 : vector<1x1xf32>
    %162 = vector.shape_cast %161 : vector<1x1xf32> to vector<1x1xf32>
    %163 = vector.broadcast %162 : vector<1x1xf32> to vector<4x1xf32>
    %164 = vector.extract_strided_slice %63 {offsets = [40, 0], sizes = [4, 1], strides = [1, 1]} : vector<64x1xf32> to vector<4x1xf32>
    %165 = vector.shape_cast %164 : vector<4x1xf32> to vector<1x4x1xf32>
    %cst_33 = arith.constant dense<0.000000e+00> : vector<1xf32>
    %166 = vector.multi_reduction <add>, %165, %cst_33 [1, 2] : vector<1x4x1xf32> to vector<1xf32>
    %167 = vector.shape_cast %166 : vector<1xf32> to vector<1x1x1xf32>
    %168 = vector.extract %167[0, 0, 0] : f32 from vector<1x1x1xf32>
    %169 = vector.broadcast %168 : f32 to vector<1x1xf32>
    %cst_34 = arith.constant 9.765625E-4 : f32
    %170 = vector.broadcast %cst_34 : f32 to vector<1x1xf32>
    %171 = arith.mulf %169, %170 : vector<1x1xf32>
    %172 = vector.shape_cast %171 : vector<1x1xf32> to vector<1x1xf32>
    %173 = vector.broadcast %172 : vector<1x1xf32> to vector<4x1xf32>
    %174 = vector.extract_strided_slice %63 {offsets = [44, 0], sizes = [4, 1], strides = [1, 1]} : vector<64x1xf32> to vector<4x1xf32>
    %175 = vector.shape_cast %174 : vector<4x1xf32> to vector<1x4x1xf32>
    %cst_35 = arith.constant dense<0.000000e+00> : vector<1xf32>
    %176 = vector.multi_reduction <add>, %175, %cst_35 [1, 2] : vector<1x4x1xf32> to vector<1xf32>
    %177 = vector.shape_cast %176 : vector<1xf32> to vector<1x1x1xf32>
    %178 = vector.extract %177[0, 0, 0] : f32 from vector<1x1x1xf32>
    %179 = vector.broadcast %178 : f32 to vector<1x1xf32>
    %cst_36 = arith.constant 9.765625E-4 : f32
    %180 = vector.broadcast %cst_36 : f32 to vector<1x1xf32>
    %181 = arith.mulf %179, %180 : vector<1x1xf32>
    %182 = vector.shape_cast %181 : vector<1x1xf32> to vector<1x1xf32>
    %183 = vector.broadcast %182 : vector<1x1xf32> to vector<4x1xf32>
    %184 = vector.extract_strided_slice %63 {offsets = [48, 0], sizes = [4, 1], strides = [1, 1]} : vector<64x1xf32> to vector<4x1xf32>
    %185 = vector.shape_cast %184 : vector<4x1xf32> to vector<1x4x1xf32>
    %cst_37 = arith.constant dense<0.000000e+00> : vector<1xf32>
    %186 = vector.multi_reduction <add>, %185, %cst_37 [1, 2] : vector<1x4x1xf32> to vector<1xf32>
    %187 = vector.shape_cast %186 : vector<1xf32> to vector<1x1x1xf32>
    %188 = vector.extract %187[0, 0, 0] : f32 from vector<1x1x1xf32>
    %189 = vector.broadcast %188 : f32 to vector<1x1xf32>
    %cst_38 = arith.constant 9.765625E-4 : f32
    %190 = vector.broadcast %cst_38 : f32 to vector<1x1xf32>
    %191 = arith.mulf %189, %190 : vector<1x1xf32>
    %192 = vector.shape_cast %191 : vector<1x1xf32> to vector<1x1xf32>
    %193 = vector.broadcast %192 : vector<1x1xf32> to vector<4x1xf32>
    %194 = vector.extract_strided_slice %63 {offsets = [52, 0], sizes = [4, 1], strides = [1, 1]} : vector<64x1xf32> to vector<4x1xf32>
    %195 = vector.shape_cast %194 : vector<4x1xf32> to vector<1x4x1xf32>
    %cst_39 = arith.constant dense<0.000000e+00> : vector<1xf32>
    %196 = vector.multi_reduction <add>, %195, %cst_39 [1, 2] : vector<1x4x1xf32> to vector<1xf32>
    %197 = vector.shape_cast %196 : vector<1xf32> to vector<1x1x1xf32>
    %198 = vector.extract %197[0, 0, 0] : f32 from vector<1x1x1xf32>
    %199 = vector.broadcast %198 : f32 to vector<1x1xf32>
    %cst_40 = arith.constant 9.765625E-4 : f32
    %200 = vector.broadcast %cst_40 : f32 to vector<1x1xf32>
    %201 = arith.mulf %199, %200 : vector<1x1xf32>
    %202 = vector.shape_cast %201 : vector<1x1xf32> to vector<1x1xf32>
    %203 = vector.broadcast %202 : vector<1x1xf32> to vector<4x1xf32>
    %204 = vector.extract_strided_slice %63 {offsets = [56, 0], sizes = [4, 1], strides = [1, 1]} : vector<64x1xf32> to vector<4x1xf32>
    %205 = vector.shape_cast %204 : vector<4x1xf32> to vector<1x4x1xf32>
    %cst_41 = arith.constant dense<0.000000e+00> : vector<1xf32>
    %206 = vector.multi_reduction <add>, %205, %cst_41 [1, 2] : vector<1x4x1xf32> to vector<1xf32>
    %207 = vector.shape_cast %206 : vector<1xf32> to vector<1x1x1xf32>
    %208 = vector.extract %207[0, 0, 0] : f32 from vector<1x1x1xf32>
    %209 = vector.broadcast %208 : f32 to vector<1x1xf32>
    %cst_42 = arith.constant 9.765625E-4 : f32
    %210 = vector.broadcast %cst_42 : f32 to vector<1x1xf32>
    %211 = arith.mulf %209, %210 : vector<1x1xf32>
    %212 = vector.shape_cast %211 : vector<1x1xf32> to vector<1x1xf32>
    %213 = vector.broadcast %212 : vector<1x1xf32> to vector<4x1xf32>
    %214 = vector.extract_strided_slice %63 {offsets = [60, 0], sizes = [4, 1], strides = [1, 1]} : vector<64x1xf32> to vector<4x1xf32>
    %215 = vector.shape_cast %214 : vector<4x1xf32> to vector<1x4x1xf32>
    %cst_43 = arith.constant dense<0.000000e+00> : vector<1xf32>
    %216 = vector.multi_reduction <add>, %215, %cst_43 [1, 2] : vector<1x4x1xf32> to vector<1xf32>
    %217 = vector.shape_cast %216 : vector<1xf32> to vector<1x1x1xf32>
    %218 = vector.extract %217[0, 0, 0] : f32 from vector<1x1x1xf32>
    %219 = vector.broadcast %218 : f32 to vector<1x1xf32>
    %cst_44 = arith.constant 9.765625E-4 : f32
    %220 = vector.broadcast %cst_44 : f32 to vector<1x1xf32>
    %221 = arith.mulf %219, %220 : vector<1x1xf32>
    %222 = vector.shape_cast %221 : vector<1x1xf32> to vector<1x1xf32>
    %223 = vector.broadcast %222 : vector<1x1xf32> to vector<4x1xf32>
    %224 = tpu.concatenate %73, %83, %93, %103, %113, %123, %133, %143, %153, %163, %173, %183, %193, %203, %213, %223 in 0 : vector<4x1xf32>, vector<4x1xf32>, vector<4x1xf32>, vector<4x1xf32>, vector<4x1xf32>, vector<4x1xf32>, vector<4x1xf32>, vector<4x1xf32>, vector<4x1xf32>, vector<4x1xf32>, vector<4x1xf32>, vector<4x1xf32>, vector<4x1xf32>, vector<4x1xf32>, vector<4x1xf32>, vector<4x1xf32> -> vector<64x1xf32>
    %225 = vector.broadcast %224 : vector<64x1xf32> to vector<64x256xf32>
    %226 = arith.subf %59, %225 : vector<64x256xf32>
    %227 = arith.mulf %226, %226 : vector<64x256xf32>
    %cst_45 = arith.constant dense<0.000000e+00> : vector<64xf32>
    %228 = vector.multi_reduction <add>, %227, %cst_45 [1] : vector<64x256xf32> to vector<64xf32>
    %229 = vector.shape_cast %228 : vector<64xf32> to vector<64x1xf32>
    %230 = vector.extract_strided_slice %229 {offsets = [0, 0], sizes = [4, 1], strides = [1, 1]} : vector<64x1xf32> to vector<4x1xf32>
    %231 = vector.shape_cast %230 : vector<4x1xf32> to vector<1x4x1xf32>
    %cst_46 = arith.constant dense<0.000000e+00> : vector<1xf32>
    %232 = vector.multi_reduction <add>, %231, %cst_46 [1, 2] : vector<1x4x1xf32> to vector<1xf32>
    %233 = vector.shape_cast %232 : vector<1xf32> to vector<1x1x1xf32>
    %234 = vector.extract %233[0, 0, 0] : f32 from vector<1x1x1xf32>
    %235 = vector.broadcast %234 : f32 to vector<1x1xf32>
    %cst_47 = arith.constant 9.765625E-4 : f32
    %236 = vector.broadcast %cst_47 : f32 to vector<1x1xf32>
    %237 = arith.mulf %235, %236 : vector<1x1xf32>
    %cst_48 = arith.constant 9.99999974E-6 : f32
    %238 = vector.broadcast %cst_48 : f32 to vector<1x1xf32>
    %239 = arith.addf %237, %238 : vector<1x1xf32>
    %240 = math.rsqrt %239 : vector<1x1xf32>
    %241 = vector.shape_cast %240 : vector<1x1xf32> to vector<1x1xf32>
    %242 = vector.broadcast %241 : vector<1x1xf32> to vector<4x1xf32>
    %243 = vector.extract_strided_slice %229 {offsets = [4, 0], sizes = [4, 1], strides = [1, 1]} : vector<64x1xf32> to vector<4x1xf32>
    %244 = vector.shape_cast %243 : vector<4x1xf32> to vector<1x4x1xf32>
    %cst_49 = arith.constant dense<0.000000e+00> : vector<1xf32>
    %245 = vector.multi_reduction <add>, %244, %cst_49 [1, 2] : vector<1x4x1xf32> to vector<1xf32>
    %246 = vector.shape_cast %245 : vector<1xf32> to vector<1x1x1xf32>
    %247 = vector.extract %246[0, 0, 0] : f32 from vector<1x1x1xf32>
    %248 = vector.broadcast %247 : f32 to vector<1x1xf32>
    %cst_50 = arith.constant 9.765625E-4 : f32
    %249 = vector.broadcast %cst_50 : f32 to vector<1x1xf32>
    %250 = arith.mulf %248, %249 : vector<1x1xf32>
    %cst_51 = arith.constant 9.99999974E-6 : f32
    %251 = vector.broadcast %cst_51 : f32 to vector<1x1xf32>
    %252 = arith.addf %250, %251 : vector<1x1xf32>
    %253 = math.rsqrt %252 : vector<1x1xf32>
    %254 = vector.shape_cast %253 : vector<1x1xf32> to vector<1x1xf32>
    %255 = vector.broadcast %254 : vector<1x1xf32> to vector<4x1xf32>
    %256 = vector.extract_strided_slice %229 {offsets = [8, 0], sizes = [4, 1], strides = [1, 1]} : vector<64x1xf32> to vector<4x1xf32>
    %257 = vector.shape_cast %256 : vector<4x1xf32> to vector<1x4x1xf32>
    %cst_52 = arith.constant dense<0.000000e+00> : vector<1xf32>
    %258 = vector.multi_reduction <add>, %257, %cst_52 [1, 2] : vector<1x4x1xf32> to vector<1xf32>
    %259 = vector.shape_cast %258 : vector<1xf32> to vector<1x1x1xf32>
    %260 = vector.extract %259[0, 0, 0] : f32 from vector<1x1x1xf32>
    %261 = vector.broadcast %260 : f32 to vector<1x1xf32>
    %cst_53 = arith.constant 9.765625E-4 : f32
    %262 = vector.broadcast %cst_53 : f32 to vector<1x1xf32>
    %263 = arith.mulf %261, %262 : vector<1x1xf32>
    %cst_54 = arith.constant 9.99999974E-6 : f32
    %264 = vector.broadcast %cst_54 : f32 to vector<1x1xf32>
    %265 = arith.addf %263, %264 : vector<1x1xf32>
    %266 = math.rsqrt %265 : vector<1x1xf32>
    %267 = vector.shape_cast %266 : vector<1x1xf32> to vector<1x1xf32>
    %268 = vector.broadcast %267 : vector<1x1xf32> to vector<4x1xf32>
    %269 = vector.extract_strided_slice %229 {offsets = [12, 0], sizes = [4, 1], strides = [1, 1]} : vector<64x1xf32> to vector<4x1xf32>
    %270 = vector.shape_cast %269 : vector<4x1xf32> to vector<1x4x1xf32>
    %cst_55 = arith.constant dense<0.000000e+00> : vector<1xf32>
    %271 = vector.multi_reduction <add>, %270, %cst_55 [1, 2] : vector<1x4x1xf32> to vector<1xf32>
    %272 = vector.shape_cast %271 : vector<1xf32> to vector<1x1x1xf32>
    %273 = vector.extract %272[0, 0, 0] : f32 from vector<1x1x1xf32>
    %274 = vector.broadcast %273 : f32 to vector<1x1xf32>
    %cst_56 = arith.constant 9.765625E-4 : f32
    %275 = vector.broadcast %cst_56 : f32 to vector<1x1xf32>
    %276 = arith.mulf %274, %275 : vector<1x1xf32>
    %cst_57 = arith.constant 9.99999974E-6 : f32
    %277 = vector.broadcast %cst_57 : f32 to vector<1x1xf32>
    %278 = arith.addf %276, %277 : vector<1x1xf32>
    %279 = math.rsqrt %278 : vector<1x1xf32>
    %280 = vector.shape_cast %279 : vector<1x1xf32> to vector<1x1xf32>
    %281 = vector.broadcast %280 : vector<1x1xf32> to vector<4x1xf32>
    %282 = vector.extract_strided_slice %229 {offsets = [16, 0], sizes = [4, 1], strides = [1, 1]} : vector<64x1xf32> to vector<4x1xf32>
    %283 = vector.shape_cast %282 : vector<4x1xf32> to vector<1x4x1xf32>
    %cst_58 = arith.constant dense<0.000000e+00> : vector<1xf32>
    %284 = vector.multi_reduction <add>, %283, %cst_58 [1, 2] : vector<1x4x1xf32> to vector<1xf32>
    %285 = vector.shape_cast %284 : vector<1xf32> to vector<1x1x1xf32>
    %286 = vector.extract %285[0, 0, 0] : f32 from vector<1x1x1xf32>
    %287 = vector.broadcast %286 : f32 to vector<1x1xf32>
    %cst_59 = arith.constant 9.765625E-4 : f32
    %288 = vector.broadcast %cst_59 : f32 to vector<1x1xf32>
    %289 = arith.mulf %287, %288 : vector<1x1xf32>
    %cst_60 = arith.constant 9.99999974E-6 : f32
    %290 = vector.broadcast %cst_60 : f32 to vector<1x1xf32>
    %291 = arith.addf %289, %290 : vector<1x1xf32>
    %292 = math.rsqrt %291 : vector<1x1xf32>
    %293 = vector.shape_cast %292 : vector<1x1xf32> to vector<1x1xf32>
    %294 = vector.broadcast %293 : vector<1x1xf32> to vector<4x1xf32>
    %295 = vector.extract_strided_slice %229 {offsets = [20, 0], sizes = [4, 1], strides = [1, 1]} : vector<64x1xf32> to vector<4x1xf32>
    %296 = vector.shape_cast %295 : vector<4x1xf32> to vector<1x4x1xf32>
    %cst_61 = arith.constant dense<0.000000e+00> : vector<1xf32>
    %297 = vector.multi_reduction <add>, %296, %cst_61 [1, 2] : vector<1x4x1xf32> to vector<1xf32>
    %298 = vector.shape_cast %297 : vector<1xf32> to vector<1x1x1xf32>
    %299 = vector.extract %298[0, 0, 0] : f32 from vector<1x1x1xf32>
    %300 = vector.broadcast %299 : f32 to vector<1x1xf32>
    %cst_62 = arith.constant 9.765625E-4 : f32
    %301 = vector.broadcast %cst_62 : f32 to vector<1x1xf32>
    %302 = arith.mulf %300, %301 : vector<1x1xf32>
    %cst_63 = arith.constant 9.99999974E-6 : f32
    %303 = vector.broadcast %cst_63 : f32 to vector<1x1xf32>
    %304 = arith.addf %302, %303 : vector<1x1xf32>
    %305 = math.rsqrt %304 : vector<1x1xf32>
    %306 = vector.shape_cast %305 : vector<1x1xf32> to vector<1x1xf32>
    %307 = vector.broadcast %306 : vector<1x1xf32> to vector<4x1xf32>
    %308 = vector.extract_strided_slice %229 {offsets = [24, 0], sizes = [4, 1], strides = [1, 1]} : vector<64x1xf32> to vector<4x1xf32>
    %309 = vector.shape_cast %308 : vector<4x1xf32> to vector<1x4x1xf32>
    %cst_64 = arith.constant dense<0.000000e+00> : vector<1xf32>
    %310 = vector.multi_reduction <add>, %309, %cst_64 [1, 2] : vector<1x4x1xf32> to vector<1xf32>
    %311 = vector.shape_cast %310 : vector<1xf32> to vector<1x1x1xf32>
    %312 = vector.extract %311[0, 0, 0] : f32 from vector<1x1x1xf32>
    %313 = vector.broadcast %312 : f32 to vector<1x1xf32>
    %cst_65 = arith.constant 9.765625E-4 : f32
    %314 = vector.broadcast %cst_65 : f32 to vector<1x1xf32>
    %315 = arith.mulf %313, %314 : vector<1x1xf32>
    %cst_66 = arith.constant 9.99999974E-6 : f32
    %316 = vector.broadcast %cst_66 : f32 to vector<1x1xf32>
    %317 = arith.addf %315, %316 : vector<1x1xf32>
    %318 = math.rsqrt %317 : vector<1x1xf32>
    %319 = vector.shape_cast %318 : vector<1x1xf32> to vector<1x1xf32>
    %320 = vector.broadcast %319 : vector<1x1xf32> to vector<4x1xf32>
    %321 = vector.extract_strided_slice %229 {offsets = [28, 0], sizes = [4, 1], strides = [1, 1]} : vector<64x1xf32> to vector<4x1xf32>
    %322 = vector.shape_cast %321 : vector<4x1xf32> to vector<1x4x1xf32>
    %cst_67 = arith.constant dense<0.000000e+00> : vector<1xf32>
    %323 = vector.multi_reduction <add>, %322, %cst_67 [1, 2] : vector<1x4x1xf32> to vector<1xf32>
    %324 = vector.shape_cast %323 : vector<1xf32> to vector<1x1x1xf32>
    %325 = vector.extract %324[0, 0, 0] : f32 from vector<1x1x1xf32>
    %326 = vector.broadcast %325 : f32 to vector<1x1xf32>
    %cst_68 = arith.constant 9.765625E-4 : f32
    %327 = vector.broadcast %cst_68 : f32 to vector<1x1xf32>
    %328 = arith.mulf %326, %327 : vector<1x1xf32>
    %cst_69 = arith.constant 9.99999974E-6 : f32
    %329 = vector.broadcast %cst_69 : f32 to vector<1x1xf32>
    %330 = arith.addf %328, %329 : vector<1x1xf32>
    %331 = math.rsqrt %330 : vector<1x1xf32>
    %332 = vector.shape_cast %331 : vector<1x1xf32> to vector<1x1xf32>
    %333 = vector.broadcast %332 : vector<1x1xf32> to vector<4x1xf32>
    %334 = vector.extract_strided_slice %229 {offsets = [32, 0], sizes = [4, 1], strides = [1, 1]} : vector<64x1xf32> to vector<4x1xf32>
    %335 = vector.shape_cast %334 : vector<4x1xf32> to vector<1x4x1xf32>
    %cst_70 = arith.constant dense<0.000000e+00> : vector<1xf32>
    %336 = vector.multi_reduction <add>, %335, %cst_70 [1, 2] : vector<1x4x1xf32> to vector<1xf32>
    %337 = vector.shape_cast %336 : vector<1xf32> to vector<1x1x1xf32>
    %338 = vector.extract %337[0, 0, 0] : f32 from vector<1x1x1xf32>
    %339 = vector.broadcast %338 : f32 to vector<1x1xf32>
    %cst_71 = arith.constant 9.765625E-4 : f32
    %340 = vector.broadcast %cst_71 : f32 to vector<1x1xf32>
    %341 = arith.mulf %339, %340 : vector<1x1xf32>
    %cst_72 = arith.constant 9.99999974E-6 : f32
    %342 = vector.broadcast %cst_72 : f32 to vector<1x1xf32>
    %343 = arith.addf %341, %342 : vector<1x1xf32>
    %344 = math.rsqrt %343 : vector<1x1xf32>
    %345 = vector.shape_cast %344 : vector<1x1xf32> to vector<1x1xf32>
    %346 = vector.broadcast %345 : vector<1x1xf32> to vector<4x1xf32>
    %347 = vector.extract_strided_slice %229 {offsets = [36, 0], sizes = [4, 1], strides = [1, 1]} : vector<64x1xf32> to vector<4x1xf32>
    %348 = vector.shape_cast %347 : vector<4x1xf32> to vector<1x4x1xf32>
    %cst_73 = arith.constant dense<0.000000e+00> : vector<1xf32>
    %349 = vector.multi_reduction <add>, %348, %cst_73 [1, 2] : vector<1x4x1xf32> to vector<1xf32>
    %350 = vector.shape_cast %349 : vector<1xf32> to vector<1x1x1xf32>
    %351 = vector.extract %350[0, 0, 0] : f32 from vector<1x1x1xf32>
    %352 = vector.broadcast %351 : f32 to vector<1x1xf32>
    %cst_74 = arith.constant 9.765625E-4 : f32
    %353 = vector.broadcast %cst_74 : f32 to vector<1x1xf32>
    %354 = arith.mulf %352, %353 : vector<1x1xf32>
    %cst_75 = arith.constant 9.99999974E-6 : f32
    %355 = vector.broadcast %cst_75 : f32 to vector<1x1xf32>
    %356 = arith.addf %354, %355 : vector<1x1xf32>
    %357 = math.rsqrt %356 : vector<1x1xf32>
    %358 = vector.shape_cast %357 : vector<1x1xf32> to vector<1x1xf32>
    %359 = vector.broadcast %358 : vector<1x1xf32> to vector<4x1xf32>
    %360 = vector.extract_strided_slice %229 {offsets = [40, 0], sizes = [4, 1], strides = [1, 1]} : vector<64x1xf32> to vector<4x1xf32>
    %361 = vector.shape_cast %360 : vector<4x1xf32> to vector<1x4x1xf32>
    %cst_76 = arith.constant dense<0.000000e+00> : vector<1xf32>
    %362 = vector.multi_reduction <add>, %361, %cst_76 [1, 2] : vector<1x4x1xf32> to vector<1xf32>
    %363 = vector.shape_cast %362 : vector<1xf32> to vector<1x1x1xf32>
    %364 = vector.extract %363[0, 0, 0] : f32 from vector<1x1x1xf32>
    %365 = vector.broadcast %364 : f32 to vector<1x1xf32>
    %cst_77 = arith.constant 9.765625E-4 : f32
    %366 = vector.broadcast %cst_77 : f32 to vector<1x1xf32>
    %367 = arith.mulf %365, %366 : vector<1x1xf32>
    %cst_78 = arith.constant 9.99999974E-6 : f32
    %368 = vector.broadcast %cst_78 : f32 to vector<1x1xf32>
    %369 = arith.addf %367, %368 : vector<1x1xf32>
    %370 = math.rsqrt %369 : vector<1x1xf32>
    %371 = vector.shape_cast %370 : vector<1x1xf32> to vector<1x1xf32>
    %372 = vector.broadcast %371 : vector<1x1xf32> to vector<4x1xf32>
    %373 = vector.extract_strided_slice %229 {offsets = [44, 0], sizes = [4, 1], strides = [1, 1]} : vector<64x1xf32> to vector<4x1xf32>
    %374 = vector.shape_cast %373 : vector<4x1xf32> to vector<1x4x1xf32>
    %cst_79 = arith.constant dense<0.000000e+00> : vector<1xf32>
    %375 = vector.multi_reduction <add>, %374, %cst_79 [1, 2] : vector<1x4x1xf32> to vector<1xf32>
    %376 = vector.shape_cast %375 : vector<1xf32> to vector<1x1x1xf32>
    %377 = vector.extract %376[0, 0, 0] : f32 from vector<1x1x1xf32>
    %378 = vector.broadcast %377 : f32 to vector<1x1xf32>
    %cst_80 = arith.constant 9.765625E-4 : f32
    %379 = vector.broadcast %cst_80 : f32 to vector<1x1xf32>
    %380 = arith.mulf %378, %379 : vector<1x1xf32>
    %cst_81 = arith.constant 9.99999974E-6 : f32
    %381 = vector.broadcast %cst_81 : f32 to vector<1x1xf32>
    %382 = arith.addf %380, %381 : vector<1x1xf32>
    %383 = math.rsqrt %382 : vector<1x1xf32>
    %384 = vector.shape_cast %383 : vector<1x1xf32> to vector<1x1xf32>
    %385 = vector.broadcast %384 : vector<1x1xf32> to vector<4x1xf32>
    %386 = vector.extract_strided_slice %229 {offsets = [48, 0], sizes = [4, 1], strides = [1, 1]} : vector<64x1xf32> to vector<4x1xf32>
    %387 = vector.shape_cast %386 : vector<4x1xf32> to vector<1x4x1xf32>
    %cst_82 = arith.constant dense<0.000000e+00> : vector<1xf32>
    %388 = vector.multi_reduction <add>, %387, %cst_82 [1, 2] : vector<1x4x1xf32> to vector<1xf32>
    %389 = vector.shape_cast %388 : vector<1xf32> to vector<1x1x1xf32>
    %390 = vector.extract %389[0, 0, 0] : f32 from vector<1x1x1xf32>
    %391 = vector.broadcast %390 : f32 to vector<1x1xf32>
    %cst_83 = arith.constant 9.765625E-4 : f32
    %392 = vector.broadcast %cst_83 : f32 to vector<1x1xf32>
    %393 = arith.mulf %391, %392 : vector<1x1xf32>
    %cst_84 = arith.constant 9.99999974E-6 : f32
    %394 = vector.broadcast %cst_84 : f32 to vector<1x1xf32>
    %395 = arith.addf %393, %394 : vector<1x1xf32>
    %396 = math.rsqrt %395 : vector<1x1xf32>
    %397 = vector.shape_cast %396 : vector<1x1xf32> to vector<1x1xf32>
    %398 = vector.broadcast %397 : vector<1x1xf32> to vector<4x1xf32>
    %399 = vector.extract_strided_slice %229 {offsets = [52, 0], sizes = [4, 1], strides = [1, 1]} : vector<64x1xf32> to vector<4x1xf32>
    %400 = vector.shape_cast %399 : vector<4x1xf32> to vector<1x4x1xf32>
    %cst_85 = arith.constant dense<0.000000e+00> : vector<1xf32>
    %401 = vector.multi_reduction <add>, %400, %cst_85 [1, 2] : vector<1x4x1xf32> to vector<1xf32>
    %402 = vector.shape_cast %401 : vector<1xf32> to vector<1x1x1xf32>
    %403 = vector.extract %402[0, 0, 0] : f32 from vector<1x1x1xf32>
    %404 = vector.broadcast %403 : f32 to vector<1x1xf32>
    %cst_86 = arith.constant 9.765625E-4 : f32
    %405 = vector.broadcast %cst_86 : f32 to vector<1x1xf32>
    %406 = arith.mulf %404, %405 : vector<1x1xf32>
    %cst_87 = arith.constant 9.99999974E-6 : f32
    %407 = vector.broadcast %cst_87 : f32 to vector<1x1xf32>
    %408 = arith.addf %406, %407 : vector<1x1xf32>
    %409 = math.rsqrt %408 : vector<1x1xf32>
    %410 = vector.shape_cast %409 : vector<1x1xf32> to vector<1x1xf32>
    %411 = vector.broadcast %410 : vector<1x1xf32> to vector<4x1xf32>
    %412 = vector.extract_strided_slice %229 {offsets = [56, 0], sizes = [4, 1], strides = [1, 1]} : vector<64x1xf32> to vector<4x1xf32>
    %413 = vector.shape_cast %412 : vector<4x1xf32> to vector<1x4x1xf32>
    %cst_88 = arith.constant dense<0.000000e+00> : vector<1xf32>
    %414 = vector.multi_reduction <add>, %413, %cst_88 [1, 2] : vector<1x4x1xf32> to vector<1xf32>
    %415 = vector.shape_cast %414 : vector<1xf32> to vector<1x1x1xf32>
    %416 = vector.extract %415[0, 0, 0] : f32 from vector<1x1x1xf32>
    %417 = vector.broadcast %416 : f32 to vector<1x1xf32>
    %cst_89 = arith.constant 9.765625E-4 : f32
    %418 = vector.broadcast %cst_89 : f32 to vector<1x1xf32>
    %419 = arith.mulf %417, %418 : vector<1x1xf32>
    %cst_90 = arith.constant 9.99999974E-6 : f32
    %420 = vector.broadcast %cst_90 : f32 to vector<1x1xf32>
    %421 = arith.addf %419, %420 : vector<1x1xf32>
    %422 = math.rsqrt %421 : vector<1x1xf32>
    %423 = vector.shape_cast %422 : vector<1x1xf32> to vector<1x1xf32>
    %424 = vector.broadcast %423 : vector<1x1xf32> to vector<4x1xf32>
    %425 = vector.extract_strided_slice %229 {offsets = [60, 0], sizes = [4, 1], strides = [1, 1]} : vector<64x1xf32> to vector<4x1xf32>
    %426 = vector.shape_cast %425 : vector<4x1xf32> to vector<1x4x1xf32>
    %cst_91 = arith.constant dense<0.000000e+00> : vector<1xf32>
    %427 = vector.multi_reduction <add>, %426, %cst_91 [1, 2] : vector<1x4x1xf32> to vector<1xf32>
    %428 = vector.shape_cast %427 : vector<1xf32> to vector<1x1x1xf32>
    %429 = vector.extract %428[0, 0, 0] : f32 from vector<1x1x1xf32>
    %430 = vector.broadcast %429 : f32 to vector<1x1xf32>
    %cst_92 = arith.constant 9.765625E-4 : f32
    %431 = vector.broadcast %cst_92 : f32 to vector<1x1xf32>
    %432 = arith.mulf %430, %431 : vector<1x1xf32>
    %cst_93 = arith.constant 9.99999974E-6 : f32
    %433 = vector.broadcast %cst_93 : f32 to vector<1x1xf32>
    %434 = arith.addf %432, %433 : vector<1x1xf32>
    %435 = math.rsqrt %434 : vector<1x1xf32>
    %436 = vector.shape_cast %435 : vector<1x1xf32> to vector<1x1xf32>
    %437 = vector.broadcast %436 : vector<1x1xf32> to vector<4x1xf32>
    %438 = tpu.concatenate %242, %255, %268, %281, %294, %307, %320, %333, %346, %359, %372, %385, %398, %411, %424, %437 in 0 : vector<4x1xf32>, vector<4x1xf32>, vector<4x1xf32>, vector<4x1xf32>, vector<4x1xf32>, vector<4x1xf32>, vector<4x1xf32>, vector<4x1xf32>, vector<4x1xf32>, vector<4x1xf32>, vector<4x1xf32>, vector<4x1xf32>, vector<4x1xf32>, vector<4x1xf32>, vector<4x1xf32>, vector<4x1xf32> -> vector<64x1xf32>
    %439 = vector.broadcast %438 : vector<64x1xf32> to vector<64x256xf32>
    %440 = arith.mulf %226, %439 : vector<64x256xf32>
    %441 = vector.broadcast %60 : vector<64x1xf32> to vector<64x256xf32>
    %442 = arith.mulf %440, %441 : vector<64x256xf32>
    %443 = vector.broadcast %61 : vector<64x1xf32> to vector<64x256xf32>
    %444 = arith.addf %442, %443 : vector<64x256xf32>
    %cst_94 = arith.constant 0.000000e+00 : f32
    %445 = vector.broadcast %cst_94 : f32 to vector<64x256xf32>
    %446 = arith.maximumf %444, %445 : vector<64x256xf32>
    %447 = arith.truncf %446 : vector<64x256xf32> to vector<64x256xbf16>
    %448 = vector.extract_strided_slice %447 {offsets = [0, 239], sizes = [64, 17], strides = [1, 1]} : vector<64x256xbf16> to vector<64x17xbf16>
    %449 = vector.extract_strided_slice %447 {offsets = [0, 0], sizes = [64, 239], strides = [1, 1]} : vector<64x256xbf16> to vector<64x239xbf16>
    %450 = tpu.concatenate %448, %449 in 1 : vector<64x17xbf16>, vector<64x239xbf16> -> vector<64x256xbf16>
    %451 = vector.extract_strided_slice %0 {offsets = [0, 0], sizes = [1, 256], strides = [1, 1]} : vector<9x256xbf16> to vector<1x256xbf16>
    %452 = vector.broadcast %451 : vector<1x256xbf16> to vector<64x256xbf16>
    %453 = arith.mulf %450, %452 : vector<64x256xbf16>
    %454 = vector.extract_strided_slice %447 {offsets = [0, 240], sizes = [64, 16], strides = [1, 1]} : vector<64x256xbf16> to vector<64x16xbf16>
    %455 = vector.extract_strided_slice %447 {offsets = [0, 0], sizes = [64, 240], strides = [1, 1]} : vector<64x256xbf16> to vector<64x240xbf16>
    %456 = tpu.concatenate %454, %455 in 1 : vector<64x16xbf16>, vector<64x240xbf16> -> vector<64x256xbf16>
    %457 = vector.extract_strided_slice %0 {offsets = [1, 0], sizes = [1, 256], strides = [1, 1]} : vector<9x256xbf16> to vector<1x256xbf16>
    %458 = vector.broadcast %457 : vector<1x256xbf16> to vector<64x256xbf16>
    %459 = arith.mulf %456, %458 : vector<64x256xbf16>
    %460 = vector.extract_strided_slice %447 {offsets = [0, 241], sizes = [64, 15], strides = [1, 1]} : vector<64x256xbf16> to vector<64x15xbf16>
    %461 = vector.extract_strided_slice %447 {offsets = [0, 0], sizes = [64, 241], strides = [1, 1]} : vector<64x256xbf16> to vector<64x241xbf16>
    %462 = tpu.concatenate %460, %461 in 1 : vector<64x15xbf16>, vector<64x241xbf16> -> vector<64x256xbf16>
    %463 = vector.extract_strided_slice %0 {offsets = [2, 0], sizes = [1, 256], strides = [1, 1]} : vector<9x256xbf16> to vector<1x256xbf16>
    %464 = vector.broadcast %463 : vector<1x256xbf16> to vector<64x256xbf16>
    %465 = arith.mulf %462, %464 : vector<64x256xbf16>
    %466 = vector.extract_strided_slice %447 {offsets = [0, 255], sizes = [64, 1], strides = [1, 1]} : vector<64x256xbf16> to vector<64x1xbf16>
    %467 = vector.extract_strided_slice %447 {offsets = [0, 0], sizes = [64, 255], strides = [1, 1]} : vector<64x256xbf16> to vector<64x255xbf16>
    %468 = tpu.concatenate %466, %467 in 1 : vector<64x1xbf16>, vector<64x255xbf16> -> vector<64x256xbf16>
    %469 = vector.extract_strided_slice %0 {offsets = [3, 0], sizes = [1, 256], strides = [1, 1]} : vector<9x256xbf16> to vector<1x256xbf16>
    %470 = vector.broadcast %469 : vector<1x256xbf16> to vector<64x256xbf16>
    %471 = arith.mulf %468, %470 : vector<64x256xbf16>
    %472 = vector.extract_strided_slice %0 {offsets = [4, 0], sizes = [1, 256], strides = [1, 1]} : vector<9x256xbf16> to vector<1x256xbf16>
    %473 = vector.broadcast %472 : vector<1x256xbf16> to vector<64x256xbf16>
    %474 = arith.mulf %447, %473 : vector<64x256xbf16>
    %475 = vector.extract_strided_slice %447 {offsets = [0, 1], sizes = [64, 255], strides = [1, 1]} : vector<64x256xbf16> to vector<64x255xbf16>
    %476 = vector.extract_strided_slice %447 {offsets = [0, 0], sizes = [64, 1], strides = [1, 1]} : vector<64x256xbf16> to vector<64x1xbf16>
    %477 = tpu.concatenate %475, %476 in 1 : vector<64x255xbf16>, vector<64x1xbf16> -> vector<64x256xbf16>
    %478 = vector.extract_strided_slice %0 {offsets = [5, 0], sizes = [1, 256], strides = [1, 1]} : vector<9x256xbf16> to vector<1x256xbf16>
    %479 = vector.broadcast %478 : vector<1x256xbf16> to vector<64x256xbf16>
    %480 = arith.mulf %477, %479 : vector<64x256xbf16>
    %481 = vector.extract_strided_slice %447 {offsets = [0, 15], sizes = [64, 241], strides = [1, 1]} : vector<64x256xbf16> to vector<64x241xbf16>
    %482 = vector.extract_strided_slice %447 {offsets = [0, 0], sizes = [64, 15], strides = [1, 1]} : vector<64x256xbf16> to vector<64x15xbf16>
    %483 = tpu.concatenate %481, %482 in 1 : vector<64x241xbf16>, vector<64x15xbf16> -> vector<64x256xbf16>
    %484 = vector.extract_strided_slice %0 {offsets = [6, 0], sizes = [1, 256], strides = [1, 1]} : vector<9x256xbf16> to vector<1x256xbf16>
    %485 = vector.broadcast %484 : vector<1x256xbf16> to vector<64x256xbf16>
    %486 = arith.mulf %483, %485 : vector<64x256xbf16>
    %487 = vector.extract_strided_slice %447 {offsets = [0, 16], sizes = [64, 240], strides = [1, 1]} : vector<64x256xbf16> to vector<64x240xbf16>
    %488 = vector.extract_strided_slice %447 {offsets = [0, 0], sizes = [64, 16], strides = [1, 1]} : vector<64x256xbf16> to vector<64x16xbf16>
    %489 = tpu.concatenate %487, %488 in 1 : vector<64x240xbf16>, vector<64x16xbf16> -> vector<64x256xbf16>
    %490 = vector.extract_strided_slice %0 {offsets = [7, 0], sizes = [1, 256], strides = [1, 1]} : vector<9x256xbf16> to vector<1x256xbf16>
    %491 = vector.broadcast %490 : vector<1x256xbf16> to vector<64x256xbf16>
    %492 = arith.mulf %489, %491 : vector<64x256xbf16>
    %493 = vector.extract_strided_slice %447 {offsets = [0, 17], sizes = [64, 239], strides = [1, 1]} : vector<64x256xbf16> to vector<64x239xbf16>
    %494 = vector.extract_strided_slice %447 {offsets = [0, 0], sizes = [64, 17], strides = [1, 1]} : vector<64x256xbf16> to vector<64x17xbf16>
    %495 = tpu.concatenate %493, %494 in 1 : vector<64x239xbf16>, vector<64x17xbf16> -> vector<64x256xbf16>
    %496 = vector.extract_strided_slice %0 {offsets = [8, 0], sizes = [1, 256], strides = [1, 1]} : vector<9x256xbf16> to vector<1x256xbf16>
    %497 = vector.broadcast %496 : vector<1x256xbf16> to vector<64x256xbf16>
    %498 = arith.mulf %495, %497 : vector<64x256xbf16>
    %499 = vector.extract_strided_slice %453 {offsets = [0, 0], sizes = [32, 256], strides = [1, 1]} : vector<64x256xbf16> to vector<32x256xbf16>
    %500 = vector.extract_strided_slice %459 {offsets = [0, 0], sizes = [32, 256], strides = [1, 1]} : vector<64x256xbf16> to vector<32x256xbf16>
    %501 = vector.extract_strided_slice %465 {offsets = [0, 0], sizes = [32, 256], strides = [1, 1]} : vector<64x256xbf16> to vector<32x256xbf16>
    %502 = vector.extract_strided_slice %471 {offsets = [0, 0], sizes = [32, 256], strides = [1, 1]} : vector<64x256xbf16> to vector<32x256xbf16>
    %503 = vector.extract_strided_slice %474 {offsets = [0, 0], sizes = [32, 256], strides = [1, 1]} : vector<64x256xbf16> to vector<32x256xbf16>
    %504 = vector.extract_strided_slice %480 {offsets = [0, 0], sizes = [32, 256], strides = [1, 1]} : vector<64x256xbf16> to vector<32x256xbf16>
    %505 = vector.extract_strided_slice %486 {offsets = [0, 0], sizes = [32, 256], strides = [1, 1]} : vector<64x256xbf16> to vector<32x256xbf16>
    %506 = vector.extract_strided_slice %492 {offsets = [0, 0], sizes = [32, 256], strides = [1, 1]} : vector<64x256xbf16> to vector<32x256xbf16>
    %507 = vector.extract_strided_slice %498 {offsets = [0, 0], sizes = [32, 256], strides = [1, 1]} : vector<64x256xbf16> to vector<32x256xbf16>
    %508 = tpu.concatenate %499, %500, %501, %502, %503, %504, %505, %506, %507 in 0 : vector<32x256xbf16>, vector<32x256xbf16>, vector<32x256xbf16>, vector<32x256xbf16>, vector<32x256xbf16>, vector<32x256xbf16>, vector<32x256xbf16>, vector<32x256xbf16>, vector<32x256xbf16> -> vector<288x256xbf16>
    %509 = vector.extract_strided_slice %453 {offsets = [32, 0], sizes = [32, 256], strides = [1, 1]} : vector<64x256xbf16> to vector<32x256xbf16>
    %510 = vector.extract_strided_slice %459 {offsets = [32, 0], sizes = [32, 256], strides = [1, 1]} : vector<64x256xbf16> to vector<32x256xbf16>
    %511 = vector.extract_strided_slice %465 {offsets = [32, 0], sizes = [32, 256], strides = [1, 1]} : vector<64x256xbf16> to vector<32x256xbf16>
    %512 = vector.extract_strided_slice %471 {offsets = [32, 0], sizes = [32, 256], strides = [1, 1]} : vector<64x256xbf16> to vector<32x256xbf16>
    %513 = vector.extract_strided_slice %474 {offsets = [32, 0], sizes = [32, 256], strides = [1, 1]} : vector<64x256xbf16> to vector<32x256xbf16>
    %514 = vector.extract_strided_slice %480 {offsets = [32, 0], sizes = [32, 256], strides = [1, 1]} : vector<64x256xbf16> to vector<32x256xbf16>
    %515 = vector.extract_strided_slice %486 {offsets = [32, 0], sizes = [32, 256], strides = [1, 1]} : vector<64x256xbf16> to vector<32x256xbf16>
    %516 = vector.extract_strided_slice %492 {offsets = [32, 0], sizes = [32, 256], strides = [1, 1]} : vector<64x256xbf16> to vector<32x256xbf16>
    %517 = vector.extract_strided_slice %498 {offsets = [32, 0], sizes = [32, 256], strides = [1, 1]} : vector<64x256xbf16> to vector<32x256xbf16>
    %518 = tpu.concatenate %509, %510, %511, %512, %513, %514, %515, %516, %517 in 0 : vector<32x256xbf16>, vector<32x256xbf16>, vector<32x256xbf16>, vector<32x256xbf16>, vector<32x256xbf16>, vector<32x256xbf16>, vector<32x256xbf16>, vector<32x256xbf16>, vector<32x256xbf16> -> vector<288x256xbf16>
    %c0_95 = arith.constant 0 : index
    %c0_96 = arith.constant 0 : index
    %519 = vector.load %arg7[%c0_95, %c0_96] : memref<32x288xbf16, #tpu.memory_space<vmem>>, vector<32x288xbf16>
    %cst_97 = arith.constant dense<0.000000e+00> : vector<32x256xf32>
    %520 = tpu.matmul %519, %508, %cst_97 {dimension_numbers = #tpu.dot_dimension_numbers<[1], [0], [0], [1], [0, 0, 1, 1], [], []>} : vector<32x288xbf16>, vector<288x256xbf16>, vector<32x256xf32> -> vector<32x256xf32>
    %c0_98 = arith.constant 0 : index
    %c0_99 = arith.constant 0 : index
    %521 = vector.load %arg8[%c0_98, %c0_99] : memref<32x1xf32, #tpu.memory_space<vmem>>, vector<32x1xf32>
    %522 = vector.broadcast %521 : vector<32x1xf32> to vector<32x256xf32>
    %523 = arith.addf %520, %522 : vector<32x256xf32>
    %c0_100 = arith.constant 0 : index
    %c0_101 = arith.constant 0 : index
    %524 = vector.load %arg11[%c0_100, %c0_101] : memref<32x288xbf16, #tpu.memory_space<vmem>>, vector<32x288xbf16>
    %cst_102 = arith.constant dense<0.000000e+00> : vector<32x256xf32>
    %525 = tpu.matmul %524, %518, %cst_102 {dimension_numbers = #tpu.dot_dimension_numbers<[1], [0], [0], [1], [0, 0, 1, 1], [], []>} : vector<32x288xbf16>, vector<288x256xbf16>, vector<32x256xf32> -> vector<32x256xf32>
    %c0_103 = arith.constant 0 : index
    %c0_104 = arith.constant 0 : index
    %526 = vector.load %arg12[%c0_103, %c0_104] : memref<32x1xf32, #tpu.memory_space<vmem>>, vector<32x1xf32>
    %527 = vector.broadcast %526 : vector<32x1xf32> to vector<32x256xf32>
    %528 = arith.addf %525, %527 : vector<32x256xf32>
    %c0_105 = arith.constant 0 : index
    %c0_106 = arith.constant 0 : index
    %529 = vector.load %arg9[%c0_105, %c0_106] : memref<32x1xf32, #tpu.memory_space<vmem>>, vector<32x1xf32>
    %c0_107 = arith.constant 0 : index
    %c0_108 = arith.constant 0 : index
    %530 = vector.load %arg10[%c0_107, %c0_108] : memref<32x1xf32, #tpu.memory_space<vmem>>, vector<32x1xf32>
    %cst_109 = arith.constant dense<0.000000e+00> : vector<32xf32>
    %531 = vector.multi_reduction <add>, %523, %cst_109 [1] : vector<32x256xf32> to vector<32xf32>
    %532 = vector.shape_cast %531 : vector<32xf32> to vector<32x1xf32>
    %533 = vector.extract_strided_slice %532 {offsets = [0, 0], sizes = [4, 1], strides = [1, 1]} : vector<32x1xf32> to vector<4x1xf32>
    %534 = vector.shape_cast %533 : vector<4x1xf32> to vector<1x4x1xf32>
    %cst_110 = arith.constant dense<0.000000e+00> : vector<1xf32>
    %535 = vector.multi_reduction <add>, %534, %cst_110 [1, 2] : vector<1x4x1xf32> to vector<1xf32>
    %536 = vector.shape_cast %535 : vector<1xf32> to vector<1x1x1xf32>
    %537 = vector.extract %536[0, 0, 0] : f32 from vector<1x1x1xf32>
    %538 = vector.broadcast %537 : f32 to vector<1x1xf32>
    %cst_111 = arith.constant 9.765625E-4 : f32
    %539 = vector.broadcast %cst_111 : f32 to vector<1x1xf32>
    %540 = arith.mulf %538, %539 : vector<1x1xf32>
    %541 = vector.shape_cast %540 : vector<1x1xf32> to vector<1x1xf32>
    %542 = vector.broadcast %541 : vector<1x1xf32> to vector<4x1xf32>
    %543 = vector.extract_strided_slice %532 {offsets = [4, 0], sizes = [4, 1], strides = [1, 1]} : vector<32x1xf32> to vector<4x1xf32>
    %544 = vector.shape_cast %543 : vector<4x1xf32> to vector<1x4x1xf32>
    %cst_112 = arith.constant dense<0.000000e+00> : vector<1xf32>
    %545 = vector.multi_reduction <add>, %544, %cst_112 [1, 2] : vector<1x4x1xf32> to vector<1xf32>
    %546 = vector.shape_cast %545 : vector<1xf32> to vector<1x1x1xf32>
    %547 = vector.extract %546[0, 0, 0] : f32 from vector<1x1x1xf32>
    %548 = vector.broadcast %547 : f32 to vector<1x1xf32>
    %cst_113 = arith.constant 9.765625E-4 : f32
    %549 = vector.broadcast %cst_113 : f32 to vector<1x1xf32>
    %550 = arith.mulf %548, %549 : vector<1x1xf32>
    %551 = vector.shape_cast %550 : vector<1x1xf32> to vector<1x1xf32>
    %552 = vector.broadcast %551 : vector<1x1xf32> to vector<4x1xf32>
    %553 = vector.extract_strided_slice %532 {offsets = [8, 0], sizes = [4, 1], strides = [1, 1]} : vector<32x1xf32> to vector<4x1xf32>
    %554 = vector.shape_cast %553 : vector<4x1xf32> to vector<1x4x1xf32>
    %cst_114 = arith.constant dense<0.000000e+00> : vector<1xf32>
    %555 = vector.multi_reduction <add>, %554, %cst_114 [1, 2] : vector<1x4x1xf32> to vector<1xf32>
    %556 = vector.shape_cast %555 : vector<1xf32> to vector<1x1x1xf32>
    %557 = vector.extract %556[0, 0, 0] : f32 from vector<1x1x1xf32>
    %558 = vector.broadcast %557 : f32 to vector<1x1xf32>
    %cst_115 = arith.constant 9.765625E-4 : f32
    %559 = vector.broadcast %cst_115 : f32 to vector<1x1xf32>
    %560 = arith.mulf %558, %559 : vector<1x1xf32>
    %561 = vector.shape_cast %560 : vector<1x1xf32> to vector<1x1xf32>
    %562 = vector.broadcast %561 : vector<1x1xf32> to vector<4x1xf32>
    %563 = vector.extract_strided_slice %532 {offsets = [12, 0], sizes = [4, 1], strides = [1, 1]} : vector<32x1xf32> to vector<4x1xf32>
    %564 = vector.shape_cast %563 : vector<4x1xf32> to vector<1x4x1xf32>
    %cst_116 = arith.constant dense<0.000000e+00> : vector<1xf32>
    %565 = vector.multi_reduction <add>, %564, %cst_116 [1, 2] : vector<1x4x1xf32> to vector<1xf32>
    %566 = vector.shape_cast %565 : vector<1xf32> to vector<1x1x1xf32>
    %567 = vector.extract %566[0, 0, 0] : f32 from vector<1x1x1xf32>
    %568 = vector.broadcast %567 : f32 to vector<1x1xf32>
    %cst_117 = arith.constant 9.765625E-4 : f32
    %569 = vector.broadcast %cst_117 : f32 to vector<1x1xf32>
    %570 = arith.mulf %568, %569 : vector<1x1xf32>
    %571 = vector.shape_cast %570 : vector<1x1xf32> to vector<1x1xf32>
    %572 = vector.broadcast %571 : vector<1x1xf32> to vector<4x1xf32>
    %573 = vector.extract_strided_slice %532 {offsets = [16, 0], sizes = [4, 1], strides = [1, 1]} : vector<32x1xf32> to vector<4x1xf32>
    %574 = vector.shape_cast %573 : vector<4x1xf32> to vector<1x4x1xf32>
    %cst_118 = arith.constant dense<0.000000e+00> : vector<1xf32>
    %575 = vector.multi_reduction <add>, %574, %cst_118 [1, 2] : vector<1x4x1xf32> to vector<1xf32>
    %576 = vector.shape_cast %575 : vector<1xf32> to vector<1x1x1xf32>
    %577 = vector.extract %576[0, 0, 0] : f32 from vector<1x1x1xf32>
    %578 = vector.broadcast %577 : f32 to vector<1x1xf32>
    %cst_119 = arith.constant 9.765625E-4 : f32
    %579 = vector.broadcast %cst_119 : f32 to vector<1x1xf32>
    %580 = arith.mulf %578, %579 : vector<1x1xf32>
    %581 = vector.shape_cast %580 : vector<1x1xf32> to vector<1x1xf32>
    %582 = vector.broadcast %581 : vector<1x1xf32> to vector<4x1xf32>
    %583 = vector.extract_strided_slice %532 {offsets = [20, 0], sizes = [4, 1], strides = [1, 1]} : vector<32x1xf32> to vector<4x1xf32>
    %584 = vector.shape_cast %583 : vector<4x1xf32> to vector<1x4x1xf32>
    %cst_120 = arith.constant dense<0.000000e+00> : vector<1xf32>
    %585 = vector.multi_reduction <add>, %584, %cst_120 [1, 2] : vector<1x4x1xf32> to vector<1xf32>
    %586 = vector.shape_cast %585 : vector<1xf32> to vector<1x1x1xf32>
    %587 = vector.extract %586[0, 0, 0] : f32 from vector<1x1x1xf32>
    %588 = vector.broadcast %587 : f32 to vector<1x1xf32>
    %cst_121 = arith.constant 9.765625E-4 : f32
    %589 = vector.broadcast %cst_121 : f32 to vector<1x1xf32>
    %590 = arith.mulf %588, %589 : vector<1x1xf32>
    %591 = vector.shape_cast %590 : vector<1x1xf32> to vector<1x1xf32>
    %592 = vector.broadcast %591 : vector<1x1xf32> to vector<4x1xf32>
    %593 = vector.extract_strided_slice %532 {offsets = [24, 0], sizes = [4, 1], strides = [1, 1]} : vector<32x1xf32> to vector<4x1xf32>
    %594 = vector.shape_cast %593 : vector<4x1xf32> to vector<1x4x1xf32>
    %cst_122 = arith.constant dense<0.000000e+00> : vector<1xf32>
    %595 = vector.multi_reduction <add>, %594, %cst_122 [1, 2] : vector<1x4x1xf32> to vector<1xf32>
    %596 = vector.shape_cast %595 : vector<1xf32> to vector<1x1x1xf32>
    %597 = vector.extract %596[0, 0, 0] : f32 from vector<1x1x1xf32>
    %598 = vector.broadcast %597 : f32 to vector<1x1xf32>
    %cst_123 = arith.constant 9.765625E-4 : f32
    %599 = vector.broadcast %cst_123 : f32 to vector<1x1xf32>
    %600 = arith.mulf %598, %599 : vector<1x1xf32>
    %601 = vector.shape_cast %600 : vector<1x1xf32> to vector<1x1xf32>
    %602 = vector.broadcast %601 : vector<1x1xf32> to vector<4x1xf32>
    %603 = vector.extract_strided_slice %532 {offsets = [28, 0], sizes = [4, 1], strides = [1, 1]} : vector<32x1xf32> to vector<4x1xf32>
    %604 = vector.shape_cast %603 : vector<4x1xf32> to vector<1x4x1xf32>
    %cst_124 = arith.constant dense<0.000000e+00> : vector<1xf32>
    %605 = vector.multi_reduction <add>, %604, %cst_124 [1, 2] : vector<1x4x1xf32> to vector<1xf32>
    %606 = vector.shape_cast %605 : vector<1xf32> to vector<1x1x1xf32>
    %607 = vector.extract %606[0, 0, 0] : f32 from vector<1x1x1xf32>
    %608 = vector.broadcast %607 : f32 to vector<1x1xf32>
    %cst_125 = arith.constant 9.765625E-4 : f32
    %609 = vector.broadcast %cst_125 : f32 to vector<1x1xf32>
    %610 = arith.mulf %608, %609 : vector<1x1xf32>
    %611 = vector.shape_cast %610 : vector<1x1xf32> to vector<1x1xf32>
    %612 = vector.broadcast %611 : vector<1x1xf32> to vector<4x1xf32>
    %613 = tpu.concatenate %542, %552, %562, %572, %582, %592, %602, %612 in 0 : vector<4x1xf32>, vector<4x1xf32>, vector<4x1xf32>, vector<4x1xf32>, vector<4x1xf32>, vector<4x1xf32>, vector<4x1xf32>, vector<4x1xf32> -> vector<32x1xf32>
    %614 = vector.broadcast %613 : vector<32x1xf32> to vector<32x256xf32>
    %615 = arith.subf %523, %614 : vector<32x256xf32>
    %616 = arith.mulf %615, %615 : vector<32x256xf32>
    %cst_126 = arith.constant dense<0.000000e+00> : vector<32xf32>
    %617 = vector.multi_reduction <add>, %616, %cst_126 [1] : vector<32x256xf32> to vector<32xf32>
    %618 = vector.shape_cast %617 : vector<32xf32> to vector<32x1xf32>
    %619 = vector.extract_strided_slice %618 {offsets = [0, 0], sizes = [4, 1], strides = [1, 1]} : vector<32x1xf32> to vector<4x1xf32>
    %620 = vector.shape_cast %619 : vector<4x1xf32> to vector<1x4x1xf32>
    %cst_127 = arith.constant dense<0.000000e+00> : vector<1xf32>
    %621 = vector.multi_reduction <add>, %620, %cst_127 [1, 2] : vector<1x4x1xf32> to vector<1xf32>
    %622 = vector.shape_cast %621 : vector<1xf32> to vector<1x1x1xf32>
    %623 = vector.extract %622[0, 0, 0] : f32 from vector<1x1x1xf32>
    %624 = vector.broadcast %623 : f32 to vector<1x1xf32>
    %cst_128 = arith.constant 9.765625E-4 : f32
    %625 = vector.broadcast %cst_128 : f32 to vector<1x1xf32>
    %626 = arith.mulf %624, %625 : vector<1x1xf32>
    %cst_129 = arith.constant 9.99999974E-6 : f32
    %627 = vector.broadcast %cst_129 : f32 to vector<1x1xf32>
    %628 = arith.addf %626, %627 : vector<1x1xf32>
    %629 = math.rsqrt %628 : vector<1x1xf32>
    %630 = vector.shape_cast %629 : vector<1x1xf32> to vector<1x1xf32>
    %631 = vector.broadcast %630 : vector<1x1xf32> to vector<4x1xf32>
    %632 = vector.extract_strided_slice %618 {offsets = [4, 0], sizes = [4, 1], strides = [1, 1]} : vector<32x1xf32> to vector<4x1xf32>
    %633 = vector.shape_cast %632 : vector<4x1xf32> to vector<1x4x1xf32>
    %cst_130 = arith.constant dense<0.000000e+00> : vector<1xf32>
    %634 = vector.multi_reduction <add>, %633, %cst_130 [1, 2] : vector<1x4x1xf32> to vector<1xf32>
    %635 = vector.shape_cast %634 : vector<1xf32> to vector<1x1x1xf32>
    %636 = vector.extract %635[0, 0, 0] : f32 from vector<1x1x1xf32>
    %637 = vector.broadcast %636 : f32 to vector<1x1xf32>
    %cst_131 = arith.constant 9.765625E-4 : f32
    %638 = vector.broadcast %cst_131 : f32 to vector<1x1xf32>
    %639 = arith.mulf %637, %638 : vector<1x1xf32>
    %cst_132 = arith.constant 9.99999974E-6 : f32
    %640 = vector.broadcast %cst_132 : f32 to vector<1x1xf32>
    %641 = arith.addf %639, %640 : vector<1x1xf32>
    %642 = math.rsqrt %641 : vector<1x1xf32>
    %643 = vector.shape_cast %642 : vector<1x1xf32> to vector<1x1xf32>
    %644 = vector.broadcast %643 : vector<1x1xf32> to vector<4x1xf32>
    %645 = vector.extract_strided_slice %618 {offsets = [8, 0], sizes = [4, 1], strides = [1, 1]} : vector<32x1xf32> to vector<4x1xf32>
    %646 = vector.shape_cast %645 : vector<4x1xf32> to vector<1x4x1xf32>
    %cst_133 = arith.constant dense<0.000000e+00> : vector<1xf32>
    %647 = vector.multi_reduction <add>, %646, %cst_133 [1, 2] : vector<1x4x1xf32> to vector<1xf32>
    %648 = vector.shape_cast %647 : vector<1xf32> to vector<1x1x1xf32>
    %649 = vector.extract %648[0, 0, 0] : f32 from vector<1x1x1xf32>
    %650 = vector.broadcast %649 : f32 to vector<1x1xf32>
    %cst_134 = arith.constant 9.765625E-4 : f32
    %651 = vector.broadcast %cst_134 : f32 to vector<1x1xf32>
    %652 = arith.mulf %650, %651 : vector<1x1xf32>
    %cst_135 = arith.constant 9.99999974E-6 : f32
    %653 = vector.broadcast %cst_135 : f32 to vector<1x1xf32>
    %654 = arith.addf %652, %653 : vector<1x1xf32>
    %655 = math.rsqrt %654 : vector<1x1xf32>
    %656 = vector.shape_cast %655 : vector<1x1xf32> to vector<1x1xf32>
    %657 = vector.broadcast %656 : vector<1x1xf32> to vector<4x1xf32>
    %658 = vector.extract_strided_slice %618 {offsets = [12, 0], sizes = [4, 1], strides = [1, 1]} : vector<32x1xf32> to vector<4x1xf32>
    %659 = vector.shape_cast %658 : vector<4x1xf32> to vector<1x4x1xf32>
    %cst_136 = arith.constant dense<0.000000e+00> : vector<1xf32>
    %660 = vector.multi_reduction <add>, %659, %cst_136 [1, 2] : vector<1x4x1xf32> to vector<1xf32>
    %661 = vector.shape_cast %660 : vector<1xf32> to vector<1x1x1xf32>
    %662 = vector.extract %661[0, 0, 0] : f32 from vector<1x1x1xf32>
    %663 = vector.broadcast %662 : f32 to vector<1x1xf32>
    %cst_137 = arith.constant 9.765625E-4 : f32
    %664 = vector.broadcast %cst_137 : f32 to vector<1x1xf32>
    %665 = arith.mulf %663, %664 : vector<1x1xf32>
    %cst_138 = arith.constant 9.99999974E-6 : f32
    %666 = vector.broadcast %cst_138 : f32 to vector<1x1xf32>
    %667 = arith.addf %665, %666 : vector<1x1xf32>
    %668 = math.rsqrt %667 : vector<1x1xf32>
    %669 = vector.shape_cast %668 : vector<1x1xf32> to vector<1x1xf32>
    %670 = vector.broadcast %669 : vector<1x1xf32> to vector<4x1xf32>
    %671 = vector.extract_strided_slice %618 {offsets = [16, 0], sizes = [4, 1], strides = [1, 1]} : vector<32x1xf32> to vector<4x1xf32>
    %672 = vector.shape_cast %671 : vector<4x1xf32> to vector<1x4x1xf32>
    %cst_139 = arith.constant dense<0.000000e+00> : vector<1xf32>
    %673 = vector.multi_reduction <add>, %672, %cst_139 [1, 2] : vector<1x4x1xf32> to vector<1xf32>
    %674 = vector.shape_cast %673 : vector<1xf32> to vector<1x1x1xf32>
    %675 = vector.extract %674[0, 0, 0] : f32 from vector<1x1x1xf32>
    %676 = vector.broadcast %675 : f32 to vector<1x1xf32>
    %cst_140 = arith.constant 9.765625E-4 : f32
    %677 = vector.broadcast %cst_140 : f32 to vector<1x1xf32>
    %678 = arith.mulf %676, %677 : vector<1x1xf32>
    %cst_141 = arith.constant 9.99999974E-6 : f32
    %679 = vector.broadcast %cst_141 : f32 to vector<1x1xf32>
    %680 = arith.addf %678, %679 : vector<1x1xf32>
    %681 = math.rsqrt %680 : vector<1x1xf32>
    %682 = vector.shape_cast %681 : vector<1x1xf32> to vector<1x1xf32>
    %683 = vector.broadcast %682 : vector<1x1xf32> to vector<4x1xf32>
    %684 = vector.extract_strided_slice %618 {offsets = [20, 0], sizes = [4, 1], strides = [1, 1]} : vector<32x1xf32> to vector<4x1xf32>
    %685 = vector.shape_cast %684 : vector<4x1xf32> to vector<1x4x1xf32>
    %cst_142 = arith.constant dense<0.000000e+00> : vector<1xf32>
    %686 = vector.multi_reduction <add>, %685, %cst_142 [1, 2] : vector<1x4x1xf32> to vector<1xf32>
    %687 = vector.shape_cast %686 : vector<1xf32> to vector<1x1x1xf32>
    %688 = vector.extract %687[0, 0, 0] : f32 from vector<1x1x1xf32>
    %689 = vector.broadcast %688 : f32 to vector<1x1xf32>
    %cst_143 = arith.constant 9.765625E-4 : f32
    %690 = vector.broadcast %cst_143 : f32 to vector<1x1xf32>
    %691 = arith.mulf %689, %690 : vector<1x1xf32>
    %cst_144 = arith.constant 9.99999974E-6 : f32
    %692 = vector.broadcast %cst_144 : f32 to vector<1x1xf32>
    %693 = arith.addf %691, %692 : vector<1x1xf32>
    %694 = math.rsqrt %693 : vector<1x1xf32>
    %695 = vector.shape_cast %694 : vector<1x1xf32> to vector<1x1xf32>
    %696 = vector.broadcast %695 : vector<1x1xf32> to vector<4x1xf32>
    %697 = vector.extract_strided_slice %618 {offsets = [24, 0], sizes = [4, 1], strides = [1, 1]} : vector<32x1xf32> to vector<4x1xf32>
    %698 = vector.shape_cast %697 : vector<4x1xf32> to vector<1x4x1xf32>
    %cst_145 = arith.constant dense<0.000000e+00> : vector<1xf32>
    %699 = vector.multi_reduction <add>, %698, %cst_145 [1, 2] : vector<1x4x1xf32> to vector<1xf32>
    %700 = vector.shape_cast %699 : vector<1xf32> to vector<1x1x1xf32>
    %701 = vector.extract %700[0, 0, 0] : f32 from vector<1x1x1xf32>
    %702 = vector.broadcast %701 : f32 to vector<1x1xf32>
    %cst_146 = arith.constant 9.765625E-4 : f32
    %703 = vector.broadcast %cst_146 : f32 to vector<1x1xf32>
    %704 = arith.mulf %702, %703 : vector<1x1xf32>
    %cst_147 = arith.constant 9.99999974E-6 : f32
    %705 = vector.broadcast %cst_147 : f32 to vector<1x1xf32>
    %706 = arith.addf %704, %705 : vector<1x1xf32>
    %707 = math.rsqrt %706 : vector<1x1xf32>
    %708 = vector.shape_cast %707 : vector<1x1xf32> to vector<1x1xf32>
    %709 = vector.broadcast %708 : vector<1x1xf32> to vector<4x1xf32>
    %710 = vector.extract_strided_slice %618 {offsets = [28, 0], sizes = [4, 1], strides = [1, 1]} : vector<32x1xf32> to vector<4x1xf32>
    %711 = vector.shape_cast %710 : vector<4x1xf32> to vector<1x4x1xf32>
    %cst_148 = arith.constant dense<0.000000e+00> : vector<1xf32>
    %712 = vector.multi_reduction <add>, %711, %cst_148 [1, 2] : vector<1x4x1xf32> to vector<1xf32>
    %713 = vector.shape_cast %712 : vector<1xf32> to vector<1x1x1xf32>
    %714 = vector.extract %713[0, 0, 0] : f32 from vector<1x1x1xf32>
    %715 = vector.broadcast %714 : f32 to vector<1x1xf32>
    %cst_149 = arith.constant 9.765625E-4 : f32
    %716 = vector.broadcast %cst_149 : f32 to vector<1x1xf32>
    %717 = arith.mulf %715, %716 : vector<1x1xf32>
    %cst_150 = arith.constant 9.99999974E-6 : f32
    %718 = vector.broadcast %cst_150 : f32 to vector<1x1xf32>
    %719 = arith.addf %717, %718 : vector<1x1xf32>
    %720 = math.rsqrt %719 : vector<1x1xf32>
    %721 = vector.shape_cast %720 : vector<1x1xf32> to vector<1x1xf32>
    %722 = vector.broadcast %721 : vector<1x1xf32> to vector<4x1xf32>
    %723 = tpu.concatenate %631, %644, %657, %670, %683, %696, %709, %722 in 0 : vector<4x1xf32>, vector<4x1xf32>, vector<4x1xf32>, vector<4x1xf32>, vector<4x1xf32>, vector<4x1xf32>, vector<4x1xf32>, vector<4x1xf32> -> vector<32x1xf32>
    %724 = vector.broadcast %723 : vector<32x1xf32> to vector<32x256xf32>
    %725 = arith.mulf %615, %724 : vector<32x256xf32>
    %726 = vector.broadcast %529 : vector<32x1xf32> to vector<32x256xf32>
    %727 = arith.mulf %725, %726 : vector<32x256xf32>
    %728 = vector.broadcast %530 : vector<32x1xf32> to vector<32x256xf32>
    %729 = arith.addf %727, %728 : vector<32x256xf32>
    %cst_151 = arith.constant 0.000000e+00 : f32
    %730 = vector.broadcast %cst_151 : f32 to vector<32x256xf32>
    %731 = arith.maximumf %729, %730 : vector<32x256xf32>
    %732 = arith.negf %731 : vector<32x256xf32>
    %733 = math.exp %732 : vector<32x256xf32>
    %cst_152 = arith.constant 1.000000e+00 : f32
    %734 = vector.broadcast %cst_152 : f32 to vector<32x256xf32>
    %735 = arith.addf %734, %733 : vector<32x256xf32>
    %736 = arith.divf %734, %735 : vector<32x256xf32>
    %c0_153 = arith.constant 0 : index
    %c0_154 = arith.constant 0 : index
    %737 = vector.load %arg13[%c0_153, %c0_154] : memref<32x1xf32, #tpu.memory_space<vmem>>, vector<32x1xf32>
    %c0_155 = arith.constant 0 : index
    %c0_156 = arith.constant 0 : index
    %738 = vector.load %arg14[%c0_155, %c0_156] : memref<32x1xf32, #tpu.memory_space<vmem>>, vector<32x1xf32>
    %cst_157 = arith.constant dense<0.000000e+00> : vector<32xf32>
    %739 = vector.multi_reduction <add>, %528, %cst_157 [1] : vector<32x256xf32> to vector<32xf32>
    %740 = vector.shape_cast %739 : vector<32xf32> to vector<32x1xf32>
    %741 = vector.extract_strided_slice %740 {offsets = [0, 0], sizes = [4, 1], strides = [1, 1]} : vector<32x1xf32> to vector<4x1xf32>
    %742 = vector.shape_cast %741 : vector<4x1xf32> to vector<1x4x1xf32>
    %cst_158 = arith.constant dense<0.000000e+00> : vector<1xf32>
    %743 = vector.multi_reduction <add>, %742, %cst_158 [1, 2] : vector<1x4x1xf32> to vector<1xf32>
    %744 = vector.shape_cast %743 : vector<1xf32> to vector<1x1x1xf32>
    %745 = vector.extract %744[0, 0, 0] : f32 from vector<1x1x1xf32>
    %746 = vector.broadcast %745 : f32 to vector<1x1xf32>
    %cst_159 = arith.constant 9.765625E-4 : f32
    %747 = vector.broadcast %cst_159 : f32 to vector<1x1xf32>
    %748 = arith.mulf %746, %747 : vector<1x1xf32>
    %749 = vector.shape_cast %748 : vector<1x1xf32> to vector<1x1xf32>
    %750 = vector.broadcast %749 : vector<1x1xf32> to vector<4x1xf32>
    %751 = vector.extract_strided_slice %740 {offsets = [4, 0], sizes = [4, 1], strides = [1, 1]} : vector<32x1xf32> to vector<4x1xf32>
    %752 = vector.shape_cast %751 : vector<4x1xf32> to vector<1x4x1xf32>
    %cst_160 = arith.constant dense<0.000000e+00> : vector<1xf32>
    %753 = vector.multi_reduction <add>, %752, %cst_160 [1, 2] : vector<1x4x1xf32> to vector<1xf32>
    %754 = vector.shape_cast %753 : vector<1xf32> to vector<1x1x1xf32>
    %755 = vector.extract %754[0, 0, 0] : f32 from vector<1x1x1xf32>
    %756 = vector.broadcast %755 : f32 to vector<1x1xf32>
    %cst_161 = arith.constant 9.765625E-4 : f32
    %757 = vector.broadcast %cst_161 : f32 to vector<1x1xf32>
    %758 = arith.mulf %756, %757 : vector<1x1xf32>
    %759 = vector.shape_cast %758 : vector<1x1xf32> to vector<1x1xf32>
    %760 = vector.broadcast %759 : vector<1x1xf32> to vector<4x1xf32>
    %761 = vector.extract_strided_slice %740 {offsets = [8, 0], sizes = [4, 1], strides = [1, 1]} : vector<32x1xf32> to vector<4x1xf32>
    %762 = vector.shape_cast %761 : vector<4x1xf32> to vector<1x4x1xf32>
    %cst_162 = arith.constant dense<0.000000e+00> : vector<1xf32>
    %763 = vector.multi_reduction <add>, %762, %cst_162 [1, 2] : vector<1x4x1xf32> to vector<1xf32>
    %764 = vector.shape_cast %763 : vector<1xf32> to vector<1x1x1xf32>
    %765 = vector.extract %764[0, 0, 0] : f32 from vector<1x1x1xf32>
    %766 = vector.broadcast %765 : f32 to vector<1x1xf32>
    %cst_163 = arith.constant 9.765625E-4 : f32
    %767 = vector.broadcast %cst_163 : f32 to vector<1x1xf32>
    %768 = arith.mulf %766, %767 : vector<1x1xf32>
    %769 = vector.shape_cast %768 : vector<1x1xf32> to vector<1x1xf32>
    %770 = vector.broadcast %769 : vector<1x1xf32> to vector<4x1xf32>
    %771 = vector.extract_strided_slice %740 {offsets = [12, 0], sizes = [4, 1], strides = [1, 1]} : vector<32x1xf32> to vector<4x1xf32>
    %772 = vector.shape_cast %771 : vector<4x1xf32> to vector<1x4x1xf32>
    %cst_164 = arith.constant dense<0.000000e+00> : vector<1xf32>
    %773 = vector.multi_reduction <add>, %772, %cst_164 [1, 2] : vector<1x4x1xf32> to vector<1xf32>
    %774 = vector.shape_cast %773 : vector<1xf32> to vector<1x1x1xf32>
    %775 = vector.extract %774[0, 0, 0] : f32 from vector<1x1x1xf32>
    %776 = vector.broadcast %775 : f32 to vector<1x1xf32>
    %cst_165 = arith.constant 9.765625E-4 : f32
    %777 = vector.broadcast %cst_165 : f32 to vector<1x1xf32>
    %778 = arith.mulf %776, %777 : vector<1x1xf32>
    %779 = vector.shape_cast %778 : vector<1x1xf32> to vector<1x1xf32>
    %780 = vector.broadcast %779 : vector<1x1xf32> to vector<4x1xf32>
    %781 = vector.extract_strided_slice %740 {offsets = [16, 0], sizes = [4, 1], strides = [1, 1]} : vector<32x1xf32> to vector<4x1xf32>
    %782 = vector.shape_cast %781 : vector<4x1xf32> to vector<1x4x1xf32>
    %cst_166 = arith.constant dense<0.000000e+00> : vector<1xf32>
    %783 = vector.multi_reduction <add>, %782, %cst_166 [1, 2] : vector<1x4x1xf32> to vector<1xf32>
    %784 = vector.shape_cast %783 : vector<1xf32> to vector<1x1x1xf32>
    %785 = vector.extract %784[0, 0, 0] : f32 from vector<1x1x1xf32>
    %786 = vector.broadcast %785 : f32 to vector<1x1xf32>
    %cst_167 = arith.constant 9.765625E-4 : f32
    %787 = vector.broadcast %cst_167 : f32 to vector<1x1xf32>
    %788 = arith.mulf %786, %787 : vector<1x1xf32>
    %789 = vector.shape_cast %788 : vector<1x1xf32> to vector<1x1xf32>
    %790 = vector.broadcast %789 : vector<1x1xf32> to vector<4x1xf32>
    %791 = vector.extract_strided_slice %740 {offsets = [20, 0], sizes = [4, 1], strides = [1, 1]} : vector<32x1xf32> to vector<4x1xf32>
    %792 = vector.shape_cast %791 : vector<4x1xf32> to vector<1x4x1xf32>
    %cst_168 = arith.constant dense<0.000000e+00> : vector<1xf32>
    %793 = vector.multi_reduction <add>, %792, %cst_168 [1, 2] : vector<1x4x1xf32> to vector<1xf32>
    %794 = vector.shape_cast %793 : vector<1xf32> to vector<1x1x1xf32>
    %795 = vector.extract %794[0, 0, 0] : f32 from vector<1x1x1xf32>
    %796 = vector.broadcast %795 : f32 to vector<1x1xf32>
    %cst_169 = arith.constant 9.765625E-4 : f32
    %797 = vector.broadcast %cst_169 : f32 to vector<1x1xf32>
    %798 = arith.mulf %796, %797 : vector<1x1xf32>
    %799 = vector.shape_cast %798 : vector<1x1xf32> to vector<1x1xf32>
    %800 = vector.broadcast %799 : vector<1x1xf32> to vector<4x1xf32>
    %801 = vector.extract_strided_slice %740 {offsets = [24, 0], sizes = [4, 1], strides = [1, 1]} : vector<32x1xf32> to vector<4x1xf32>
    %802 = vector.shape_cast %801 : vector<4x1xf32> to vector<1x4x1xf32>
    %cst_170 = arith.constant dense<0.000000e+00> : vector<1xf32>
    %803 = vector.multi_reduction <add>, %802, %cst_170 [1, 2] : vector<1x4x1xf32> to vector<1xf32>
    %804 = vector.shape_cast %803 : vector<1xf32> to vector<1x1x1xf32>
    %805 = vector.extract %804[0, 0, 0] : f32 from vector<1x1x1xf32>
    %806 = vector.broadcast %805 : f32 to vector<1x1xf32>
    %cst_171 = arith.constant 9.765625E-4 : f32
    %807 = vector.broadcast %cst_171 : f32 to vector<1x1xf32>
    %808 = arith.mulf %806, %807 : vector<1x1xf32>
    %809 = vector.shape_cast %808 : vector<1x1xf32> to vector<1x1xf32>
    %810 = vector.broadcast %809 : vector<1x1xf32> to vector<4x1xf32>
    %811 = vector.extract_strided_slice %740 {offsets = [28, 0], sizes = [4, 1], strides = [1, 1]} : vector<32x1xf32> to vector<4x1xf32>
    %812 = vector.shape_cast %811 : vector<4x1xf32> to vector<1x4x1xf32>
    %cst_172 = arith.constant dense<0.000000e+00> : vector<1xf32>
    %813 = vector.multi_reduction <add>, %812, %cst_172 [1, 2] : vector<1x4x1xf32> to vector<1xf32>
    %814 = vector.shape_cast %813 : vector<1xf32> to vector<1x1x1xf32>
    %815 = vector.extract %814[0, 0, 0] : f32 from vector<1x1x1xf32>
    %816 = vector.broadcast %815 : f32 to vector<1x1xf32>
    %cst_173 = arith.constant 9.765625E-4 : f32
    %817 = vector.broadcast %cst_173 : f32 to vector<1x1xf32>
    %818 = arith.mulf %816, %817 : vector<1x1xf32>
    %819 = vector.shape_cast %818 : vector<1x1xf32> to vector<1x1xf32>
    %820 = vector.broadcast %819 : vector<1x1xf32> to vector<4x1xf32>
    %821 = tpu.concatenate %750, %760, %770, %780, %790, %800, %810, %820 in 0 : vector<4x1xf32>, vector<4x1xf32>, vector<4x1xf32>, vector<4x1xf32>, vector<4x1xf32>, vector<4x1xf32>, vector<4x1xf32>, vector<4x1xf32> -> vector<32x1xf32>
    %822 = vector.broadcast %821 : vector<32x1xf32> to vector<32x256xf32>
    %823 = arith.subf %528, %822 : vector<32x256xf32>
    %824 = arith.mulf %823, %823 : vector<32x256xf32>
    %cst_174 = arith.constant dense<0.000000e+00> : vector<32xf32>
    %825 = vector.multi_reduction <add>, %824, %cst_174 [1] : vector<32x256xf32> to vector<32xf32>
    %826 = vector.shape_cast %825 : vector<32xf32> to vector<32x1xf32>
    %827 = vector.extract_strided_slice %826 {offsets = [0, 0], sizes = [4, 1], strides = [1, 1]} : vector<32x1xf32> to vector<4x1xf32>
    %828 = vector.shape_cast %827 : vector<4x1xf32> to vector<1x4x1xf32>
    %cst_175 = arith.constant dense<0.000000e+00> : vector<1xf32>
    %829 = vector.multi_reduction <add>, %828, %cst_175 [1, 2] : vector<1x4x1xf32> to vector<1xf32>
    %830 = vector.shape_cast %829 : vector<1xf32> to vector<1x1x1xf32>
    %831 = vector.extract %830[0, 0, 0] : f32 from vector<1x1x1xf32>
    %832 = vector.broadcast %831 : f32 to vector<1x1xf32>
    %cst_176 = arith.constant 9.765625E-4 : f32
    %833 = vector.broadcast %cst_176 : f32 to vector<1x1xf32>
    %834 = arith.mulf %832, %833 : vector<1x1xf32>
    %cst_177 = arith.constant 9.99999974E-6 : f32
    %835 = vector.broadcast %cst_177 : f32 to vector<1x1xf32>
    %836 = arith.addf %834, %835 : vector<1x1xf32>
    %837 = math.rsqrt %836 : vector<1x1xf32>
    %838 = vector.shape_cast %837 : vector<1x1xf32> to vector<1x1xf32>
    %839 = vector.broadcast %838 : vector<1x1xf32> to vector<4x1xf32>
    %840 = vector.extract_strided_slice %826 {offsets = [4, 0], sizes = [4, 1], strides = [1, 1]} : vector<32x1xf32> to vector<4x1xf32>
    %841 = vector.shape_cast %840 : vector<4x1xf32> to vector<1x4x1xf32>
    %cst_178 = arith.constant dense<0.000000e+00> : vector<1xf32>
    %842 = vector.multi_reduction <add>, %841, %cst_178 [1, 2] : vector<1x4x1xf32> to vector<1xf32>
    %843 = vector.shape_cast %842 : vector<1xf32> to vector<1x1x1xf32>
    %844 = vector.extract %843[0, 0, 0] : f32 from vector<1x1x1xf32>
    %845 = vector.broadcast %844 : f32 to vector<1x1xf32>
    %cst_179 = arith.constant 9.765625E-4 : f32
    %846 = vector.broadcast %cst_179 : f32 to vector<1x1xf32>
    %847 = arith.mulf %845, %846 : vector<1x1xf32>
    %cst_180 = arith.constant 9.99999974E-6 : f32
    %848 = vector.broadcast %cst_180 : f32 to vector<1x1xf32>
    %849 = arith.addf %847, %848 : vector<1x1xf32>
    %850 = math.rsqrt %849 : vector<1x1xf32>
    %851 = vector.shape_cast %850 : vector<1x1xf32> to vector<1x1xf32>
    %852 = vector.broadcast %851 : vector<1x1xf32> to vector<4x1xf32>
    %853 = vector.extract_strided_slice %826 {offsets = [8, 0], sizes = [4, 1], strides = [1, 1]} : vector<32x1xf32> to vector<4x1xf32>
    %854 = vector.shape_cast %853 : vector<4x1xf32> to vector<1x4x1xf32>
    %cst_181 = arith.constant dense<0.000000e+00> : vector<1xf32>
    %855 = vector.multi_reduction <add>, %854, %cst_181 [1, 2] : vector<1x4x1xf32> to vector<1xf32>
    %856 = vector.shape_cast %855 : vector<1xf32> to vector<1x1x1xf32>
    %857 = vector.extract %856[0, 0, 0] : f32 from vector<1x1x1xf32>
    %858 = vector.broadcast %857 : f32 to vector<1x1xf32>
    %cst_182 = arith.constant 9.765625E-4 : f32
    %859 = vector.broadcast %cst_182 : f32 to vector<1x1xf32>
    %860 = arith.mulf %858, %859 : vector<1x1xf32>
    %cst_183 = arith.constant 9.99999974E-6 : f32
    %861 = vector.broadcast %cst_183 : f32 to vector<1x1xf32>
    %862 = arith.addf %860, %861 : vector<1x1xf32>
    %863 = math.rsqrt %862 : vector<1x1xf32>
    %864 = vector.shape_cast %863 : vector<1x1xf32> to vector<1x1xf32>
    %865 = vector.broadcast %864 : vector<1x1xf32> to vector<4x1xf32>
    %866 = vector.extract_strided_slice %826 {offsets = [12, 0], sizes = [4, 1], strides = [1, 1]} : vector<32x1xf32> to vector<4x1xf32>
    %867 = vector.shape_cast %866 : vector<4x1xf32> to vector<1x4x1xf32>
    %cst_184 = arith.constant dense<0.000000e+00> : vector<1xf32>
    %868 = vector.multi_reduction <add>, %867, %cst_184 [1, 2] : vector<1x4x1xf32> to vector<1xf32>
    %869 = vector.shape_cast %868 : vector<1xf32> to vector<1x1x1xf32>
    %870 = vector.extract %869[0, 0, 0] : f32 from vector<1x1x1xf32>
    %871 = vector.broadcast %870 : f32 to vector<1x1xf32>
    %cst_185 = arith.constant 9.765625E-4 : f32
    %872 = vector.broadcast %cst_185 : f32 to vector<1x1xf32>
    %873 = arith.mulf %871, %872 : vector<1x1xf32>
    %cst_186 = arith.constant 9.99999974E-6 : f32
    %874 = vector.broadcast %cst_186 : f32 to vector<1x1xf32>
    %875 = arith.addf %873, %874 : vector<1x1xf32>
    %876 = math.rsqrt %875 : vector<1x1xf32>
    %877 = vector.shape_cast %876 : vector<1x1xf32> to vector<1x1xf32>
    %878 = vector.broadcast %877 : vector<1x1xf32> to vector<4x1xf32>
    %879 = vector.extract_strided_slice %826 {offsets = [16, 0], sizes = [4, 1], strides = [1, 1]} : vector<32x1xf32> to vector<4x1xf32>
    %880 = vector.shape_cast %879 : vector<4x1xf32> to vector<1x4x1xf32>
    %cst_187 = arith.constant dense<0.000000e+00> : vector<1xf32>
    %881 = vector.multi_reduction <add>, %880, %cst_187 [1, 2] : vector<1x4x1xf32> to vector<1xf32>
    %882 = vector.shape_cast %881 : vector<1xf32> to vector<1x1x1xf32>
    %883 = vector.extract %882[0, 0, 0] : f32 from vector<1x1x1xf32>
    %884 = vector.broadcast %883 : f32 to vector<1x1xf32>
    %cst_188 = arith.constant 9.765625E-4 : f32
    %885 = vector.broadcast %cst_188 : f32 to vector<1x1xf32>
    %886 = arith.mulf %884, %885 : vector<1x1xf32>
    %cst_189 = arith.constant 9.99999974E-6 : f32
    %887 = vector.broadcast %cst_189 : f32 to vector<1x1xf32>
    %888 = arith.addf %886, %887 : vector<1x1xf32>
    %889 = math.rsqrt %888 : vector<1x1xf32>
    %890 = vector.shape_cast %889 : vector<1x1xf32> to vector<1x1xf32>
    %891 = vector.broadcast %890 : vector<1x1xf32> to vector<4x1xf32>
    %892 = vector.extract_strided_slice %826 {offsets = [20, 0], sizes = [4, 1], strides = [1, 1]} : vector<32x1xf32> to vector<4x1xf32>
    %893 = vector.shape_cast %892 : vector<4x1xf32> to vector<1x4x1xf32>
    %cst_190 = arith.constant dense<0.000000e+00> : vector<1xf32>
    %894 = vector.multi_reduction <add>, %893, %cst_190 [1, 2] : vector<1x4x1xf32> to vector<1xf32>
    %895 = vector.shape_cast %894 : vector<1xf32> to vector<1x1x1xf32>
    %896 = vector.extract %895[0, 0, 0] : f32 from vector<1x1x1xf32>
    %897 = vector.broadcast %896 : f32 to vector<1x1xf32>
    %cst_191 = arith.constant 9.765625E-4 : f32
    %898 = vector.broadcast %cst_191 : f32 to vector<1x1xf32>
    %899 = arith.mulf %897, %898 : vector<1x1xf32>
    %cst_192 = arith.constant 9.99999974E-6 : f32
    %900 = vector.broadcast %cst_192 : f32 to vector<1x1xf32>
    %901 = arith.addf %899, %900 : vector<1x1xf32>
    %902 = math.rsqrt %901 : vector<1x1xf32>
    %903 = vector.shape_cast %902 : vector<1x1xf32> to vector<1x1xf32>
    %904 = vector.broadcast %903 : vector<1x1xf32> to vector<4x1xf32>
    %905 = vector.extract_strided_slice %826 {offsets = [24, 0], sizes = [4, 1], strides = [1, 1]} : vector<32x1xf32> to vector<4x1xf32>
    %906 = vector.shape_cast %905 : vector<4x1xf32> to vector<1x4x1xf32>
    %cst_193 = arith.constant dense<0.000000e+00> : vector<1xf32>
    %907 = vector.multi_reduction <add>, %906, %cst_193 [1, 2] : vector<1x4x1xf32> to vector<1xf32>
    %908 = vector.shape_cast %907 : vector<1xf32> to vector<1x1x1xf32>
    %909 = vector.extract %908[0, 0, 0] : f32 from vector<1x1x1xf32>
    %910 = vector.broadcast %909 : f32 to vector<1x1xf32>
    %cst_194 = arith.constant 9.765625E-4 : f32
    %911 = vector.broadcast %cst_194 : f32 to vector<1x1xf32>
    %912 = arith.mulf %910, %911 : vector<1x1xf32>
    %cst_195 = arith.constant 9.99999974E-6 : f32
    %913 = vector.broadcast %cst_195 : f32 to vector<1x1xf32>
    %914 = arith.addf %912, %913 : vector<1x1xf32>
    %915 = math.rsqrt %914 : vector<1x1xf32>
    %916 = vector.shape_cast %915 : vector<1x1xf32> to vector<1x1xf32>
    %917 = vector.broadcast %916 : vector<1x1xf32> to vector<4x1xf32>
    %918 = vector.extract_strided_slice %826 {offsets = [28, 0], sizes = [4, 1], strides = [1, 1]} : vector<32x1xf32> to vector<4x1xf32>
    %919 = vector.shape_cast %918 : vector<4x1xf32> to vector<1x4x1xf32>
    %cst_196 = arith.constant dense<0.000000e+00> : vector<1xf32>
    %920 = vector.multi_reduction <add>, %919, %cst_196 [1, 2] : vector<1x4x1xf32> to vector<1xf32>
    %921 = vector.shape_cast %920 : vector<1xf32> to vector<1x1x1xf32>
    %922 = vector.extract %921[0, 0, 0] : f32 from vector<1x1x1xf32>
    %923 = vector.broadcast %922 : f32 to vector<1x1xf32>
    %cst_197 = arith.constant 9.765625E-4 : f32
    %924 = vector.broadcast %cst_197 : f32 to vector<1x1xf32>
    %925 = arith.mulf %923, %924 : vector<1x1xf32>
    %cst_198 = arith.constant 9.99999974E-6 : f32
    %926 = vector.broadcast %cst_198 : f32 to vector<1x1xf32>
    %927 = arith.addf %925, %926 : vector<1x1xf32>
    %928 = math.rsqrt %927 : vector<1x1xf32>
    %929 = vector.shape_cast %928 : vector<1x1xf32> to vector<1x1xf32>
    %930 = vector.broadcast %929 : vector<1x1xf32> to vector<4x1xf32>
    %931 = tpu.concatenate %839, %852, %865, %878, %891, %904, %917, %930 in 0 : vector<4x1xf32>, vector<4x1xf32>, vector<4x1xf32>, vector<4x1xf32>, vector<4x1xf32>, vector<4x1xf32>, vector<4x1xf32>, vector<4x1xf32> -> vector<32x1xf32>
    %932 = vector.broadcast %931 : vector<32x1xf32> to vector<32x256xf32>
    %933 = arith.mulf %823, %932 : vector<32x256xf32>
    %934 = vector.broadcast %737 : vector<32x1xf32> to vector<32x256xf32>
    %935 = arith.mulf %933, %934 : vector<32x256xf32>
    %936 = vector.broadcast %738 : vector<32x1xf32> to vector<32x256xf32>
    %937 = arith.addf %935, %936 : vector<32x256xf32>
    %cst_199 = arith.constant 0.000000e+00 : f32
    %938 = vector.broadcast %cst_199 : f32 to vector<32x256xf32>
    %939 = arith.maximumf %937, %938 : vector<32x256xf32>
    %940 = math.tanh %939 : vector<32x256xf32>
    %c0_200 = arith.constant 0 : index
    %c0_201 = arith.constant 0 : index
    %c0_202 = arith.constant 0 : index
    %941 = vector.load %arg15[%c0_200, %c0_201, %c0_202] : memref<1x32x256xf32, #tpu.memory_space<vmem>>, vector<1x32x256xf32>
    %942 = vector.shape_cast %941 : vector<1x32x256xf32> to vector<32x256xf32>
    %943 = arith.subf %940, %942 : vector<32x256xf32>
    %944 = arith.mulf %736, %943 : vector<32x256xf32>
    %945 = arith.addf %942, %944 : vector<32x256xf32>
    %c0_203 = arith.constant 0 : index
    %c0_204 = arith.constant 0 : index
    %c0_205 = arith.constant 0 : index
    %946 = vector.load %arg16[%c0_203, %c0_204, %c0_205] : memref<1x32x256xf32, #tpu.memory_space<vmem>>, vector<1x32x256xf32>
    %947 = vector.shape_cast %946 : vector<1x32x256xf32> to vector<32x256xf32>
    %948 = vector.shape_cast %945 : vector<32x256xf32> to vector<1x32x256xf32>
    tpu.vector_store %arg16[%c0_203, %c0_204, %c0_205], %948 {strides = array<i32>} : memref<1x32x256xf32, #tpu.memory_space<vmem>>, vector<1x32x256xf32>,
    return
  }
  func.func @transform_0(%arg0: i32) -> (i32, i32, i32) {
    %c0_i32 = arith.constant 0 : i32
    %c0_i32_0 = arith.constant 0 : i32
    %c0_i32_1 = arith.constant 0 : i32
    return %arg0, %c0_i32, %c0_i32_0 : i32, i32, i32
  }
  func.func @transform_1(%arg0: i32) -> (i32, i32) {
    %c0_i32 = arith.constant 0 : i32
    %c0_i32_0 = arith.constant 0 : i32
    %c0_i32_1 = arith.constant 0 : i32
    return %c0_i32, %c0_i32_0 : i32, i32
  }
  func.func @transform_2(%arg0: i32) -> (i32, i32) {
    %c0_i32 = arith.constant 0 : i32
    %c0_i32_0 = arith.constant 0 : i32
    %c0_i32_1 = arith.constant 0 : i32
    return %c0_i32, %c0_i32_0 : i32, i32
  }
  func.func @transform_3(%arg0: i32) -> (i32, i32) {
    %c0_i32 = arith.constant 0 : i32
    %c0_i32_0 = arith.constant 0 : i32
    %c0_i32_1 = arith.constant 0 : i32
    return %c0_i32, %c0_i32_0 : i32, i32
  }
  func.func @transform_4(%arg0: i32) -> (i32, i32) {
    %c0_i32 = arith.constant 0 : i32
    %c0_i32_0 = arith.constant 0 : i32
    %c0_i32_1 = arith.constant 0 : i32
    return %c0_i32, %c0_i32_0 : i32, i32
  }
  func.func @transform_5(%arg0: i32) -> (i32, i32) {
    %c0_i32 = arith.constant 0 : i32
    %c0_i32_0 = arith.constant 0 : i32
    %c0_i32_1 = arith.constant 0 : i32
    return %c0_i32, %c0_i32_0 : i32, i32
  }
  func.func @transform_6(%arg0: i32) -> (i32, i32) {
    %c0_i32 = arith.constant 0 : i32
    %c0_i32_0 = arith.constant 0 : i32
    %c0_i32_1 = arith.constant 0 : i32
    return %c0_i32, %c0_i32_0 : i32, i32
  }
  func.func @transform_7(%arg0: i32) -> (i32, i32) {
    %c0_i32 = arith.constant 0 : i32
    %c0_i32_0 = arith.constant 0 : i32
    %c0_i32_1 = arith.constant 0 : i32
    return %c0_i32, %c0_i32_0 : i32, i32
  }
  func.func @transform_8(%arg0: i32) -> (i32, i32) {
    %c0_i32 = arith.constant 0 : i32
    %c0_i32_0 = arith.constant 0 : i32
    %c0_i32_1 = arith.constant 0 : i32
    return %c0_i32, %c0_i32_0 : i32, i32
  }
  func.func @transform_9(%arg0: i32) -> (i32, i32) {
    %c0_i32 = arith.constant 0 : i32
    %c0_i32_0 = arith.constant 0 : i32
    %c0_i32_1 = arith.constant 0 : i32
    return %c0_i32, %c0_i32_0 : i32, i32
  }
  func.func @transform_10(%arg0: i32) -> (i32, i32) {
    %c0_i32 = arith.constant 0 : i32
    %c0_i32_0 = arith.constant 0 : i32
    %c0_i32_1 = arith.constant 0 : i32
    return %c0_i32, %c0_i32_0 : i32, i32
  }
  func.func @transform_11(%arg0: i32) -> (i32, i32) {
    %c0_i32 = arith.constant 0 : i32
    %c0_i32_0 = arith.constant 0 : i32
    %c0_i32_1 = arith.constant 0 : i32
    return %c0_i32, %c0_i32_0 : i32, i32
  }
  func.func @transform_12(%arg0: i32) -> (i32, i32) {
    %c0_i32 = arith.constant 0 : i32
    %c0_i32_0 = arith.constant 0 : i32
    %c0_i32_1 = arith.constant 0 : i32
    return %c0_i32, %c0_i32_0 : i32, i32
  }
  func.func @transform_13(%arg0: i32) -> (i32, i32) {
    %c0_i32 = arith.constant 0 : i32
    %c0_i32_0 = arith.constant 0 : i32
    %c0_i32_1 = arith.constant 0 : i32
    return %c0_i32, %c0_i32_0 : i32, i32
  }
  func.func @transform_14(%arg0: i32) -> (i32, i32, i32) {
    %c0_i32 = arith.constant 0 : i32
    %c0_i32_0 = arith.constant 0 : i32
    %c0_i32_1 = arith.constant 0 : i32
    return %arg0, %c0_i32, %c0_i32_0 : i32, i32, i32
  }
  func.func @transform_15(%arg0: i32) -> (i32, i32, i32) {
    %c0_i32 = arith.constant 0 : i32
    %c0_i32_0 = arith.constant 0 : i32
    %c0_i32_1 = arith.constant 0 : i32
    return %arg0, %c0_i32, %c0_i32_0 : i32, i32, i32
  }
}

</mosaic_0001>

<llo_original>
// kernel: conv_sru_forward.1
$region0: #{conv_sru_forward.1}
  #allocation0 [shape = 'u32[]', space=smem, size = 0x4, offset = 0x4, fixed_abs, tag = 'smem constant byte address 0x4 - core index']
  #allocation1 [shape = 'u32[72,128]{1,0:T(1,128)}', space=vmem, size = 0x9000, scoped, tag = 'internal scratch']
  %s0 = inlined_call_operand.vmem [shape: bf16[2,4,256], index: 0, kind: input, shape index: {}]
  %s1 = inlined_call_operand.vmem [shape: bf16[9,256], index: 1, kind: input, shape index: {}]
  %s2 = inlined_call_operand.vmem [shape: bf16[64,36], index: 2, kind: input, shape index: {}]
  %s3 = inlined_call_operand.vmem [shape: f32[64,1], index: 3, kind: input, shape index: {}]
  %s4 = inlined_call_operand.vmem [shape: f32[64,1], index: 4, kind: input, shape index: {}]
  %s5 = inlined_call_operand.vmem [shape: f32[64,1], index: 5, kind: input, shape index: {}]
  %s6 = inlined_call_operand.vmem [shape: bf16[32,288], index: 6, kind: input, shape index: {}]
  %s7 = inlined_call_operand.vmem [shape: f32[32,1], index: 7, kind: input, shape index: {}]
  %s8 = inlined_call_operand.vmem [shape: f32[32,1], index: 8, kind: input, shape index: {}]
  %s9 = inlined_call_operand.vmem [shape: f32[32,1], index: 9, kind: input, shape index: {}]
  %s10 = inlined_call_operand.vmem [shape: bf16[32,288], index: 10, kind: input, shape index: {}]
  %s11 = inlined_call_operand.vmem [shape: f32[32,1], index: 11, kind: input, shape index: {}]
  %s12 = inlined_call_operand.vmem [shape: f32[32,1], index: 12, kind: input, shape index: {}]
  %s13 = inlined_call_operand.vmem [shape: f32[32,1], index: 13, kind: input, shape index: {}]
  %s14 = inlined_call_operand.vmem [shape: f32[2,32,256], index: 14, kind: input, shape index: {}]
  %s15 = inlined_call_operand.vmem [shape: f32[2,32,256], index: 15, kind: output, shape index: {}]
  %s16 = sld [smem:[#allocation0]]
  $region93: #{conv_sru_forward.1} parent=0
    _
  %s18 = ssub.s32 1, %s16
  %s19 = scalar_select 0, %s18, %s16
  loop: start=0, step=1, limit=4
  $region2: #{conv_sru_forward.1} parent=0 // loop_pre_header
    _
  $region3: #{conv_sru_forward.1} parent=0 // loop_header
    %s21 = sphi 0, %s25
    %p22 = scmp.ge.s32.totalorder %s21, 4
    %s31 = sphi 0, %s33
    %s34 = sphi 0, %s31
    %s35 = sphi 0, %s34
    %s51 = sphi 0, %s35
    %s55 = sphi 0, %s55
    %s57 = sphi 0, %s55
    %s58 = sphi 0, %s57
    %s72 = sphi 0, %s58
    %s76 = sphi 0, %s76
    %s78 = sphi 0, %s76
    %s79 = sphi 0, %s78
    %s93 = sphi 0, %s79
    %s97 = sphi 0, %s97
    %s99 = sphi 0, %s97
    %s100 = sphi 0, %s99
    %s114 = sphi 0, %s100
    %s118 = sphi 0, %s118
    %s120 = sphi 0, %s118
    %s121 = sphi 0, %s120
    %s135 = sphi 0, %s121
    %s139 = sphi 0, %s139
    %s141 = sphi 0, %s139
    %s142 = sphi 0, %s141
    %s156 = sphi 0, %s142
    %s160 = sphi 0, %s160
    %s162 = sphi 0, %s160
    %s163 = sphi 0, %s162
    %s177 = sphi 0, %s163
    %s181 = sphi 0, %s181
    %s183 = sphi 0, %s181
    %s184 = sphi 0, %s183
    %s198 = sphi 0, %s184
    %s202 = sphi 0, %s202
    %s204 = sphi 0, %s202
    %s205 = sphi 0, %s204
    %s219 = sphi 0, %s205
    %s223 = sphi 0, %s223
    %s225 = sphi 0, %s223
    %s226 = sphi 0, %s225
    %s240 = sphi 0, %s226
    %s244 = sphi 0, %s244
    %s246 = sphi 0, %s244
    %s247 = sphi 0, %s246
    %s261 = sphi 0, %s247
    %s265 = sphi 0, %s265
    %s267 = sphi 0, %s265
    %s268 = sphi 0, %s267
    %s282 = sphi 0, %s268
    %s286 = sphi 0, %s286
    %s288 = sphi 0, %s286
    %s289 = sphi 0, %s288
    %s303 = sphi 0, %s289
    %s307 = sphi 0, %s307
    %s309 = sphi 0, %s307
    %s310 = sphi 0, %s309
    %s324 = sphi 0, %s310
    %s330 = sphi 0, %s332
    %s333 = sphi 0, %s330
    %s334 = sphi 0, %s333
    %s350 = sphi 0, %s334
    %s356 = sphi 0, %s358
    %s359 = sphi 0, %s356
    %s360 = sphi 0, %s359
    %s376 = sphi 0, %s360
  $region4: #{conv_sru_forward.1} parent=0 // loop_header_branch
    %24 = sbr.rel (%p22) target = $region8
  $region5: #{conv_sru_forward.1} parent=0 // loop_body
    %s26 = ssub.s32 %s21, 1
    %s27 = ssub.s32 %s21, 2
    %s28 = sadd.s32 %s21, 1
    %s29 = ssub.s32 %s21, %s28
    %p30 = scmp.eq.s32.totalorder %s29, 0
    %s32 = sadd.s32 %s31, 1
    %s33 = scalar_select %p30, %s31, %s32
    %p36 = pneg %p30
    %p37 = scmp.eq.s32.totalorder %s21, 1
    %p38 = por %p36, %p37
    %p39 = scmp.ne.s32.totalorder %s31, %s34
    %p40 = scmp.eq.s32.totalorder %s21, 0
    %p41 = por %p39, %p40
    %p42 = scmp.ne.s32.totalorder %s31, %s34
    %p43 = scmp.eq.s32.totalorder %s26, 1
    %p44 = por %p42, %p43
    %p45 = scmp.ne.s32.totalorder %s34, %s35
    %p46 = scmp.eq.s32.totalorder %s26, 0
    %p47 = por %p45, %p46
    %p48 = scmp.ne.s32.totalorder %s34, %s35
    %p49 = scmp.eq.s32.totalorder %s27, 1
    %p50 = por %p48, %p49
    %p52 = scmp.ne.s32.totalorder %s35, %s51
    %p53 = scmp.eq.s32.totalorder %s27, 0
    %p54 = por %p52, %p53
    %s56 = sadd.s32 %s55, 1
    %p59 = scmp.eq.s32.totalorder %s21, 1
    %p60 = scmp.ne.s32.totalorder %s55, %s57
    %p61 = scmp.eq.s32.totalorder %s21, 0
    %p62 = por %p60, %p61
    %p63 = scmp.ne.s32.totalorder %s55, %s57
    %p64 = scmp.eq.s32.totalorder %s26, 1
    %p65 = por %p63, %p64
    %p66 = scmp.ne.s32.totalorder %s57, %s58
    %p67 = scmp.eq.s32.totalorder %s26, 0
    %p68 = por %p66, %p67
    %p69 = scmp.ne.s32.totalorder %s57, %s58
    %p70 = scmp.eq.s32.totalorder %s27, 1
    %p71 = por %p69, %p70
    %p73 = scmp.ne.s32.totalorder %s58, %s72
    %p74 = scmp.eq.s32.totalorder %s27, 0
    %p75 = por %p73, %p74
    %s77 = sadd.s32 %s76, 1
    %p80 = scmp.eq.s32.totalorder %s21, 1
    %p81 = scmp.ne.s32.totalorder %s76, %s78
    %p82 = scmp.eq.s32.totalorder %s21, 0
    %p83 = por %p81, %p82
    %p84 = scmp.ne.s32.totalorder %s76, %s78
    %p85 = scmp.eq.s32.totalorder %s26, 1
    %p86 = por %p84, %p85
    %p87 = scmp.ne.s32.totalorder %s78, %s79
    %p88 = scmp.eq.s32.totalorder %s26, 0
    %p89 = por %p87, %p88
    %p90 = scmp.ne.s32.totalorder %s78, %s79
    %p91 = scmp.eq.s32.totalorder %s27, 1
    %p92 = por %p90, %p91
    %p94 = scmp.ne.s32.totalorder %s79, %s93
    %p95 = scmp.eq.s32.totalorder %s27, 0
    %p96 = por %p94, %p95
    %s98 = sadd.s32 %s97, 1
    %p101 = scmp.eq.s32.totalorder %s21, 1
    %p102 = scmp.ne.s32.totalorder %s97, %s99
    %p103 = scmp.eq.s32.totalorder %s21, 0
    %p104 = por %p102, %p103
    %p105 = scmp.ne.s32.totalorder %s97, %s99
    %p106 = scmp.eq.s32.totalorder %s26, 1
    %p107 = por %p105, %p106
    %p108 = scmp.ne.s32.totalorder %s99, %s100
    %p109 = scmp.eq.s32.totalorder %s26, 0
    %p110 = por %p108, %p109
    %p111 = scmp.ne.s32.totalorder %s99, %s100
    %p112 = scmp.eq.s32.totalorder %s27, 1
    %p113 = por %p111, %p112
    %p115 = scmp.ne.s32.totalorder %s100, %s114
    %p116 = scmp.eq.s32.totalorder %s27, 0
    %p117 = por %p115, %p116
    %s119 = sadd.s32 %s118, 1
    %p122 = scmp.eq.s32.totalorder %s21, 1
    %p123 = scmp.ne.s32.totalorder %s118, %s120
    %p124 = scmp.eq.s32.totalorder %s21, 0
    %p125 = por %p123, %p124
    %p126 = scmp.ne.s32.totalorder %s118, %s120
    %p127 = scmp.eq.s32.totalorder %s26, 1
    %p128 = por %p126, %p127
    %p129 = scmp.ne.s32.totalorder %s120, %s121
    %p130 = scmp.eq.s32.totalorder %s26, 0
    %p131 = por %p129, %p130
    %p132 = scmp.ne.s32.totalorder %s120, %s121
    %p133 = scmp.eq.s32.totalorder %s27, 1
    %p134 = por %p132, %p133
    %p136 = scmp.ne.s32.totalorder %s121, %s135
    %p137 = scmp.eq.s32.totalorder %s27, 0
    %p138 = por %p136, %p137
    %s140 = sadd.s32 %s139, 1
    %p143 = scmp.eq.s32.totalorder %s21, 1
    %p144 = scmp.ne.s32.totalorder %s139, %s141
    %p145 = scmp.eq.s32.totalorder %s21, 0
    %p146 = por %p144, %p145
    %p147 = scmp.ne.s32.totalorder %s139, %s141
    %p148 = scmp.eq.s32.totalorder %s26, 1
    %p149 = por %p147, %p148
    %p150 = scmp.ne.s32.totalorder %s141, %s142
    %p151 = scmp.eq.s32.totalorder %s26, 0
    %p152 = por %p150, %p151
    %p153 = scmp.ne.s32.totalorder %s141, %s142
    %p154 = scmp.eq.s32.totalorder %s27, 1
    %p155 = por %p153, %p154
    %p157 = scmp.ne.s32.totalorder %s142, %s156
    %p158 = scmp.eq.s32.totalorder %s27, 0
    %p159 = por %p157, %p158
    %s161 = sadd.s32 %s160, 1
    %p164 = scmp.eq.s32.totalorder %s21, 1
    %p165 = scmp.ne.s32.totalorder %s160, %s162
    %p166 = scmp.eq.s32.totalorder %s21, 0
    %p167 = por %p165, %p166
    %p168 = scmp.ne.s32.totalorder %s160, %s162
    %p169 = scmp.eq.s32.totalorder %s26, 1
    %p170 = por %p168, %p169
    %p171 = scmp.ne.s32.totalorder %s162, %s163
    %p172 = scmp.eq.s32.totalorder %s26, 0
    %p173 = por %p171, %p172
    %p174 = scmp.ne.s32.totalorder %s162, %s163
    %p175 = scmp.eq.s32.totalorder %s27, 1
    %p176 = por %p174, %p175
    %p178 = scmp.ne.s32.totalorder %s163, %s177
    %p179 = scmp.eq.s32.totalorder %s27, 0
    %p180 = por %p178, %p179
    %s182 = sadd.s32 %s181, 1
    %p185 = scmp.eq.s32.totalorder %s21, 1
    %p186 = scmp.ne.s32.totalorder %s181, %s183
    %p187 = scmp.eq.s32.totalorder %s21, 0
    %p188 = por %p186, %p187
    %p189 = scmp.ne.s32.totalorder %s181, %s183
    %p190 = scmp.eq.s32.totalorder %s26, 1
    %p191 = por %p189, %p190
    %p192 = scmp.ne.s32.totalorder %s183, %s184
    %p193 = scmp.eq.s32.totalorder %s26, 0
    %p194 = por %p192, %p193
    %p195 = scmp.ne.s32.totalorder %s183, %s184
    %p196 = scmp.eq.s32.totalorder %s27, 1
    %p197 = por %p195, %p196
    %p199 = scmp.ne.s32.totalorder %s184, %s198
    %p200 = scmp.eq.s32.totalorder %s27, 0
    %p201 = por %p199, %p200
    %s203 = sadd.s32 %s202, 1
    %p206 = scmp.eq.s32.totalorder %s21, 1
    %p207 = scmp.ne.s32.totalorder %s202, %s204
    %p208 = scmp.eq.s32.totalorder %s21, 0
    %p209 = por %p207, %p208
    %p210 = scmp.ne.s32.totalorder %s202, %s204
    %p211 = scmp.eq.s32.totalorder %s26, 1
    %p212 = por %p210, %p211
    %p213 = scmp.ne.s32.totalorder %s204, %s205
    %p214 = scmp.eq.s32.totalorder %s26, 0
    %p215 = por %p213, %p214
    %p216 = scmp.ne.s32.totalorder %s204, %s205
    %p217 = scmp.eq.s32.totalorder %s27, 1
    %p218 = por %p216, %p217
    %p220 = scmp.ne.s32.totalorder %s205, %s219
    %p221 = scmp.eq.s32.totalorder %s27, 0
    %p222 = por %p220, %p221
    %s224 = sadd.s32 %s223, 1
    %p227 = scmp.eq.s32.totalorder %s21, 1
    %p228 = scmp.ne.s32.totalorder %s223, %s225
    %p229 = scmp.eq.s32.totalorder %s21, 0
    %p230 = por %p228, %p229
    %p231 = scmp.ne.s32.totalorder %s223, %s225
    %p232 = scmp.eq.s32.totalorder %s26, 1
    %p233 = por %p231, %p232
    %p234 = scmp.ne.s32.totalorder %s225, %s226
    %p235 = scmp.eq.s32.totalorder %s26, 0
    %p236 = por %p234, %p235
    %p237 = scmp.ne.s32.totalorder %s225, %s226
    %p238 = scmp.eq.s32.totalorder %s27, 1
    %p239 = por %p237, %p238
    %p241 = scmp.ne.s32.totalorder %s226, %s240
    %p242 = scmp.eq.s32.totalorder %s27, 0
    %p243 = por %p241, %p242
    %s245 = sadd.s32 %s244, 1
    %p248 = scmp.eq.s32.totalorder %s21, 1
    %p249 = scmp.ne.s32.totalorder %s244, %s246
    %p250 = scmp.eq.s32.totalorder %s21, 0
    %p251 = por %p249, %p250
    %p252 = scmp.ne.s32.totalorder %s244, %s246
    %p253 = scmp.eq.s32.totalorder %s26, 1
    %p254 = por %p252, %p253
    %p255 = scmp.ne.s32.totalorder %s246, %s247
    %p256 = scmp.eq.s32.totalorder %s26, 0
    %p257 = por %p255, %p256
    %p258 = scmp.ne.s32.totalorder %s246, %s247
    %p259 = scmp.eq.s32.totalorder %s27, 1
    %p260 = por %p258, %p259
    %p262 = scmp.ne.s32.totalorder %s247, %s261
    %p263 = scmp.eq.s32.totalorder %s27, 0
    %p264 = por %p262, %p263
    %s266 = sadd.s32 %s265, 1
    %p269 = scmp.eq.s32.totalorder %s21, 1
    %p270 = scmp.ne.s32.totalorder %s265, %s267
    %p271 = scmp.eq.s32.totalorder %s21, 0
    %p272 = por %p270, %p271
    %p273 = scmp.ne.s32.totalorder %s265, %s267
    %p274 = scmp.eq.s32.totalorder %s26, 1
    %p275 = por %p273, %p274
    %p276 = scmp.ne.s32.totalorder %s267, %s268
    %p277 = scmp.eq.s32.totalorder %s26, 0
    %p278 = por %p276, %p277
    %p279 = scmp.ne.s32.totalorder %s267, %s268
    %p280 = scmp.eq.s32.totalorder %s27, 1
    %p281 = por %p279, %p280
    %p283 = scmp.ne.s32.totalorder %s268, %s282
    %p284 = scmp.eq.s32.totalorder %s27, 0
    %p285 = por %p283, %p284
    %s287 = sadd.s32 %s286, 1
    %p290 = scmp.eq.s32.totalorder %s21, 1
    %p291 = scmp.ne.s32.totalorder %s286, %s288
    %p292 = scmp.eq.s32.totalorder %s21, 0
    %p293 = por %p291, %p292
    %p294 = scmp.ne.s32.totalorder %s286, %s288
    %p295 = scmp.eq.s32.totalorder %s26, 1
    %p296 = por %p294, %p295
    %p297 = scmp.ne.s32.totalorder %s288, %s289
    %p298 = scmp.eq.s32.totalorder %s26, 0
    %p299 = por %p297, %p298
    %p300 = scmp.ne.s32.totalorder %s288, %s289
    %p301 = scmp.eq.s32.totalorder %s27, 1
    %p302 = por %p300, %p301
    %p304 = scmp.ne.s32.totalorder %s289, %s303
    %p305 = scmp.eq.s32.totalorder %s27, 0
    %p306 = por %p304, %p305
    %s308 = sadd.s32 %s307, 1
    %p311 = scmp.eq.s32.totalorder %s21, 1
    %p312 = scmp.ne.s32.totalorder %s307, %s309
    %p313 = scmp.eq.s32.totalorder %s21, 0
    %p314 = por %p312, %p313
    %p315 = scmp.ne.s32.totalorder %s307, %s309
    %p316 = scmp.eq.s32.totalorder %s26, 1
    %p317 = por %p315, %p316
    %p318 = scmp.ne.s32.totalorder %s309, %s310
    %p319 = scmp.eq.s32.totalorder %s26, 0
    %p320 = por %p318, %p319
    %p321 = scmp.ne.s32.totalorder %s309, %s310
    %p322 = scmp.eq.s32.totalorder %s27, 1
    %p323 = por %p321, %p322
    %p325 = scmp.ne.s32.totalorder %s310, %s324
    %p326 = scmp.eq.s32.totalorder %s27, 0
    %p327 = por %p325, %p326
    %s328 = ssub.s32 %s21, %s28
    %p329 = scmp.eq.s32.totalorder %s328, 0
    %s331 = sadd.s32 %s330, 1
    %s332 = scalar_select %p329, %s330, %s331
    %p335 = pneg %p329
    %p336 = scmp.eq.s32.totalorder %s21, 1
    %p337 = por %p335, %p336
    %p338 = scmp.ne.s32.totalorder %s330, %s333
    %p339 = scmp.eq.s32.totalorder %s21, 0
    %p340 = por %p338, %p339
    %p341 = scmp.ne.s32.totalorder %s330, %s333
    %p342 = scmp.eq.s32.totalorder %s26, 1
    %p343 = por %p341, %p342
    %p344 = scmp.ne.s32.totalorder %s333, %s334
    %p345 = scmp.eq.s32.totalorder %s26, 0
    %p346 = por %p344, %p345
    %p347 = scmp.ne.s32.totalorder %s333, %s334
    %p348 = scmp.eq.s32.totalorder %s27, 1
    %p349 = por %p347, %p348
    %p351 = scmp.ne.s32.totalorder %s334, %s350
    %p352 = scmp.eq.s32.totalorder %s27, 0
    %p353 = por %p351, %p352
    %s354 = ssub.s32 %s21, %s28
    %p355 = scmp.eq.s32.totalorder %s354, 0
    %s357 = sadd.s32 %s356, 1
    %s358 = scalar_select %p355, %s356, %s357
    %p361 = pneg %p355
    %p362 = scmp.eq.s32.totalorder %s21, 1
    %p363 = por %p361, %p362
    %p364 = scmp.ne.s32.totalorder %s356, %s359
    %p365 = scmp.eq.s32.totalorder %s21, 0
    %p366 = por %p364, %p365
    %p367 = scmp.ne.s32.totalorder %s356, %s359
    %p368 = scmp.eq.s32.totalorder %s26, 1
    %p369 = por %p367, %p368
    %p370 = scmp.ne.s32.totalorder %s359, %s360
    %p371 = scmp.eq.s32.totalorder %s26, 0
    %p372 = por %p370, %p371
    %p373 = scmp.ne.s32.totalorder %s359, %s360
    %p374 = scmp.eq.s32.totalorder %s27, 1
    %p375 = por %p373, %p374
    %p377 = scmp.ne.s32.totalorder %s360, %s376
    %p378 = scmp.eq.s32.totalorder %s27, 0
    %p379 = por %p377, %p378
    %p380 = scmp.le.s32.totalorder 1, %s21
    %p381 = scmp.lt.s32.totalorder %s21, 3
    %p382 = pnand %p380, %p381
    %p383 = pneg %p382
    // Predicated region
    $region9: #{conv_sru_forward.1} parent=5 // pred_check
      _
    $region10: #{conv_sru_forward.1} parent=5 // pred_check_branch
      %385 = sbr.rel (%p382) target = $region12
    $region11: #{conv_sru_forward.1} parent=5 // pred_region
      %s386 = ssub.s32 %s21, 1
      // Predicated region
      $region13: #{conv_sru_forward.1} parent=11 // pred_check
        %p387 = pneg %p68
      $region14: #{conv_sru_forward.1} parent=11 // pred_check_branch
        %389 = sbr.rel (%p387) target = $region16
      $region15: #{conv_sru_forward.1} parent=11 // pred_region
        _
      $region16: #{conv_sru_forward.1} parent=11 // pred_fallthru
        _
      // Predicated region
      $region17: #{conv_sru_forward.1} parent=11 // pred_check
        %p390 = pneg %p89
      $region18: #{conv_sru_forward.1} parent=11 // pred_check_branch
        %392 = sbr.rel (%p390) target = $region20
      $region19: #{conv_sru_forward.1} parent=11 // pred_region
        _
      $region20: #{conv_sru_forward.1} parent=11 // pred_fallthru
        _
      // Predicated region
      $region21: #{conv_sru_forward.1} parent=11 // pred_check
        %p393 = pneg %p110
      $region22: #{conv_sru_forward.1} parent=11 // pred_check_branch
        %395 = sbr.rel (%p393) target = $region24
      $region23: #{conv_sru_forward.1} parent=11 // pred_region
        _
      $region24: #{conv_sru_forward.1} parent=11 // pred_fallthru
        _
      // Predicated region
      $region25: #{conv_sru_forward.1} parent=11 // pred_check
        %p396 = pneg %p131
      $region26: #{conv_sru_forward.1} parent=11 // pred_check_branch
        %398 = sbr.rel (%p396) target = $region28
      $region27: #{conv_sru_forward.1} parent=11 // pred_region
        _
      $region28: #{conv_sru_forward.1} parent=11 // pred_fallthru
        _
      // Predicated region
      $region29: #{conv_sru_forward.1} parent=11 // pred_check
        %p399 = pneg %p152
      $region30: #{conv_sru_forward.1} parent=11 // pred_check_branch
        %401 = sbr.rel (%p399) target = $region32
      $region31: #{conv_sru_forward.1} parent=11 // pred_region
        _
      $region32: #{conv_sru_forward.1} parent=11 // pred_fallthru
        _
      // Predicated region
      $region33: #{conv_sru_forward.1} parent=11 // pred_check
        %p402 = pneg %p173
      $region34: #{conv_sru_forward.1} parent=11 // pred_check_branch
        %404 = sbr.rel (%p402) target = $region36
      $region35: #{conv_sru_forward.1} parent=11 // pred_region
        _
      $region36: #{conv_sru_forward.1} parent=11 // pred_fallthru
        _
      // Predicated region
      $region37: #{conv_sru_forward.1} parent=11 // pred_check
        %p405 = pneg %p194
      $region38: #{conv_sru_forward.1} parent=11 // pred_check_branch
        %407 = sbr.rel (%p405) target = $region40
      $region39: #{conv_sru_forward.1} parent=11 // pred_region
        _
      $region40: #{conv_sru_forward.1} parent=11 // pred_fallthru
        _
      // Predicated region
      $region41: #{conv_sru_forward.1} parent=11 // pred_check
        %p408 = pneg %p215
      $region42: #{conv_sru_forward.1} parent=11 // pred_check_branch
        %410 = sbr.rel (%p408) target = $region44
      $region43: #{conv_sru_forward.1} parent=11 // pred_region
        _
      $region44: #{conv_sru_forward.1} parent=11 // pred_fallthru
        _
      // Predicated region
      $region45: #{conv_sru_forward.1} parent=11 // pred_check
        %p411 = pneg %p236
      $region46: #{conv_sru_forward.1} parent=11 // pred_check_branch
        %413 = sbr.rel (%p411) target = $region48
      $region47: #{conv_sru_forward.1} parent=11 // pred_region
        _
      $region48: #{conv_sru_forward.1} parent=11 // pred_fallthru
        _
      // Predicated region
      $region49: #{conv_sru_forward.1} parent=11 // pred_check
        %p414 = pneg %p257
      $region50: #{conv_sru_forward.1} parent=11 // pred_check_branch
        %416 = sbr.rel (%p414) target = $region52
      $region51: #{conv_sru_forward.1} parent=11 // pred_region
        _
      $region52: #{conv_sru_forward.1} parent=11 // pred_fallthru
        _
      // Predicated region
      $region53: #{conv_sru_forward.1} parent=11 // pred_check
        %p417 = pneg %p278
      $region54: #{conv_sru_forward.1} parent=11 // pred_check_branch
        %419 = sbr.rel (%p417) target = $region56
      $region55: #{conv_sru_forward.1} parent=11 // pred_region
        _
      $region56: #{conv_sru_forward.1} parent=11 // pred_fallthru
        _
      // Predicated region
      $region57: #{conv_sru_forward.1} parent=11 // pred_check
        %p420 = pneg %p299
      $region58: #{conv_sru_forward.1} parent=11 // pred_check_branch
        %422 = sbr.rel (%p420) target = $region60
      $region59: #{conv_sru_forward.1} parent=11 // pred_region
        _
      $region60: #{conv_sru_forward.1} parent=11 // pred_fallthru
        _
      // Predicated region
      $region61: #{conv_sru_forward.1} parent=11 // pred_check
        %p423 = pneg %p320
      $region62: #{conv_sru_forward.1} parent=11 // pred_check_branch
        %425 = sbr.rel (%p423) target = $region64
      $region63: #{conv_sru_forward.1} parent=11 // pred_region
        _
      $region64: #{conv_sru_forward.1} parent=11 // pred_fallthru
        _
    $region12: #{conv_sru_forward.1} parent=5 // pred_fallthru
      _
    %p426 = scmp.lt.s32.totalorder %s21, 2
    // Predicated region
    $region65: #{conv_sru_forward.1} parent=5 // pred_check
      %p427 = pneg %p426
    $region66: #{conv_sru_forward.1} parent=5 // pred_check_branch
      %429 = sbr.rel (%p427) target = $region68
    $region67: #{conv_sru_forward.1} parent=5 // pred_region
      // Predicated region
      $region69: #{conv_sru_forward.1} parent=67 // pred_check
        %p430 = pneg %p41
      $region70: #{conv_sru_forward.1} parent=67 // pred_check_branch
        %432 = sbr.rel (%p430) target = $region72
      $region71: #{conv_sru_forward.1} parent=67 // pred_region
        %p433 = scmp.lt.s32.totalorder %s21, 1
        %s434 = scalar_select %p433, %s21, 1
        %s435 = smul.addr %s434, 2
        %s436 = smul.addr %s435, 2
        %s437 = scalar_lea.vmem %s0, %s436
      $region72: #{conv_sru_forward.1} parent=67 // pred_fallthru
        _
      // Predicated region
      $region73: #{conv_sru_forward.1} parent=67 // pred_check
        %p438 = pneg %p340
      $region74: #{conv_sru_forward.1} parent=67 // pred_check_branch
        %440 = sbr.rel (%p438) target = $region76
      $region75: #{conv_sru_forward.1} parent=67 // pred_region
        %p441 = scmp.lt.s32.totalorder %s21, 1
        %s442 = scalar_select %p441, %s21, 1
        %s443 = smul.addr %s442, 8
        %s444 = smul.addr %s443, 8
        %s445 = scalar_lea.vmem %s14, %s444
      $region76: #{conv_sru_forward.1} parent=67 // pred_fallthru
        _
    $region68: #{conv_sru_forward.1} parent=5 // pred_fallthru
      _
    %p446 = scmp.le.s32.totalorder 1, %s21
    %p447 = scmp.lt.s32.totalorder %s21, 3
    %p448 = pnand %p446, %p447
    %p449 = pneg %p448
    // Predicated region
    $region77: #{conv_sru_forward.1} parent=5 // pred_check
      _
    $region78: #{conv_sru_forward.1} parent=5 // pred_check_branch
      %451 = sbr.rel (%p448) target = $region80
    $region79: #{conv_sru_forward.1} parent=5 // pred_region
      %s452 = ssub.s32 %s21, 1
      %p453 = scmp.lt.s32.totalorder %s26, 1
      %s454 = scalar_select %p453, %s26, 1
      %s455 = smul.addr %s454, 2
      %s456 = smul.addr %s455, 2
      %s457 = scalar_lea.vmem %s0, %s456
      %p458 = pneg %p47
      %p459 = pneg %p44
      %p460 = pneg %p68
      %p461 = pneg %p65
      %p462 = pneg %p89
      %p463 = pneg %p86
      %p464 = pneg %p110
      %p465 = pneg %p107
      %p466 = pneg %p131
      %p467 = pneg %p128
      %p468 = pneg %p152
      %p469 = pneg %p149
      %p470 = pneg %p173
      %p471 = pneg %p170
      %p472 = pneg %p194
      %p473 = pneg %p191
      %p474 = pneg %p215
      %p475 = pneg %p212
      %p476 = pneg %p236
      %p477 = pneg %p233
      %p478 = pneg %p257
      %p479 = pneg %p254
      %p480 = pneg %p278
      %p481 = pneg %p275
      %p482 = pneg %p299
      %p483 = pneg %p296
      %p484 = pneg %p320
      %p485 = pneg %p317
      %p486 = scmp.lt.s32.totalorder %s26, 1
      %s487 = scalar_select %p486, %s26, 1
      %s488 = smul.addr %s487, 8
      %s489 = smul.addr %s488, 8
      %s490 = scalar_lea.vmem %s14, %s489
      %p491 = pneg %p346
      %p492 = pneg %p343
      %p493 = pneg %p372
      %p494 = pneg %p369
      %p495 = scmp.lt.s32.totalorder %s26, 1
      %s496 = scalar_select %p495, %s26, 1
      %s497 = smul.addr %s496, 8
      %s498 = smul.addr %s497, 8
      %s499 = scalar_lea.vmem %s15, %s498
      %p500 = scmp.lt.s32.totalorder %s26, 1
      %s501 = scalar_select %p500, %s26, 1
      %s502 = smul.addr %s501, 2
      %s503 = smul.addr %s502, 2
      %s504 = scalar_lea.vmem %s0, %s503
      %p505 = scmp.lt.s32.totalorder %s26, 1
      %s506 = scalar_select %p505, %s26, 1
      %s507 = smul.addr %s506, 8
      %s508 = smul.addr %s507, 8
      %s509 = scalar_lea.vmem %s14, %s508
      %p510 = scmp.lt.s32.totalorder %s26, 1
      %s511 = scalar_select %p510, %s26, 1
      %s512 = smul.addr %s511, 8
      %s513 = smul.addr %s512, 8
      %s514 = scalar_lea.vmem %s15, %s513
      %v516 = vld [vmem:[%s1] sm:$0xff]
      %v517 = vld [vmem:[%s1 + $0x8] sm:$0x11]
      %v518 = vld [vmem:[%s504] sm:$0xf]
      %520 = vst [vmem:[#allocation1] ss:$4 sm:$0xff] %v518
      %v521 = vld.sshfl [vmem:[#allocation1 + $0x8] sm:$0xff pattern:$0x73625140]
      %523 = vrot.lane.b32.xlu0 %v521, 17
      %v524 = vpop.permute.xlu0 %523
      %525 = vst [vmem:[#allocation1] ss:$4 sm:$0xff] %v518
      %v526 = vld.sshfl [vmem:[#allocation1] sm:$0xff pattern:$0x73625140]
      %v528 = vld.sshfl [vmem:[#allocation1 + $0x8] sm:$0xff pattern:$0x73625140]
      %530 = vrot.lane.b32.xlu0 %v526, 17
      %v531 = vpop.permute.xlu0 %530
      %532 = vrot.lane.b32.xlu0 %v528, 17
      %v533 = vpop.permute.xlu0 %532
      %vm534 = vcmask 138240
      %v535 = vsel %vm534, %v531, %v533
      %vm537 = vcmask 138240
      %v540 = vsel %vm537, %v524, %v531
      %v543 = vunpack.c.l.b16 %v516
      %v544 = vunpack.c.h.b16 %v516
      %v545 = vpack.c.b16 %v543, %v543
      %v546 = vpack.c.b16 %v544, %v544
      %v548 = vpack.i.b16 %v545, %v545
      %v550 = vperm.slane %v548, 0
      %v552 = vpack.i.b16 %v546, %v546
      %v554 = vperm.slane %v552, 0
      %v555 = vunpack.c.l.bf16 %v540
      %v556 = vunpack.c.l.bf16 %v535
      %v557 = vunpack.c.l.bf16 %v550
      %v558 = vunpack.c.l.bf16 %v554
      %v559 = vmul.f32 %v555, %v557
      %v560 = vmul.f32 %v556, %v558
      %v561 = vpack.c.bf16 %v560, %v559
      %562 = vst [vmem:[#allocation1] ss:$4 sm:$0xff] %v518
      %v563 = vld.sshfl [vmem:[#allocation1 + $0x8] sm:$0xff pattern:$0x73625140]
      %565 = vrot.lane.b32.xlu0 %v563, 16
      %v566 = vpop.permute.xlu0 %565
      %567 = vst [vmem:[#allocation1] ss:$4 sm:$0xff] %v518
      %v568 = vld.sshfl [vmem:[#allocation1] sm:$0xff pattern:$0x73625140]
      %v570 = vld.sshfl [vmem:[#allocation1 + $0x8] sm:$0xff pattern:$0x73625140]
      %572 = vrot.lane.b32.xlu0 %v568, 16
      %v573 = vpop.permute.xlu0 %572
      %574 = vrot.lane.b32.xlu0 %v570, 16
      %v575 = vpop.permute.xlu0 %574
      %vm576 = vcmask 130048
      %v577 = vsel %vm576, %v573, %v575
      %vm579 = vcmask 130048
      %v582 = vsel %vm579, %v566, %v573
      %v584 = vshrl.u32 %v545, 16
      %v585 = vpack.i.b16 %v584, %v584
      %v587 = vperm.slane %v585, 0
      %v588 = vshrl.u32 %v546, 16
      %v589 = vpack.i.b16 %v588, %v588
      %v591 = vperm.slane %v589, 0
      %v592 = vunpack.c.l.bf16 %v582
      %v593 = vunpack.c.l.bf16 %v577
      %v594 = vunpack.c.l.bf16 %v587
      %v595 = vunpack.c.l.bf16 %v591
      %v596 = vmul.f32 %v592, %v594
      %v597 = vmul.f32 %v593, %v595
      %v598 = vpack.c.bf16 %v597, %v596
      %599 = vst [vmem:[#allocation1] ss:$4 sm:$0xff] %v518
      %v600 = vld.sshfl [vmem:[#allocation1 + $0x8] sm:$0xff pattern:$0x73625140]
      %602 = vrot.lane.b32.xlu0 %v600, 15
      %v603 = vpop.permute.xlu0 %602
      %604 = vst [vmem:[#allocation1] ss:$4 sm:$0xff] %v518
      %v605 = vld.sshfl [vmem:[#allocation1] sm:$0xff pattern:$0x73625140]
      %v607 = vld.sshfl [vmem:[#allocation1 + $0x8] sm:$0xff pattern:$0x73625140]
      %609 = vrot.lane.b32.xlu0 %v605, 15
      %v610 = vpop.permute.xlu0 %609
      %611 = vrot.lane.b32.xlu0 %v607, 15
      %v612 = vpop.permute.xlu0 %611
      %vm613 = vcmask 121856
      %v614 = vsel %vm613, %v610, %v612
      %vm616 = vcmask 121856
      %v619 = vsel %vm616, %v603, %v610
      %v621 = vperm.slane %v548, 1
      %v622 = vperm.slane %v552, 1
      %v623 = vunpack.c.l.bf16 %v619
      %v624 = vunpack.c.l.bf16 %v614
      %v625 = vunpack.c.l.bf16 %v621
      %v626 = vunpack.c.l.bf16 %v622
      %v627 = vmul.f32 %v623, %v625
      %v628 = vmul.f32 %v624, %v626
      %v629 = vpack.c.bf16 %v628, %v627
      %630 = vst [vmem:[#allocation1] ss:$4 sm:$0xff] %v518
      %v631 = vld.sshfl [vmem:[#allocation1 + $0x8] sm:$0xff pattern:$0x73625140]
      %633 = vrot.lane.b32.xlu0 %v631, 1
      %v634 = vpop.permute.xlu0 %633
      %635 = vst [vmem:[#allocation1] ss:$4 sm:$0xff] %v518
      %v636 = vld.sshfl [vmem:[#allocation1] sm:$0xff pattern:$0x73625140]
      %v638 = vld.sshfl [vmem:[#allocation1 + $0x8] sm:$0xff pattern:$0x73625140]
      %640 = vrot.lane.b32.xlu0 %v636, 1
      %v641 = vpop.permute.xlu0 %640
      %642 = vrot.lane.b32.xlu0 %v638, 1
      %v643 = vpop.permute.xlu0 %642
      %vm644 = vcmask 7168
      %v645 = vsel %vm644, %v641, %v643
      %vm647 = vcmask 7168
      %v650 = vsel %vm647, %v634, %v641
      %v652 = vperm.slane %v585, 1
      %v653 = vperm.slane %v589, 1
      %v654 = vunpack.c.l.bf16 %v650
      %v655 = vunpack.c.l.bf16 %v645
      %v656 = vunpack.c.l.bf16 %v652
      %v657 = vunpack.c.l.bf16 %v653
      %v658 = vmul.f32 %v654, %v656
      %v659 = vmul.f32 %v655, %v657
      %v660 = vpack.c.bf16 %v659, %v658
      %v661 = vperm.slane %v548, 2
      %v662 = vperm.slane %v552, 2
      %v663 = vunpack.c.l.bf16 %v518
      %v664 = vunpack.c.l.bf16 %v661
      %v665 = vunpack.c.l.bf16 %v662
      %v668 = vrot.slane %v665, 4
      %vm669 = vcmask 1043456
      %v670 = vsel %vm669, %v664, %v668
      %v672 = vmul.f32 %v663, %v670
      %674 = vst [vmem:[#allocation1] ss:$2 sm:$0xff] %v672
      %v675 = vld.sshfl [vmem:[#allocation1] sm:$0xff pattern:$0x75316420]
      %v676 = vld.sshfl [vmem:[#allocation1 + $0x8] sm:$0xff pattern:$0x75316420]
      %v679 = vpack.c.bf16 %v676, %v675
      %680 = vst [vmem:[#allocation1] ss:$4 sm:$0xff] %v518
      %v681 = vld.sshfl [vmem:[#allocation1] sm:$0xff pattern:$0x73625140]
      %v683 = vld.sshfl [vmem:[#allocation1 + $0x8] sm:$0xff pattern:$0x73625140]
      %685 = vrot.lane.b32.xlu0 %v681, 127
      %v686 = vpop.permute.xlu0 %685
      %687 = vrot.lane.b32.xlu0 %v683, 127
      %v688 = vpop.permute.xlu0 %687
      %vm689 = vcmask 1039360
      %v690 = vsel %vm689, %v686, %v688
      %692 = vst [vmem:[#allocation1] ss:$4 sm:$0xff] %v518
      %v693 = vld.sshfl [vmem:[#allocation1] sm:$0xff pattern:$0x73625140]
      %695 = vrot.lane.b32.xlu0 %v693, 127
      %v696 = vpop.permute.xlu0 %695
      %vm697 = vcmask 1039360
      %v700 = vsel %vm697, %v688, %v696
      %v702 = vperm.slane %v585, 2
      %v703 = vperm.slane %v589, 2
      %v704 = vunpack.c.l.bf16 %v690
      %v705 = vunpack.c.l.bf16 %v700
      %v706 = vunpack.c.l.bf16 %v702
      %v707 = vunpack.c.l.bf16 %v703
      %v708 = vmul.f32 %v704, %v706
      %v709 = vmul.f32 %v705, %v707
      %v710 = vpack.c.bf16 %v709, %v708
      %711 = vst [vmem:[#allocation1] ss:$4 sm:$0xff] %v518
      %v712 = vld.sshfl [vmem:[#allocation1] sm:$0xff pattern:$0x73625140]
      %v714 = vld.sshfl [vmem:[#allocation1 + $0x8] sm:$0xff pattern:$0x73625140]
      %716 = vrot.lane.b32.xlu0 %v712, 113
      %v717 = vpop.permute.xlu0 %716
      %718 = vrot.lane.b32.xlu0 %v714, 113
      %v719 = vpop.permute.xlu0 %718
      %vm720 = vcmask 924672
      %v721 = vsel %vm720, %v717, %v719
      %723 = vst [vmem:[#allocation1] ss:$4 sm:$0xff] %v518
      %v724 = vld.sshfl [vmem:[#allocation1] sm:$0xff pattern:$0x73625140]
      %726 = vrot.lane.b32.xlu0 %v724, 113
      %v727 = vpop.permute.xlu0 %726
      %vm728 = vcmask 924672
      %v731 = vsel %vm728, %v719, %v727
      %v733 = vperm.slane %v548, 3
      %v734 = vperm.slane %v552, 3
      %v735 = vunpack.c.l.bf16 %v721
      %v736 = vunpack.c.l.bf16 %v731
      %v737 = vunpack.c.l.bf16 %v733
      %v738 = vunpack.c.l.bf16 %v734
      %v739 = vmul.f32 %v735, %v737
      %v740 = vmul.f32 %v736, %v738
      %v741 = vpack.c.bf16 %v740, %v739
      %742 = vst [vmem:[#allocation1] ss:$4 sm:$0xff] %v518
      %v743 = vld.sshfl [vmem:[#allocation1] sm:$0xff pattern:$0x73625140]
      %v745 = vld.sshfl [vmem:[#allocation1 + $0x8] sm:$0xff pattern:$0x73625140]
      %747 = vrot.lane.b32.xlu0 %v743, 112
      %v748 = vpop.permute.xlu0 %747
      %749 = vrot.lane.b32.xlu0 %v745, 112
      %v750 = vpop.permute.xlu0 %749
      %vm751 = vcmask 916480
      %v752 = vsel %vm751, %v748, %v750
      %754 = vst [vmem:[#allocation1] ss:$4 sm:$0xff] %v518
      %v755 = vld.sshfl [vmem:[#allocation1] sm:$0xff pattern:$0x73625140]
      %757 = vrot.lane.b32.xlu0 %v755, 112
      %v758 = vpop.permute.xlu0 %757
      %vm759 = vcmask 916480
      %v762 = vsel %vm759, %v750, %v758
      %v764 = vperm.slane %v585, 3
      %v765 = vperm.slane %v589, 3
      %v766 = vunpack.c.l.bf16 %v752
      %v767 = vunpack.c.l.bf16 %v762
      %v768 = vunpack.c.l.bf16 %v764
      %v769 = vunpack.c.l.bf16 %v765
      %v770 = vmul.f32 %v766, %v768
      %v771 = vmul.f32 %v767, %v769
      %v772 = vpack.c.bf16 %v771, %v770
      %773 = vst [vmem:[#allocation1] ss:$4 sm:$0xff] %v518
      %v774 = vld.sshfl [vmem:[#allocation1] sm:$0xff pattern:$0x73625140]
      %v776 = vld.sshfl [vmem:[#allocation1 + $0x8] sm:$0xff pattern:$0x73625140]
      %778 = vrot.lane.b32.xlu0 %v774, 111
      %v779 = vpop.permute.xlu0 %778
      %780 = vrot.lane.b32.xlu0 %v776, 111
      %v781 = vpop.permute.xlu0 %780
      %vm782 = vcmask 908288
      %v783 = vsel %vm782, %v779, %v781
      %785 = vst [vmem:[#allocation1] ss:$4 sm:$0xff] %v518
      %v786 = vld.sshfl [vmem:[#allocation1] sm:$0xff pattern:$0x73625140]
      %788 = vrot.lane.b32.xlu0 %v786, 111
      %v789 = vpop.permute.xlu0 %788
      %vm790 = vcmask 908288
      %v793 = vsel %vm790, %v781, %v789
      %v796 = vunpack.c.l.b16 %v517
      %v797 = vunpack.c.h.b16 %v517
      %v798 = vpack.c.b16 %v796, %v796
      %v799 = vpack.c.b16 %v797, %v797
      %v801 = vpack.i.b16 %v798, %v798
      %v803 = vperm.slane %v801, 0
      %v805 = vpack.i.b16 %v799, %v799
      %v807 = vperm.slane %v805, 0
      %v808 = vunpack.c.l.bf16 %v783
      %v809 = vunpack.c.l.bf16 %v793
      %v810 = vunpack.c.l.bf16 %v803
      %v811 = vunpack.c.l.bf16 %v807
      %v812 = vmul.f32 %v808, %v810
      %v813 = vmul.f32 %v809, %v811
      %v814 = vpack.c.bf16 %v813, %v812
      %v816 = vunpack.c.l.b16 %v561
      %v817 = vunpack.c.h.b16 %v561
      %v818 = vpack.c.b16 %v816, %v816
      %v819 = vpack.c.b16 %v817, %v817
      %v821 = vunpack.c.l.b16 %v598
      %v822 = vunpack.c.h.b16 %v598
      %v823 = vpack.c.b16 %v821, %v821
      %v824 = vpack.c.b16 %v822, %v822
      %v825 = vrot.slane %v823, 6
      %v826 = vrot.slane %v824, 6
      %v828 = vunpack.c.l.b16 %v629
      %v829 = vunpack.c.h.b16 %v629
      %v830 = vpack.c.b16 %v828, %v828
      %v831 = vpack.c.b16 %v829, %v829
      %v833 = vunpack.c.l.b16 %v660
      %v834 = vunpack.c.h.b16 %v660
      %v835 = vpack.c.b16 %v833, %v833
      %v836 = vpack.c.b16 %v834, %v834
      %v837 = vrot.slane %v835, 2
      %v838 = vrot.slane %v836, 2
      %v840 = vunpack.c.l.b16 %v679
      %v841 = vunpack.c.h.b16 %v679
      %v842 = vpack.c.b16 %v840, %v840
      %v843 = vpack.c.b16 %v841, %v841
      %v845 = vunpack.c.l.b16 %v710
      %v846 = vunpack.c.h.b16 %v710
      %v847 = vpack.c.b16 %v845, %v845
      %v848 = vpack.c.b16 %v846, %v846
      %v849 = vrot.slane %v847, 6
      %v850 = vrot.slane %v848, 6
      %v852 = vunpack.c.l.b16 %v741
      %v853 = vunpack.c.h.b16 %v741
      %v854 = vpack.c.b16 %v852, %v852
      %v855 = vpack.c.b16 %v853, %v853
      %v857 = vunpack.c.l.b16 %v772
      %v858 = vunpack.c.h.b16 %v772
      %v859 = vpack.c.b16 %v857, %v857
      %v860 = vpack.c.b16 %v858, %v858
      %v861 = vrot.slane %v859, 2
      %v862 = vrot.slane %v860, 2
      %v864 = vunpack.c.l.b16 %v814
      %v865 = vunpack.c.h.b16 %v814
      %v866 = vpack.c.b16 %v864, %v864
      %v867 = vpack.c.b16 %v865, %v865
      %vm868 = vcmask 1041408
      %v871 = vsel %vm868, %v818, %v825
      %v874 = vsel %vm868, %v819, %v826
      %v876 = vsel %vm669, %v871, %v830
      %v878 = vsel %vm669, %v874, %v831
      %vm879 = vcmask 1045504
      %v881 = vsel %vm879, %v876, %v837
      %v884 = vsel %vm879, %v878, %v838
      %v888 = vsel %vm868, %v842, %v849
      %v891 = vsel %vm868, %v843, %v850
      %v893 = vsel %vm669, %v888, %v854
      %v895 = vsel %vm669, %v891, %v855
      %v897 = vsel %vm879, %v893, %v861
      %v900 = vsel %vm879, %v895, %v862
      %v902 = vld [vmem:[%s2] sm:$0xf]
      %v903 = vld [vmem:[%s2 + $0x4] sm:$0xf]
      %v904 = vld [vmem:[%s2 + $0x8] sm:$0xf]
      %v905 = vld [vmem:[%s2 + $0xc] sm:$0xf]
      %v906 = vld [vmem:[%s2 + $0x10] sm:$0xf]
      %v907 = vld [vmem:[%s2 + $0x14] sm:$0xf]
      %v908 = vld [vmem:[%s2 + $0x18] sm:$0xf]
      %v909 = vld [vmem:[%s2 + $0x1c] sm:$0xf]
      %v910 = vld [vmem:[%s3] sm:$0xff]
      %v911 = vld [vmem:[%s3 + $0x8] sm:$0xff]
      %v912 = vld [vmem:[%s3 + $0x10] sm:$0xff]
      %v913 = vld [vmem:[%s3 + $0x18] sm:$0xff]
      %v914 = vld [vmem:[%s3 + $0x20] sm:$0xff]
      %v915 = vld [vmem:[%s3 + $0x28] sm:$0xff]
      %v916 = vld [vmem:[%s3 + $0x30] sm:$0xff]
      %v917 = vld [vmem:[%s3 + $0x38] sm:$0xff]
      %919 = vset.pattern.permute.xlu0 0
      %920 = vperm.xlu0 %919, %v910
      %v921 = vpop.permute.xlu0 %920
      %924 = vset.pattern.permute.xlu0 0
      %925 = vperm.xlu0 %924, %v911
      %v926 = vpop.permute.xlu0 %925
      %929 = vset.pattern.permute.xlu0 0
      %930 = vperm.xlu0 %929, %v912
      %v931 = vpop.permute.xlu0 %930
      %934 = vset.pattern.permute.xlu0 0
      %935 = vperm.xlu0 %934, %v913
      %v936 = vpop.permute.xlu0 %935
      %939 = vset.pattern.permute.xlu0 0
      %940 = vperm.xlu0 %939, %v914
      %v941 = vpop.permute.xlu0 %940
      %944 = vset.pattern.permute.xlu0 0
      %945 = vperm.xlu0 %944, %v915
      %v946 = vpop.permute.xlu0 %945
      %949 = vset.pattern.permute.xlu0 0
      %950 = vperm.xlu0 %949, %v916
      %v951 = vpop.permute.xlu0 %950
      %954 = vset.pattern.permute.xlu0 0
      %955 = vperm.xlu0 %954, %v917
      %v956 = vpop.permute.xlu0 %955
      %v966 = vunpack.c.l.b16 %v902
      %v967 = vunpack.c.l.b16 %v903
      %v968 = vunpack.c.l.b16 %v904
      %v969 = vunpack.c.l.b16 %v905
      %v970 = vunpack.c.l.b16 %v906
      %v971 = vunpack.c.l.b16 %v907
      %v972 = vunpack.c.l.b16 %v908
      %v973 = vunpack.c.l.b16 %v909
      %v974 = vpack.c.b16 %v967, %v966
      %v975 = vpack.c.b16 %v969, %v968
      %v976 = vpack.c.b16 %v971, %v970
      %v977 = vpack.c.b16 %v973, %v972
      %vm978 = vcmask 293888
      %v980 = vsel %vm978, %v974, 0
      %v983 = vsel %vm978, %v975, 0
      %v986 = vsel %vm978, %v976, 0
      %v989 = vsel %vm978, %v977, 0
      %v992 = vsel %vm868, %v866, 0
      %v995 = vsel %vm868, %v867, 0
      %997 = vmatpush.bf16.msra.mxu0 0
      %998 = vmatpush.bf16.msra.mxu0 0
      %999 = vmatpush.bf16.msra.mxu0 0
      %1000 = vmatpush.bf16.msra.mxu0 0
      %1001 = vmatpush.bf16.msra.mxu0 0
      %1002 = vmatpush.bf16.msra.mxu0 %v992
      %1003 = vmatpush.bf16.msra.mxu0 %v897
      %1004 = vmatpush.bf16.msra.mxu0 %v881
      %1005 = vmatmul.bf16.gmra.mxu0 %v980
      %v1006 = vpop.f32.mrf.mxu0
      %v1007 = vadd.f32 %v921, %v1006
      %v1008 = vpop.f32.mrf.mxu0
      %v1009 = vadd.f32 %v926, %v1008
      %1010 = vmatmul.bf16.gmra.mxu0 %v983
      %v1011 = vpop.f32.mrf.mxu0
      %v1012 = vadd.f32 %v931, %v1011
      %v1013 = vpop.f32.mrf.mxu0
      %v1014 = vadd.f32 %v936, %v1013
      %1015 = vmatmul.bf16.gmra.mxu0 %v986
      %v1016 = vpop.f32.mrf.mxu0
      %v1017 = vadd.f32 %v941, %v1016
      %v1018 = vpop.f32.mrf.mxu0
      %v1019 = vadd.f32 %v946, %v1018
      %1020 = vmatmul.bf16.gmra.mxu0 %v989
      %v1021 = vpop.f32.mrf.mxu0
      %v1022 = vadd.f32 %v951, %v1021
      %v1023 = vpop.f32.mrf.mxu0
      %v1024 = vadd.f32 %v956, %v1023
      %1025 = vdwg.mxu0
      %1026 = vmatpush.bf16.msra.mxu0 0
      %1027 = vmatpush.bf16.msra.mxu0 0
      %1028 = vmatpush.bf16.msra.mxu0 0
      %1029 = vmatpush.bf16.msra.mxu0 0
      %1030 = vmatpush.bf16.msra.mxu0 0
      %1031 = vmatpush.bf16.msra.mxu0 %v995
      %1032 = vmatpush.bf16.msra.mxu0 %v900
      %1033 = vmatpush.bf16.msra.mxu0 %v884
      %1034 = vmatmul.bf16.gmra.mxu0 %v980
      %v1035 = vpop.f32.mrf.mxu0
      %v1036 = vadd.f32 %v921, %v1035
      %v1037 = vpop.f32.mrf.mxu0
      %v1038 = vadd.f32 %v926, %v1037
      %1039 = vmatmul.bf16.gmra.mxu0 %v983
      %v1040 = vpop.f32.mrf.mxu0
      %v1041 = vadd.f32 %v931, %v1040
      %v1042 = vpop.f32.mrf.mxu0
      %v1043 = vadd.f32 %v936, %v1042
      %1044 = vmatmul.bf16.gmra.mxu0 %v986
      %v1045 = vpop.f32.mrf.mxu0
      %v1046 = vadd.f32 %v941, %v1045
      %v1047 = vpop.f32.mrf.mxu0
      %v1048 = vadd.f32 %v946, %v1047
      %1049 = vmatmul.bf16.gmra.mxu0 %v989
      %v1050 = vpop.f32.mrf.mxu0
      %v1051 = vadd.f32 %v951, %v1050
      %v1052 = vpop.f32.mrf.mxu0
      %v1053 = vadd.f32 %v956, %v1052
      %1054 = vdwg.mxu0
      %v1055 = vld [vmem:[%s4] sm:$0xff]
      %v1056 = vld [vmem:[%s4 + $0x8] sm:$0xff]
      %v1057 = vld [vmem:[%s4 + $0x10] sm:$0xff]
      %v1058 = vld [vmem:[%s4 + $0x18] sm:$0xff]
      %v1059 = vld [vmem:[%s4 + $0x20] sm:$0xff]
      %v1060 = vld [vmem:[%s4 + $0x28] sm:$0xff]
      %v1061 = vld [vmem:[%s4 + $0x30] sm:$0xff]
      %v1062 = vld [vmem:[%s4 + $0x38] sm:$0xff]
      %v1063 = vld [vmem:[%s5] sm:$0xff]
      %v1064 = vld [vmem:[%s5 + $0x8] sm:$0xff]
      %v1065 = vld [vmem:[%s5 + $0x10] sm:$0xff]
      %v1066 = vld [vmem:[%s5 + $0x18] sm:$0xff]
      %v1067 = vld [vmem:[%s5 + $0x20] sm:$0xff]
      %v1068 = vld [vmem:[%s5 + $0x28] sm:$0xff]
      %v1069 = vld [vmem:[%s5 + $0x30] sm:$0xff]
      %v1070 = vld [vmem:[%s5 + $0x38] sm:$0xff]
      %v1071 = vadd.f32 %v1007, %v1036
      %1072 = vadd.xlane.f32.xlu0 %v1071
      %v1073 = vpop.xlane.xlu0 %1072
      %v1074 = vadd.f32 %v1009, %v1038
      %1075 = vadd.xlane.f32.xlu0 %v1074
      %v1076 = vpop.xlane.xlu0 %1075
      %v1077 = vadd.f32 %v1012, %v1041
      %1078 = vadd.xlane.f32.xlu0 %v1077
      %v1079 = vpop.xlane.xlu0 %1078
      %v1080 = vadd.f32 %v1014, %v1043
      %1081 = vadd.xlane.f32.xlu0 %v1080
      %v1082 = vpop.xlane.xlu0 %1081
      %v1083 = vadd.f32 %v1017, %v1046
      %1084 = vadd.xlane.f32.xlu0 %v1083
      %v1085 = vpop.xlane.xlu0 %1084
      %v1086 = vadd.f32 %v1019, %v1048
      %1087 = vadd.xlane.f32.xlu0 %v1086
      %v1088 = vpop.xlane.xlu0 %1087
      %v1089 = vadd.f32 %v1022, %v1051
      %1090 = vadd.xlane.f32.xlu0 %v1089
      %v1091 = vpop.xlane.xlu0 %1090
      %v1092 = vadd.f32 %v1024, %v1053
      %1093 = vadd.xlane.f32.xlu0 %v1092
      %v1094 = vpop.xlane.xlu0 %1093
      %vm1095 = vcmask 3072
      %v1096 = vsel %vm1095, %v1073, 0.0
      %1097 = vadd.xlane.f32.xlu0 %v1096
      %v1098 = vpop.xlane.xlu0 %1097
      %v1099 = vrot.slane %v1098, 4
      %v1100 = vadd.f32 %v1098, %v1099
      %v1101 = vrot.slane %v1100, 2
      %v1102 = vadd.f32 %v1100, %v1101
      %v1103 = vrot.slane %v1102, 1
      %v1104 = vadd.f32 %v1102, %v1103
      %s1105 = vtos %v1104
      %v1106 = vstv %s1105
      %v1107 = vmul.f32 %v1106, 0.0009765625
      %v1109 = vrot.slane %v1073, 4
      %v1111 = vsel %vm1095, %v1109, 0.0
      %1112 = vadd.xlane.f32.xlu0 %v1111
      %v1113 = vpop.xlane.xlu0 %1112
      %v1114 = vrot.slane %v1113, 4
      %v1115 = vadd.f32 %v1113, %v1114
      %v1116 = vrot.slane %v1115, 2
      %v1117 = vadd.f32 %v1115, %v1116
      %v1118 = vrot.slane %v1117, 1
      %v1119 = vadd.f32 %v1117, %v1118
      %s1120 = vtos %v1119
      %v1121 = vstv %s1120
      %v1122 = vmul.f32 %v1121, 0.0009765625
      %v1123 = vsel %vm1095, %v1076, 0.0
      %1124 = vadd.xlane.f32.xlu0 %v1123
      %v1125 = vpop.xlane.xlu0 %1124
      %v1126 = vrot.slane %v1125, 4
      %v1127 = vadd.f32 %v1125, %v1126
      %v1128 = vrot.slane %v1127, 2
      %v1129 = vadd.f32 %v1127, %v1128
      %v1130 = vrot.slane %v1129, 1
      %v1131 = vadd.f32 %v1129, %v1130
      %s1132 = vtos %v1131
      %v1133 = vstv %s1132
      %v1134 = vmul.f32 %v1133, 0.0009765625
      %v1136 = vrot.slane %v1076, 4
      %v1138 = vsel %vm1095, %v1136, 0.0
      %1139 = vadd.xlane.f32.xlu0 %v1138
      %v1140 = vpop.xlane.xlu0 %1139
      %v1141 = vrot.slane %v1140, 4
      %v1142 = vadd.f32 %v1140, %v1141
      %v1143 = vrot.slane %v1142, 2
      %v1144 = vadd.f32 %v1142, %v1143
      %v1145 = vrot.slane %v1144, 1
      %v1146 = vadd.f32 %v1144, %v1145
      %s1147 = vtos %v1146
      %v1148 = vstv %s1147
      %v1149 = vmul.f32 %v1148, 0.0009765625
      %v1150 = vsel %vm1095, %v1079, 0.0
      %1151 = vadd.xlane.f32.xlu0 %v1150
      %v1152 = vpop.xlane.xlu0 %1151
      %v1153 = vrot.slane %v1152, 4
      %v1154 = vadd.f32 %v1152, %v1153
      %v1155 = vrot.slane %v1154, 2
      %v1156 = vadd.f32 %v1154, %v1155
      %v1157 = vrot.slane %v1156, 1
      %v1158 = vadd.f32 %v1156, %v1157
      %s1159 = vtos %v1158
      %v1160 = vstv %s1159
      %v1161 = vmul.f32 %v1160, 0.0009765625
      %v1163 = vrot.slane %v1079, 4
      %v1165 = vsel %vm1095, %v1163, 0.0
      %1166 = vadd.xlane.f32.xlu0 %v1165
      %v1167 = vpop.xlane.xlu0 %1166
      %v1168 = vrot.slane %v1167, 4
      %v1169 = vadd.f32 %v1167, %v1168
      %v1170 = vrot.slane %v1169, 2
      %v1171 = vadd.f32 %v1169, %v1170
      %v1172 = vrot.slane %v1171, 1
      %v1173 = vadd.f32 %v1171, %v1172
      %s1174 = vtos %v1173
      %v1175 = vstv %s1174
      %v1176 = vmul.f32 %v1175, 0.0009765625
      %v1177 = vsel %vm1095, %v1082, 0.0
      %1178 = vadd.xlane.f32.xlu0 %v1177
      %v1179 = vpop.xlane.xlu0 %1178
      %v1180 = vrot.slane %v1179, 4
      %v1181 = vadd.f32 %v1179, %v1180
      %v1182 = vrot.slane %v1181, 2
      %v1183 = vadd.f32 %v1181, %v1182
      %v1184 = vrot.slane %v1183, 1
      %v1185 = vadd.f32 %v1183, %v1184
      %s1186 = vtos %v1185
      %v1187 = vstv %s1186
      %v1188 = vmul.f32 %v1187, 0.0009765625
      %v1190 = vrot.slane %v1082, 4
      %v1192 = vsel %vm1095, %v1190, 0.0
      %1193 = vadd.xlane.f32.xlu0 %v1192
      %v1194 = vpop.xlane.xlu0 %1193
      %v1195 = vrot.slane %v1194, 4
      %v1196 = vadd.f32 %v1194, %v1195
      %v1197 = vrot.slane %v1196, 2
      %v1198 = vadd.f32 %v1196, %v1197
      %v1199 = vrot.slane %v1198, 1
      %v1200 = vadd.f32 %v1198, %v1199
      %s1201 = vtos %v1200
      %v1202 = vstv %s1201
      %v1203 = vmul.f32 %v1202, 0.0009765625
      %v1204 = vsel %vm1095, %v1085, 0.0
      %1205 = vadd.xlane.f32.xlu0 %v1204
      %v1206 = vpop.xlane.xlu0 %1205
      %v1207 = vrot.slane %v1206, 4
      %v1208 = vadd.f32 %v1206, %v1207
      %v1209 = vrot.slane %v1208, 2
      %v1210 = vadd.f32 %v1208, %v1209
      %v1211 = vrot.slane %v1210, 1
      %v1212 = vadd.f32 %v1210, %v1211
      %s1213 = vtos %v1212
      %v1214 = vstv %s1213
      %v1215 = vmul.f32 %v1214, 0.0009765625
      %v1217 = vrot.slane %v1085, 4
      %v1219 = vsel %vm1095, %v1217, 0.0
      %1220 = vadd.xlane.f32.xlu0 %v1219
      %v1221 = vpop.xlane.xlu0 %1220
      %v1222 = vrot.slane %v1221, 4
      %v1223 = vadd.f32 %v1221, %v1222
      %v1224 = vrot.slane %v1223, 2
      %v1225 = vadd.f32 %v1223, %v1224
      %v1226 = vrot.slane %v1225, 1
      %v1227 = vadd.f32 %v1225, %v1226
      %s1228 = vtos %v1227
      %v1229 = vstv %s1228
      %v1230 = vmul.f32 %v1229, 0.0009765625
      %v1231 = vsel %vm1095, %v1088, 0.0
      %1232 = vadd.xlane.f32.xlu0 %v1231
      %v1233 = vpop.xlane.xlu0 %1232
      %v1234 = vrot.slane %v1233, 4
      %v1235 = vadd.f32 %v1233, %v1234
      %v1236 = vrot.slane %v1235, 2
      %v1237 = vadd.f32 %v1235, %v1236
      %v1238 = vrot.slane %v1237, 1
      %v1239 = vadd.f32 %v1237, %v1238
      %s1240 = vtos %v1239
      %v1241 = vstv %s1240
      %v1242 = vmul.f32 %v1241, 0.0009765625
      %v1244 = vrot.slane %v1088, 4
      %v1246 = vsel %vm1095, %v1244, 0.0
      %1247 = vadd.xlane.f32.xlu0 %v1246
      %v1248 = vpop.xlane.xlu0 %1247
      %v1249 = vrot.slane %v1248, 4
      %v1250 = vadd.f32 %v1248, %v1249
      %v1251 = vrot.slane %v1250, 2
      %v1252 = vadd.f32 %v1250, %v1251
      %v1253 = vrot.slane %v1252, 1
      %v1254 = vadd.f32 %v1252, %v1253
      %s1255 = vtos %v1254
      %v1256 = vstv %s1255
      %v1257 = vmul.f32 %v1256, 0.0009765625
      %v1258 = vsel %vm1095, %v1091, 0.0
      %1259 = vadd.xlane.f32.xlu0 %v1258
      %v1260 = vpop.xlane.xlu0 %1259
      %v1261 = vrot.slane %v1260, 4
      %v1262 = vadd.f32 %v1260, %v1261
      %v1263 = vrot.slane %v1262, 2
      %v1264 = vadd.f32 %v1262, %v1263
      %v1265 = vrot.slane %v1264, 1
      %v1266 = vadd.f32 %v1264, %v1265
      %s1267 = vtos %v1266
      %v1268 = vstv %s1267
      %v1269 = vmul.f32 %v1268, 0.0009765625
      %v1271 = vrot.slane %v1091, 4
      %v1273 = vsel %vm1095, %v1271, 0.0
      %1274 = vadd.xlane.f32.xlu0 %v1273
      %v1275 = vpop.xlane.xlu0 %1274
      %v1276 = vrot.slane %v1275, 4
      %v1277 = vadd.f32 %v1275, %v1276
      %v1278 = vrot.slane %v1277, 2
      %v1279 = vadd.f32 %v1277, %v1278
      %v1280 = vrot.slane %v1279, 1
      %v1281 = vadd.f32 %v1279, %v1280
      %s1282 = vtos %v1281
      %v1283 = vstv %s1282
      %v1284 = vmul.f32 %v1283, 0.0009765625
      %v1285 = vsel %vm1095, %v1094, 0.0
      %1286 = vadd.xlane.f32.xlu0 %v1285
      %v1287 = vpop.xlane.xlu0 %1286
      %v1288 = vrot.slane %v1287, 4
      %v1289 = vadd.f32 %v1287, %v1288
      %v1290 = vrot.slane %v1289, 2
      %v1291 = vadd.f32 %v1289, %v1290
      %v1292 = vrot.slane %v1291, 1
      %v1293 = vadd.f32 %v1291, %v1292
      %s1294 = vtos %v1293
      %v1295 = vstv %s1294
      %v1296 = vmul.f32 %v1295, 0.0009765625
      %v1298 = vrot.slane %v1094, 4
      %v1300 = vsel %vm1095, %v1298, 0.0
      %1301 = vadd.xlane.f32.xlu0 %v1300
      %v1302 = vpop.xlane.xlu0 %1301
      %v1303 = vrot.slane %v1302, 4
      %v1304 = vadd.f32 %v1302, %v1303
      %v1305 = vrot.slane %v1304, 2
      %v1306 = vadd.f32 %v1304, %v1305
      %v1307 = vrot.slane %v1306, 1
      %v1308 = vadd.f32 %v1306, %v1307
      %s1309 = vtos %v1308
      %v1310 = vstv %s1309
      %v1311 = vmul.f32 %v1310, 0.0009765625
      %v1312 = vsel %vm669, %v1107, %v1122
      %v1313 = vsel %vm669, %v1134, %v1149
      %v1314 = vsel %vm669, %v1161, %v1176
      %v1315 = vsel %vm669, %v1188, %v1203
      %v1316 = vsel %vm669, %v1215, %v1230
      %v1317 = vsel %vm669, %v1242, %v1257
      %v1318 = vsel %vm669, %v1269, %v1284
      %v1319 = vsel %vm669, %v1296, %v1311
      %1321 = vset.pattern.permute.xlu0 0
      %1322 = vperm.xlu0 %1321, %v1312
      %v1323 = vpop.permute.xlu0 %1322
      %1326 = vset.pattern.permute.xlu0 0
      %1327 = vperm.xlu0 %1326, %v1313
      %v1328 = vpop.permute.xlu0 %1327
      %1331 = vset.pattern.permute.xlu0 0
      %1332 = vperm.xlu0 %1331, %v1314
      %v1333 = vpop.permute.xlu0 %1332
      %1336 = vset.pattern.permute.xlu0 0
      %1337 = vperm.xlu0 %1336, %v1315
      %v1338 = vpop.permute.xlu0 %1337
      %1341 = vset.pattern.permute.xlu0 0
      %1342 = vperm.xlu0 %1341, %v1316
      %v1343 = vpop.permute.xlu0 %1342
      %1346 = vset.pattern.permute.xlu0 0
      %1347 = vperm.xlu0 %1346, %v1317
      %v1348 = vpop.permute.xlu0 %1347
      %1351 = vset.pattern.permute.xlu0 0
      %1352 = vperm.xlu0 %1351, %v1318
      %v1353 = vpop.permute.xlu0 %1352
      %1356 = vset.pattern.permute.xlu0 0
      %1357 = vperm.xlu0 %1356, %v1319
      %v1358 = vpop.permute.xlu0 %1357
      %v1360 = vsub.f32 %v1007, %v1323
      %v1361 = vsub.f32 %v1036, %v1323
      %v1362 = vsub.f32 %v1009, %v1328
      %v1363 = vsub.f32 %v1038, %v1328
      %v1364 = vsub.f32 %v1012, %v1333
      %v1365 = vsub.f32 %v1041, %v1333
      %v1366 = vsub.f32 %v1014, %v1338
      %v1367 = vsub.f32 %v1043, %v1338
      %v1368 = vsub.f32 %v1017, %v1343
      %v1369 = vsub.f32 %v1046, %v1343
      %v1370 = vsub.f32 %v1019, %v1348
      %v1371 = vsub.f32 %v1048, %v1348
      %v1372 = vsub.f32 %v1022, %v1353
      %v1373 = vsub.f32 %v1051, %v1353
      %v1374 = vsub.f32 %v1024, %v1358
      %v1375 = vsub.f32 %v1053, %v1358
      %v1376 = vmul.f32 %v1360, %v1360
      %v1377 = vmul.f32 %v1361, %v1361
      %v1378 = vmul.f32 %v1362, %v1362
      %v1379 = vmul.f32 %v1363, %v1363
      %v1380 = vmul.f32 %v1364, %v1364
      %v1381 = vmul.f32 %v1365, %v1365
      %v1382 = vmul.f32 %v1366, %v1366
      %v1383 = vmul.f32 %v1367, %v1367
      %v1384 = vmul.f32 %v1368, %v1368
      %v1385 = vmul.f32 %v1369, %v1369
      %v1386 = vmul.f32 %v1370, %v1370
      %v1387 = vmul.f32 %v1371, %v1371
      %v1388 = vmul.f32 %v1372, %v1372
      %v1389 = vmul.f32 %v1373, %v1373
      %v1390 = vmul.f32 %v1374, %v1374
      %v1391 = vmul.f32 %v1375, %v1375
      %v1392 = vadd.f32 %v1376, %v1377
      %1393 = vadd.xlane.f32.xlu0 %v1392
      %v1394 = vpop.xlane.xlu0 %1393
      %v1395 = vadd.f32 %v1378, %v1379
      %1396 = vadd.xlane.f32.xlu0 %v1395
      %v1397 = vpop.xlane.xlu0 %1396
      %v1398 = vadd.f32 %v1380, %v1381
      %1399 = vadd.xlane.f32.xlu0 %v1398
      %v1400 = vpop.xlane.xlu0 %1399
      %v1401 = vadd.f32 %v1382, %v1383
      %1402 = vadd.xlane.f32.xlu0 %v1401
      %v1403 = vpop.xlane.xlu0 %1402
      %v1404 = vadd.f32 %v1384, %v1385
      %1405 = vadd.xlane.f32.xlu0 %v1404
      %v1406 = vpop.xlane.xlu0 %1405
      %v1407 = vadd.f32 %v1386, %v1387
      %1408 = vadd.xlane.f32.xlu0 %v1407
      %v1409 = vpop.xlane.xlu0 %1408
      %v1410 = vadd.f32 %v1388, %v1389
      %1411 = vadd.xlane.f32.xlu0 %v1410
      %v1412 = vpop.xlane.xlu0 %1411
      %v1413 = vadd.f32 %v1390, %v1391
      %1414 = vadd.xlane.f32.xlu0 %v1413
      %v1415 = vpop.xlane.xlu0 %1414
      %v1416 = vsel %vm1095, %v1394, 0.0
      %1417 = vadd.xlane.f32.xlu0 %v1416
      %v1418 = vpop.xlane.xlu0 %1417
      %v1419 = vrot.slane %v1418, 4
      %v1420 = vadd.f32 %v1418, %v1419
      %v1421 = vrot.slane %v1420, 2
      %v1422 = vadd.f32 %v1420, %v1421
      %v1423 = vrot.slane %v1422, 1
      %v1424 = vadd.f32 %v1422, %v1423
      %s1425 = vtos %v1424
      %v1426 = vstv %s1425
      %v1427 = vmul.f32 %v1426, 0.0009765625
      %v1428 = vadd.f32 %v1427, 1e-05
      %v1429 = vrsqrt.pop %v1428
      %v1430 = vmul.f32 %v1429, %v1428
      %v1431 = vmul.f32 %v1430, %v1429
      %v1432 = vmul.f32 0.5, %v1431
      %v1433 = vsub.f32 1.5, %v1432
      %v1434 = vmul.f32 %v1429, %v1433
      %vm1435 = vweird.f32 %v1428
      %vm1436 = vweird.f32 %v1429
      %vm1437 = vmor %vm1435, %vm1436
      %v1438 = vsel %vm1437, %v1429, %v1434
      %v1440 = vrot.slane %v1394, 4
      %v1442 = vsel %vm1095, %v1440, 0.0
      %1443 = vadd.xlane.f32.xlu0 %v1442
      %v1444 = vpop.xlane.xlu0 %1443
      %v1445 = vrot.slane %v1444, 4
      %v1446 = vadd.f32 %v1444, %v1445
      %v1447 = vrot.slane %v1446, 2
      %v1448 = vadd.f32 %v1446, %v1447
      %v1449 = vrot.slane %v1448, 1
      %v1450 = vadd.f32 %v1448, %v1449
      %s1451 = vtos %v1450
      %v1452 = vstv %s1451
      %v1453 = vmul.f32 %v1452, 0.0009765625
      %v1454 = vadd.f32 %v1453, 1e-05
      %v1455 = vrsqrt.pop %v1454
      %v1456 = vmul.f32 %v1455, %v1454
      %v1457 = vmul.f32 %v1456, %v1455
      %v1458 = vmul.f32 0.5, %v1457
      %v1459 = vsub.f32 1.5, %v1458
      %v1460 = vmul.f32 %v1455, %v1459
      %vm1461 = vweird.f32 %v1454
      %vm1462 = vweird.f32 %v1455
      %vm1463 = vmor %vm1461, %vm1462
      %v1464 = vsel %vm1463, %v1455, %v1460
      %v1465 = vsel %vm1095, %v1397, 0.0
      %1466 = vadd.xlane.f32.xlu0 %v1465
      %v1467 = vpop.xlane.xlu0 %1466
      %v1468 = vrot.slane %v1467, 4
      %v1469 = vadd.f32 %v1467, %v1468
      %v1470 = vrot.slane %v1469, 2
      %v1471 = vadd.f32 %v1469, %v1470
      %v1472 = vrot.slane %v1471, 1
      %v1473 = vadd.f32 %v1471, %v1472
      %s1474 = vtos %v1473
      %v1475 = vstv %s1474
      %v1476 = vmul.f32 %v1475, 0.0009765625
      %v1477 = vadd.f32 %v1476, 1e-05
      %v1478 = vrsqrt.pop %v1477
      %v1479 = vmul.f32 %v1478, %v1477
      %v1480 = vmul.f32 %v1479, %v1478
      %v1481 = vmul.f32 0.5, %v1480
      %v1482 = vsub.f32 1.5, %v1481
      %v1483 = vmul.f32 %v1478, %v1482
      %vm1484 = vweird.f32 %v1477
      %vm1485 = vweird.f32 %v1478
      %vm1486 = vmor %vm1484, %vm1485
      %v1487 = vsel %vm1486, %v1478, %v1483
      %v1489 = vrot.slane %v1397, 4
      %v1491 = vsel %vm1095, %v1489, 0.0
      %1492 = vadd.xlane.f32.xlu0 %v1491
      %v1493 = vpop.xlane.xlu0 %1492
      %v1494 = vrot.slane %v1493, 4
      %v1495 = vadd.f32 %v1493, %v1494
      %v1496 = vrot.slane %v1495, 2
      %v1497 = vadd.f32 %v1495, %v1496
      %v1498 = vrot.slane %v1497, 1
      %v1499 = vadd.f32 %v1497, %v1498
      %s1500 = vtos %v1499
      %v1501 = vstv %s1500
      %v1502 = vmul.f32 %v1501, 0.0009765625
      %v1503 = vadd.f32 %v1502, 1e-05
      %v1504 = vrsqrt.pop %v1503
      %v1505 = vmul.f32 %v1504, %v1503
      %v1506 = vmul.f32 %v1505, %v1504
      %v1507 = vmul.f32 0.5, %v1506
      %v1508 = vsub.f32 1.5, %v1507
      %v1509 = vmul.f32 %v1504, %v1508
      %vm1510 = vweird.f32 %v1503
      %vm1511 = vweird.f32 %v1504
      %vm1512 = vmor %vm1510, %vm1511
      %v1513 = vsel %vm1512, %v1504, %v1509
      %v1514 = vsel %vm1095, %v1400, 0.0
      %1515 = vadd.xlane.f32.xlu0 %v1514
      %v1516 = vpop.xlane.xlu0 %1515
      %v1517 = vrot.slane %v1516, 4
      %v1518 = vadd.f32 %v1516, %v1517
      %v1519 = vrot.slane %v1518, 2
      %v1520 = vadd.f32 %v1518, %v1519
      %v1521 = vrot.slane %v1520, 1
      %v1522 = vadd.f32 %v1520, %v1521
      %s1523 = vtos %v1522
      %v1524 = vstv %s1523
      %v1525 = vmul.f32 %v1524, 0.0009765625
      %v1526 = vadd.f32 %v1525, 1e-05
      %v1527 = vrsqrt.pop %v1526
      %v1528 = vmul.f32 %v1527, %v1526
      %v1529 = vmul.f32 %v1528, %v1527
      %v1530 = vmul.f32 0.5, %v1529
      %v1531 = vsub.f32 1.5, %v1530
      %v1532 = vmul.f32 %v1527, %v1531
      %vm1533 = vweird.f32 %v1526
      %vm1534 = vweird.f32 %v1527
      %vm1535 = vmor %vm1533, %vm1534
      %v1536 = vsel %vm1535, %v1527, %v1532
      %v1538 = vrot.slane %v1400, 4
      %v1540 = vsel %vm1095, %v1538, 0.0
      %1541 = vadd.xlane.f32.xlu0 %v1540
      %v1542 = vpop.xlane.xlu0 %1541
      %v1543 = vrot.slane %v1542, 4
      %v1544 = vadd.f32 %v1542, %v1543
      %v1545 = vrot.slane %v1544, 2
      %v1546 = vadd.f32 %v1544, %v1545
      %v1547 = vrot.slane %v1546, 1
      %v1548 = vadd.f32 %v1546, %v1547
      %s1549 = vtos %v1548
      %v1550 = vstv %s1549
      %v1551 = vmul.f32 %v1550, 0.0009765625
      %v1552 = vadd.f32 %v1551, 1e-05
      %v1553 = vrsqrt.pop %v1552
      %v1554 = vmul.f32 %v1553, %v1552
      %v1555 = vmul.f32 %v1554, %v1553
      %v1556 = vmul.f32 0.5, %v1555
      %v1557 = vsub.f32 1.5, %v1556
      %v1558 = vmul.f32 %v1553, %v1557
      %vm1559 = vweird.f32 %v1552
      %vm1560 = vweird.f32 %v1553
      %vm1561 = vmor %vm1559, %vm1560
      %v1562 = vsel %vm1561, %v1553, %v1558
      %v1563 = vsel %vm1095, %v1403, 0.0
      %1564 = vadd.xlane.f32.xlu0 %v1563
      %v1565 = vpop.xlane.xlu0 %1564
      %v1566 = vrot.slane %v1565, 4
      %v1567 = vadd.f32 %v1565, %v1566
      %v1568 = vrot.slane %v1567, 2
      %v1569 = vadd.f32 %v1567, %v1568
      %v1570 = vrot.slane %v1569, 1
      %v1571 = vadd.f32 %v1569, %v1570
      %s1572 = vtos %v1571
      %v1573 = vstv %s1572
      %v1574 = vmul.f32 %v1573, 0.0009765625
      %v1575 = vadd.f32 %v1574, 1e-05
      %v1576 = vrsqrt.pop %v1575
      %v1577 = vmul.f32 %v1576, %v1575
      %v1578 = vmul.f32 %v1577, %v1576
      %v1579 = vmul.f32 0.5, %v1578
      %v1580 = vsub.f32 1.5, %v1579
      %v1581 = vmul.f32 %v1576, %v1580
      %vm1582 = vweird.f32 %v1575
      %vm1583 = vweird.f32 %v1576
      %vm1584 = vmor %vm1582, %vm1583
      %v1585 = vsel %vm1584, %v1576, %v1581
      %v1587 = vrot.slane %v1403, 4
      %v1589 = vsel %vm1095, %v1587, 0.0
      %1590 = vadd.xlane.f32.xlu0 %v1589
      %v1591 = vpop.xlane.xlu0 %1590
      %v1592 = vrot.slane %v1591, 4
      %v1593 = vadd.f32 %v1591, %v1592
      %v1594 = vrot.slane %v1593, 2
      %v1595 = vadd.f32 %v1593, %v1594
      %v1596 = vrot.slane %v1595, 1
      %v1597 = vadd.f32 %v1595, %v1596
      %s1598 = vtos %v1597
      %v1599 = vstv %s1598
      %v1600 = vmul.f32 %v1599, 0.0009765625
      %v1601 = vadd.f32 %v1600, 1e-05
      %v1602 = vrsqrt.pop %v1601
      %v1603 = vmul.f32 %v1602, %v1601
      %v1604 = vmul.f32 %v1603, %v1602
      %v1605 = vmul.f32 0.5, %v1604
      %v1606 = vsub.f32 1.5, %v1605
      %v1607 = vmul.f32 %v1602, %v1606
      %vm1608 = vweird.f32 %v1601
      %vm1609 = vweird.f32 %v1602
      %vm1610 = vmor %vm1608, %vm1609
      %v1611 = vsel %vm1610, %v1602, %v1607
      %v1612 = vsel %vm1095, %v1406, 0.0
      %1613 = vadd.xlane.f32.xlu0 %v1612
      %v1614 = vpop.xlane.xlu0 %1613
      %v1615 = vrot.slane %v1614, 4
      %v1616 = vadd.f32 %v1614, %v1615
      %v1617 = vrot.slane %v1616, 2
      %v1618 = vadd.f32 %v1616, %v1617
      %v1619 = vrot.slane %v1618, 1
      %v1620 = vadd.f32 %v1618, %v1619
      %s1621 = vtos %v1620
      %v1622 = vstv %s1621
      %v1623 = vmul.f32 %v1622, 0.0009765625
      %v1624 = vadd.f32 %v1623, 1e-05
      %v1625 = vrsqrt.pop %v1624
      %v1626 = vmul.f32 %v1625, %v1624
      %v1627 = vmul.f32 %v1626, %v1625
      %v1628 = vmul.f32 0.5, %v1627
      %v1629 = vsub.f32 1.5, %v1628
      %v1630 = vmul.f32 %v1625, %v1629
      %vm1631 = vweird.f32 %v1624
      %vm1632 = vweird.f32 %v1625
      %vm1633 = vmor %vm1631, %vm1632
      %v1634 = vsel %vm1633, %v1625, %v1630
      %v1636 = vrot.slane %v1406, 4
      %v1638 = vsel %vm1095, %v1636, 0.0
      %1639 = vadd.xlane.f32.xlu0 %v1638
      %v1640 = vpop.xlane.xlu0 %1639
      %v1641 = vrot.slane %v1640, 4
      %v1642 = vadd.f32 %v1640, %v1641
      %v1643 = vrot.slane %v1642, 2
      %v1644 = vadd.f32 %v1642, %v1643
      %v1645 = vrot.slane %v1644, 1
      %v1646 = vadd.f32 %v1644, %v1645
      %s1647 = vtos %v1646
      %v1648 = vstv %s1647
      %v1649 = vmul.f32 %v1648, 0.0009765625
      %v1650 = vadd.f32 %v1649, 1e-05
      %v1651 = vrsqrt.pop %v1650
      %v1652 = vmul.f32 %v1651, %v1650
      %v1653 = vmul.f32 %v1652, %v1651
      %v1654 = vmul.f32 0.5, %v1653
      %v1655 = vsub.f32 1.5, %v1654
      %v1656 = vmul.f32 %v1651, %v1655
      %vm1657 = vweird.f32 %v1650
      %vm1658 = vweird.f32 %v1651
      %vm1659 = vmor %vm1657, %vm1658
      %v1660 = vsel %vm1659, %v1651, %v1656
      %v1661 = vsel %vm1095, %v1409, 0.0
      %1662 = vadd.xlane.f32.xlu0 %v1661
      %v1663 = vpop.xlane.xlu0 %1662
      %v1664 = vrot.slane %v1663, 4
      %v1665 = vadd.f32 %v1663, %v1664
      %v1666 = vrot.slane %v1665, 2
      %v1667 = vadd.f32 %v1665, %v1666
      %v1668 = vrot.slane %v1667, 1
      %v1669 = vadd.f32 %v1667, %v1668
      %s1670 = vtos %v1669
      %v1671 = vstv %s1670
      %v1672 = vmul.f32 %v1671, 0.0009765625
      %v1673 = vadd.f32 %v1672, 1e-05
      %v1674 = vrsqrt.pop %v1673
      %v1675 = vmul.f32 %v1674, %v1673
      %v1676 = vmul.f32 %v1675, %v1674
      %v1677 = vmul.f32 0.5, %v1676
      %v1678 = vsub.f32 1.5, %v1677
      %v1679 = vmul.f32 %v1674, %v1678
      %vm1680 = vweird.f32 %v1673
      %vm1681 = vweird.f32 %v1674
      %vm1682 = vmor %vm1680, %vm1681
      %v1683 = vsel %vm1682, %v1674, %v1679
      %v1685 = vrot.slane %v1409, 4
      %v1687 = vsel %vm1095, %v1685, 0.0
      %1688 = vadd.xlane.f32.xlu0 %v1687
      %v1689 = vpop.xlane.xlu0 %1688
      %v1690 = vrot.slane %v1689, 4
      %v1691 = vadd.f32 %v1689, %v1690
      %v1692 = vrot.slane %v1691, 2
      %v1693 = vadd.f32 %v1691, %v1692
      %v1694 = vrot.slane %v1693, 1
      %v1695 = vadd.f32 %v1693, %v1694
      %s1696 = vtos %v1695
      %v1697 = vstv %s1696
      %v1698 = vmul.f32 %v1697, 0.0009765625
      %v1699 = vadd.f32 %v1698, 1e-05
      %v1700 = vrsqrt.pop %v1699
      %v1701 = vmul.f32 %v1700, %v1699
      %v1702 = vmul.f32 %v1701, %v1700
      %v1703 = vmul.f32 0.5, %v1702
      %v1704 = vsub.f32 1.5, %v1703
      %v1705 = vmul.f32 %v1700, %v1704
      %vm1706 = vweird.f32 %v1699
      %vm1707 = vweird.f32 %v1700
      %vm1708 = vmor %vm1706, %vm1707
      %v1709 = vsel %vm1708, %v1700, %v1705
      %v1710 = vsel %vm1095, %v1412, 0.0
      %1711 = vadd.xlane.f32.xlu0 %v1710
      %v1712 = vpop.xlane.xlu0 %1711
      %v1713 = vrot.slane %v1712, 4
      %v1714 = vadd.f32 %v1712, %v1713
      %v1715 = vrot.slane %v1714, 2
      %v1716 = vadd.f32 %v1714, %v1715
      %v1717 = vrot.slane %v1716, 1
      %v1718 = vadd.f32 %v1716, %v1717
      %s1719 = vtos %v1718
      %v1720 = vstv %s1719
      %v1721 = vmul.f32 %v1720, 0.0009765625
      %v1722 = vadd.f32 %v1721, 1e-05
      %v1723 = vrsqrt.pop %v1722
      %v1724 = vmul.f32 %v1723, %v1722
      %v1725 = vmul.f32 %v1724, %v1723
      %v1726 = vmul.f32 0.5, %v1725
      %v1727 = vsub.f32 1.5, %v1726
      %v1728 = vmul.f32 %v1723, %v1727
      %vm1729 = vweird.f32 %v1722
      %vm1730 = vweird.f32 %v1723
      %vm1731 = vmor %vm1729, %vm1730
      %v1732 = vsel %vm1731, %v1723, %v1728
      %v1734 = vrot.slane %v1412, 4
      %v1736 = vsel %vm1095, %v1734, 0.0
      %1737 = vadd.xlane.f32.xlu0 %v1736
      %v1738 = vpop.xlane.xlu0 %1737
      %v1739 = vrot.slane %v1738, 4
      %v1740 = vadd.f32 %v1738, %v1739
      %v1741 = vrot.slane %v1740, 2
      %v1742 = vadd.f32 %v1740, %v1741
      %v1743 = vrot.slane %v1742, 1
      %v1744 = vadd.f32 %v1742, %v1743
      %s1745 = vtos %v1744
      %v1746 = vstv %s1745
      %v1747 = vmul.f32 %v1746, 0.0009765625
      %v1748 = vadd.f32 %v1747, 1e-05
      %v1749 = vrsqrt.pop %v1748
      %v1750 = vmul.f32 %v1749, %v1748
      %v1751 = vmul.f32 %v1750, %v1749
      %v1752 = vmul.f32 0.5, %v1751
      %v1753 = vsub.f32 1.5, %v1752
      %v1754 = vmul.f32 %v1749, %v1753
      %vm1755 = vweird.f32 %v1748
      %vm1756 = vweird.f32 %v1749
      %vm1757 = vmor %vm1755, %vm1756
      %v1758 = vsel %vm1757, %v1749, %v1754
      %v1759 = vsel %vm1095, %v1415, 0.0
      %1760 = vadd.xlane.f32.xlu0 %v1759
      %v1761 = vpop.xlane.xlu0 %1760
      %v1762 = vrot.slane %v1761, 4
      %v1763 = vadd.f32 %v1761, %v1762
      %v1764 = vrot.slane %v1763, 2
      %v1765 = vadd.f32 %v1763, %v1764
      %v1766 = vrot.slane %v1765, 1
      %v1767 = vadd.f32 %v1765, %v1766
      %s1768 = vtos %v1767
      %v1769 = vstv %s1768
      %v1770 = vmul.f32 %v1769, 0.0009765625
      %v1771 = vadd.f32 %v1770, 1e-05
      %v1772 = vrsqrt.pop %v1771
      %v1773 = vmul.f32 %v1772, %v1771
      %v1774 = vmul.f32 %v1773, %v1772
      %v1775 = vmul.f32 0.5, %v1774
      %v1776 = vsub.f32 1.5, %v1775
      %v1777 = vmul.f32 %v1772, %v1776
      %vm1778 = vweird.f32 %v1771
      %vm1779 = vweird.f32 %v1772
      %vm1780 = vmor %vm1778, %vm1779
      %v1781 = vsel %vm1780, %v1772, %v1777
      %v1783 = vrot.slane %v1415, 4
      %v1785 = vsel %vm1095, %v1783, 0.0
      %1786 = vadd.xlane.f32.xlu0 %v1785
      %v1787 = vpop.xlane.xlu0 %1786
      %v1788 = vrot.slane %v1787, 4
      %v1789 = vadd.f32 %v1787, %v1788
      %v1790 = vrot.slane %v1789, 2
      %v1791 = vadd.f32 %v1789, %v1790
      %v1792 = vrot.slane %v1791, 1
      %v1793 = vadd.f32 %v1791, %v1792
      %s1794 = vtos %v1793
      %v1795 = vstv %s1794
      %v1796 = vmul.f32 %v1795, 0.0009765625
      %v1797 = vadd.f32 %v1796, 1e-05
      %v1798 = vrsqrt.pop %v1797
      %v1799 = vmul.f32 %v1798, %v1797
      %v1800 = vmul.f32 %v1799, %v1798
      %v1801 = vmul.f32 0.5, %v1800
      %v1802 = vsub.f32 1.5, %v1801
      %v1803 = vmul.f32 %v1798, %v1802
      %vm1804 = vweird.f32 %v1797
      %vm1805 = vweird.f32 %v1798
      %vm1806 = vmor %vm1804, %vm1805
      %v1807 = vsel %vm1806, %v1798, %v1803
      %v1808 = vsel %vm669, %v1438, %v1464
      %v1809 = vsel %vm669, %v1487, %v1513
      %v1810 = vsel %vm669, %v1536, %v1562
      %v1811 = vsel %vm669, %v1585, %v1611
      %v1812 = vsel %vm669, %v1634, %v1660
      %v1813 = vsel %vm669, %v1683, %v1709
      %v1814 = vsel %vm669, %v1732, %v1758
      %v1815 = vsel %vm669, %v1781, %v1807
      %1817 = vset.pattern.permute.xlu0 0
      %1818 = vperm.xlu0 %1817, %v1808
      %v1819 = vpop.permute.xlu0 %1818
      %1822 = vset.pattern.permute.xlu0 0
      %1823 = vperm.xlu0 %1822, %v1809
      %v1824 = vpop.permute.xlu0 %1823
      %1827 = vset.pattern.permute.xlu0 0
      %1828 = vperm.xlu0 %1827, %v1810
      %v1829 = vpop.permute.xlu0 %1828
      %1832 = vset.pattern.permute.xlu0 0
      %1833 = vperm.xlu0 %1832, %v1811
      %v1834 = vpop.permute.xlu0 %1833
      %1837 = vset.pattern.permute.xlu0 0
      %1838 = vperm.xlu0 %1837, %v1812
      %v1839 = vpop.permute.xlu0 %1838
      %1842 = vset.pattern.permute.xlu0 0
      %1843 = vperm.xlu0 %1842, %v1813
      %v1844 = vpop.permute.xlu0 %1843
      %1847 = vset.pattern.permute.xlu0 0
      %1848 = vperm.xlu0 %1847, %v1814
      %v1849 = vpop.permute.xlu0 %1848
      %1852 = vset.pattern.permute.xlu0 0
      %1853 = vperm.xlu0 %1852, %v1815
      %v1854 = vpop.permute.xlu0 %1853
      %v1856 = vmul.f32 %v1360, %v1819
      %v1857 = vmul.f32 %v1361, %v1819
      %v1858 = vmul.f32 %v1362, %v1824
      %v1859 = vmul.f32 %v1363, %v1824
      %v1860 = vmul.f32 %v1364, %v1829
      %v1861 = vmul.f32 %v1365, %v1829
      %v1862 = vmul.f32 %v1366, %v1834
      %v1863 = vmul.f32 %v1367, %v1834
      %v1864 = vmul.f32 %v1368, %v1839
      %v1865 = vmul.f32 %v1369, %v1839
      %v1866 = vmul.f32 %v1370, %v1844
      %v1867 = vmul.f32 %v1371, %v1844
      %v1868 = vmul.f32 %v1372, %v1849
      %v1869 = vmul.f32 %v1373, %v1849
      %v1870 = vmul.f32 %v1374, %v1854
      %v1871 = vmul.f32 %v1375, %v1854
      %1873 = vset.pattern.permute.xlu0 0
      %1874 = vperm.xlu0 %1873, %v1055
      %v1875 = vpop.permute.xlu0 %1874
      %1878 = vset.pattern.permute.xlu0 0
      %1879 = vperm.xlu0 %1878, %v1056
      %v1880 = vpop.permute.xlu0 %1879
      %1883 = vset.pattern.permute.xlu0 0
      %1884 = vperm.xlu0 %1883, %v1057
      %v1885 = vpop.permute.xlu0 %1884
      %1888 = vset.pattern.permute.xlu0 0
      %1889 = vperm.xlu0 %1888, %v1058
      %v1890 = vpop.permute.xlu0 %1889
      %1893 = vset.pattern.permute.xlu0 0
      %1894 = vperm.xlu0 %1893, %v1059
      %v1895 = vpop.permute.xlu0 %1894
      %1898 = vset.pattern.permute.xlu0 0
      %1899 = vperm.xlu0 %1898, %v1060
      %v1900 = vpop.permute.xlu0 %1899
      %1903 = vset.pattern.permute.xlu0 0
      %1904 = vperm.xlu0 %1903, %v1061
      %v1905 = vpop.permute.xlu0 %1904
      %1908 = vset.pattern.permute.xlu0 0
      %1909 = vperm.xlu0 %1908, %v1062
      %v1910 = vpop.permute.xlu0 %1909
      %v1912 = vmul.f32 %v1856, %v1875
      %v1913 = vmul.f32 %v1857, %v1875
      %v1914 = vmul.f32 %v1858, %v1880
      %v1915 = vmul.f32 %v1859, %v1880
      %v1916 = vmul.f32 %v1860, %v1885
      %v1917 = vmul.f32 %v1861, %v1885
      %v1918 = vmul.f32 %v1862, %v1890
      %v1919 = vmul.f32 %v1863, %v1890
      %v1920 = vmul.f32 %v1864, %v1895
      %v1921 = vmul.f32 %v1865, %v1895
      %v1922 = vmul.f32 %v1866, %v1900
      %v1923 = vmul.f32 %v1867, %v1900
      %v1924 = vmul.f32 %v1868, %v1905
      %v1925 = vmul.f32 %v1869, %v1905
      %v1926 = vmul.f32 %v1870, %v1910
      %v1927 = vmul.f32 %v1871, %v1910
      %1929 = vset.pattern.permute.xlu0 0
      %1930 = vperm.xlu0 %1929, %v1063
      %v1931 = vpop.permute.xlu0 %1930
      %1934 = vset.pattern.permute.xlu0 0
      %1935 = vperm.xlu0 %1934, %v1064
      %v1936 = vpop.permute.xlu0 %1935
      %1939 = vset.pattern.permute.xlu0 0
      %1940 = vperm.xlu0 %1939, %v1065
      %v1941 = vpop.permute.xlu0 %1940
      %1944 = vset.pattern.permute.xlu0 0
      %1945 = vperm.xlu0 %1944, %v1066
      %v1946 = vpop.permute.xlu0 %1945
      %1949 = vset.pattern.permute.xlu0 0
      %1950 = vperm.xlu0 %1949, %v1067
      %v1951 = vpop.permute.xlu0 %1950
      %1954 = vset.pattern.permute.xlu0 0
      %1955 = vperm.xlu0 %1954, %v1068
      %v1956 = vpop.permute.xlu0 %1955
      %1959 = vset.pattern.permute.xlu0 0
      %1960 = vperm.xlu0 %1959, %v1069
      %v1961 = vpop.permute.xlu0 %1960
      %1964 = vset.pattern.permute.xlu0 0
      %1965 = vperm.xlu0 %1964, %v1070
      %v1966 = vpop.permute.xlu0 %1965
      %v1968 = vadd.f32 %v1912, %v1931
      %v1969 = vadd.f32 %v1913, %v1931
      %v1970 = vadd.f32 %v1914, %v1936
      %v1971 = vadd.f32 %v1915, %v1936
      %v1972 = vadd.f32 %v1916, %v1941
      %v1973 = vadd.f32 %v1917, %v1941
      %v1974 = vadd.f32 %v1918, %v1946
      %v1975 = vadd.f32 %v1919, %v1946
      %v1976 = vadd.f32 %v1920, %v1951
      %v1977 = vadd.f32 %v1921, %v1951
      %v1978 = vadd.f32 %v1922, %v1956
      %v1979 = vadd.f32 %v1923, %v1956
      %v1980 = vadd.f32 %v1924, %v1961
      %v1981 = vadd.f32 %v1925, %v1961
      %v1982 = vadd.f32 %v1926, %v1966
      %v1983 = vadd.f32 %v1927, %v1966
      %v1984 = vmax.f32 %v1968, 0.0
      %v1985 = vmax.f32 %v1969, 0.0
      %v1986 = vmax.f32 %v1970, 0.0
      %v1987 = vmax.f32 %v1971, 0.0
      %v1988 = vmax.f32 %v1972, 0.0
      %v1989 = vmax.f32 %v1973, 0.0
      %v1990 = vmax.f32 %v1974, 0.0
      %v1991 = vmax.f32 %v1975, 0.0
      %v1992 = vmax.f32 %v1976, 0.0
      %v1993 = vmax.f32 %v1977, 0.0
      %v1994 = vmax.f32 %v1978, 0.0
      %v1995 = vmax.f32 %v1979, 0.0
      %v1996 = vmax.f32 %v1980, 0.0
      %v1997 = vmax.f32 %v1981, 0.0
      %v1998 = vmax.f32 %v1982, 0.0
      %v1999 = vmax.f32 %v1983, 0.0
      %v2000 = vpack.c.bf16 %v1985, %v1984
      %v2001 = vpack.c.bf16 %v1987, %v1986
      %v2002 = vpack.c.bf16 %v1989, %v1988
      %v2003 = vpack.c.bf16 %v1991, %v1990
      %v2004 = vpack.c.bf16 %v1993, %v1992
      %v2005 = vpack.c.bf16 %v1995, %v1994
      %v2006 = vpack.c.bf16 %v1997, %v1996
      %v2007 = vpack.c.bf16 %v1999, %v1998
      %v2016 = vunpack.c.h.b16 %v2000
      %v2017 = vunpack.c.h.b16 %v2001
      %v2018 = vunpack.c.h.b16 %v2002
      %v2019 = vunpack.c.h.b16 %v2003
      %v2020 = vunpack.c.h.b16 %v2004
      %v2021 = vunpack.c.h.b16 %v2005
      %v2022 = vunpack.c.h.b16 %v2006
      %v2023 = vunpack.c.h.b16 %v2007
      %v2024 = vpack.c.b16 %v2017, %v2016
      %v2025 = vpack.c.b16 %v2019, %v2018
      %v2026 = vpack.c.b16 %v2021, %v2020
      %v2027 = vpack.c.b16 %v2023, %v2022
      %2028 = vrot.lane.b32.xlu0 %v2024, 17
      %v2029 = vpop.permute.xlu0 %2028
      %2030 = vrot.lane.b32.xlu0 %v2025, 17
      %v2031 = vpop.permute.xlu0 %2030
      %2032 = vrot.lane.b32.xlu0 %v2026, 17
      %v2033 = vpop.permute.xlu0 %2032
      %2034 = vrot.lane.b32.xlu0 %v2027, 17
      %v2035 = vpop.permute.xlu0 %2034
      %v2036 = vunpack.c.l.b16 %v2000
      %v2037 = vunpack.c.l.b16 %v2001
      %v2038 = vunpack.c.l.b16 %v2002
      %v2039 = vunpack.c.l.b16 %v2003
      %v2040 = vunpack.c.l.b16 %v2004
      %v2041 = vunpack.c.l.b16 %v2005
      %v2042 = vunpack.c.l.b16 %v2006
      %v2043 = vunpack.c.l.b16 %v2007
      %v2044 = vpack.c.b16 %v2037, %v2036
      %v2045 = vpack.c.b16 %v2039, %v2038
      %v2046 = vpack.c.b16 %v2041, %v2040
      %v2047 = vpack.c.b16 %v2043, %v2042
      %2048 = vrot.lane.b32.xlu0 %v2044, 17
      %v2049 = vpop.permute.xlu0 %2048
      %2050 = vrot.lane.b32.xlu0 %v2045, 17
      %v2051 = vpop.permute.xlu0 %2050
      %2052 = vrot.lane.b32.xlu0 %v2046, 17
      %v2053 = vpop.permute.xlu0 %2052
      %2054 = vrot.lane.b32.xlu0 %v2047, 17
      %v2055 = vpop.permute.xlu0 %2054
      %v2056 = vsel %vm534, %v2049, %v2029
      %v2057 = vsel %vm534, %v2051, %v2031
      %v2058 = vsel %vm534, %v2053, %v2033
      %v2059 = vsel %vm534, %v2055, %v2035
      %v2066 = vsel %vm537, %v2029, %v2049
      %v2070 = vsel %vm537, %v2031, %v2051
      %v2074 = vsel %vm537, %v2033, %v2053
      %v2078 = vsel %vm537, %v2035, %v2055
      %v2080 = vunpack.c.l.bf16 %v2066
      %v2081 = vunpack.c.l.bf16 %v2056
      %v2082 = vunpack.c.h.bf16 %v2066
      %v2083 = vunpack.c.h.bf16 %v2056
      %v2084 = vunpack.c.l.bf16 %v2070
      %v2085 = vunpack.c.l.bf16 %v2057
      %v2086 = vunpack.c.h.bf16 %v2070
      %v2087 = vunpack.c.h.bf16 %v2057
      %v2088 = vunpack.c.l.bf16 %v2074
      %v2089 = vunpack.c.l.bf16 %v2058
      %v2090 = vunpack.c.h.bf16 %v2074
      %v2091 = vunpack.c.h.bf16 %v2058
      %v2092 = vunpack.c.l.bf16 %v2078
      %v2093 = vunpack.c.l.bf16 %v2059
      %v2094 = vunpack.c.h.bf16 %v2078
      %v2095 = vunpack.c.h.bf16 %v2059
      %v2096 = vmul.f32 %v2080, %v557
      %v2097 = vmul.f32 %v2081, %v558
      %v2098 = vmul.f32 %v2082, %v557
      %v2099 = vmul.f32 %v2083, %v558
      %v2100 = vmul.f32 %v2084, %v557
      %v2101 = vmul.f32 %v2085, %v558
      %v2102 = vmul.f32 %v2086, %v557
      %v2103 = vmul.f32 %v2087, %v558
      %v2104 = vmul.f32 %v2088, %v557
      %v2105 = vmul.f32 %v2089, %v558
      %v2106 = vmul.f32 %v2090, %v557
      %v2107 = vmul.f32 %v2091, %v558
      %v2108 = vmul.f32 %v2092, %v557
      %v2109 = vmul.f32 %v2093, %v558
      %v2110 = vmul.f32 %v2094, %v557
      %v2111 = vmul.f32 %v2095, %v558
      %v2112 = vpack.c.bf16 %v2097, %v2096
      %v2113 = vpack.c.bf16 %v2099, %v2098
      %v2114 = vpack.c.bf16 %v2101, %v2100
      %v2115 = vpack.c.bf16 %v2103, %v2102
      %v2116 = vpack.c.bf16 %v2105, %v2104
      %v2117 = vpack.c.bf16 %v2107, %v2106
      %v2118 = vpack.c.bf16 %v2109, %v2108
      %v2119 = vpack.c.bf16 %v2111, %v2110
      %2120 = vrot.lane.b32.xlu0 %v2024, 16
      %v2121 = vpop.permute.xlu0 %2120
      %2122 = vrot.lane.b32.xlu0 %v2025, 16
      %v2123 = vpop.permute.xlu0 %2122
      %2124 = vrot.lane.b32.xlu0 %v2026, 16
      %v2125 = vpop.permute.xlu0 %2124
      %2126 = vrot.lane.b32.xlu0 %v2027, 16
      %v2127 = vpop.permute.xlu0 %2126
      %2128 = vrot.lane.b32.xlu0 %v2044, 16
      %v2129 = vpop.permute.xlu0 %2128
      %2130 = vrot.lane.b32.xlu0 %v2045, 16
      %v2131 = vpop.permute.xlu0 %2130
      %2132 = vrot.lane.b32.xlu0 %v2046, 16
      %v2133 = vpop.permute.xlu0 %2132
      %2134 = vrot.lane.b32.xlu0 %v2047, 16
      %v2135 = vpop.permute.xlu0 %2134
      %v2136 = vsel %vm576, %v2129, %v2121
      %v2137 = vsel %vm576, %v2131, %v2123
      %v2138 = vsel %vm576, %v2133, %v2125
      %v2139 = vsel %vm576, %v2135, %v2127
      %v2146 = vsel %vm579, %v2121, %v2129
      %v2150 = vsel %vm579, %v2123, %v2131
      %v2154 = vsel %vm579, %v2125, %v2133
      %v2158 = vsel %vm579, %v2127, %v2135
      %v2160 = vunpack.c.l.bf16 %v2146
      %v2161 = vunpack.c.l.bf16 %v2136
      %v2162 = vunpack.c.h.bf16 %v2146
      %v2163 = vunpack.c.h.bf16 %v2136
      %v2164 = vunpack.c.l.bf16 %v2150
      %v2165 = vunpack.c.l.bf16 %v2137
      %v2166 = vunpack.c.h.bf16 %v2150
      %v2167 = vunpack.c.h.bf16 %v2137
      %v2168 = vunpack.c.l.bf16 %v2154
      %v2169 = vunpack.c.l.bf16 %v2138
      %v2170 = vunpack.c.h.bf16 %v2154
      %v2171 = vunpack.c.h.bf16 %v2138
      %v2172 = vunpack.c.l.bf16 %v2158
      %v2173 = vunpack.c.l.bf16 %v2139
      %v2174 = vunpack.c.h.bf16 %v2158
      %v2175 = vunpack.c.h.bf16 %v2139
      %v2176 = vmul.f32 %v2160, %v594
      %v2177 = vmul.f32 %v2161, %v595
      %v2178 = vmul.f32 %v2162, %v594
      %v2179 = vmul.f32 %v2163, %v595
      %v2180 = vmul.f32 %v2164, %v594
      %v2181 = vmul.f32 %v2165, %v595
      %v2182 = vmul.f32 %v2166, %v594
      %v2183 = vmul.f32 %v2167, %v595
      %v2184 = vmul.f32 %v2168, %v594
      %v2185 = vmul.f32 %v2169, %v595
      %v2186 = vmul.f32 %v2170, %v594
      %v2187 = vmul.f32 %v2171, %v595
      %v2188 = vmul.f32 %v2172, %v594
      %v2189 = vmul.f32 %v2173, %v595
      %v2190 = vmul.f32 %v2174, %v594
      %v2191 = vmul.f32 %v2175, %v595
      %v2192 = vpack.c.bf16 %v2177, %v2176
      %v2193 = vpack.c.bf16 %v2179, %v2178
      %v2194 = vpack.c.bf16 %v2181, %v2180
      %v2195 = vpack.c.bf16 %v2183, %v2182
      %v2196 = vpack.c.bf16 %v2185, %v2184
      %v2197 = vpack.c.bf16 %v2187, %v2186
      %v2198 = vpack.c.bf16 %v2189, %v2188
      %v2199 = vpack.c.bf16 %v2191, %v2190
      %2200 = vrot.lane.b32.xlu0 %v2024, 15
      %v2201 = vpop.permute.xlu0 %2200
      %2202 = vrot.lane.b32.xlu0 %v2025, 15
      %v2203 = vpop.permute.xlu0 %2202
      %2204 = vrot.lane.b32.xlu0 %v2026, 15
      %v2205 = vpop.permute.xlu0 %2204
      %2206 = vrot.lane.b32.xlu0 %v2027, 15
      %v2207 = vpop.permute.xlu0 %2206
      %2208 = vrot.lane.b32.xlu0 %v2044, 15
      %v2209 = vpop.permute.xlu0 %2208
      %2210 = vrot.lane.b32.xlu0 %v2045, 15
      %v2211 = vpop.permute.xlu0 %2210
      %2212 = vrot.lane.b32.xlu0 %v2046, 15
      %v2213 = vpop.permute.xlu0 %2212
      %2214 = vrot.lane.b32.xlu0 %v2047, 15
      %v2215 = vpop.permute.xlu0 %2214
      %v2216 = vsel %vm613, %v2209, %v2201
      %v2217 = vsel %vm613, %v2211, %v2203
      %v2218 = vsel %vm613, %v2213, %v2205
      %v2219 = vsel %vm613, %v2215, %v2207
      %v2226 = vsel %vm616, %v2201, %v2209
      %v2230 = vsel %vm616, %v2203, %v2211
      %v2234 = vsel %vm616, %v2205, %v2213
      %v2238 = vsel %vm616, %v2207, %v2215
      %v2240 = vunpack.c.l.bf16 %v2226
      %v2241 = vunpack.c.l.bf16 %v2216
      %v2242 = vunpack.c.h.bf16 %v2226
      %v2243 = vunpack.c.h.bf16 %v2216
      %v2244 = vunpack.c.l.bf16 %v2230
      %v2245 = vunpack.c.l.bf16 %v2217
      %v2246 = vunpack.c.h.bf16 %v2230
      %v2247 = vunpack.c.h.bf16 %v2217
      %v2248 = vunpack.c.l.bf16 %v2234
      %v2249 = vunpack.c.l.bf16 %v2218
      %v2250 = vunpack.c.h.bf16 %v2234
      %v2251 = vunpack.c.h.bf16 %v2218
      %v2252 = vunpack.c.l.bf16 %v2238
      %v2253 = vunpack.c.l.bf16 %v2219
      %v2254 = vunpack.c.h.bf16 %v2238
      %v2255 = vunpack.c.h.bf16 %v2219
      %v2256 = vmul.f32 %v2240, %v625
      %v2257 = vmul.f32 %v2241, %v626
      %v2258 = vmul.f32 %v2242, %v625
      %v2259 = vmul.f32 %v2243, %v626
      %v2260 = vmul.f32 %v2244, %v625
      %v2261 = vmul.f32 %v2245, %v626
      %v2262 = vmul.f32 %v2246, %v625
      %v2263 = vmul.f32 %v2247, %v626
      %v2264 = vmul.f32 %v2248, %v625
      %v2265 = vmul.f32 %v2249, %v626
      %v2266 = vmul.f32 %v2250, %v625
      %v2267 = vmul.f32 %v2251, %v626
      %v2268 = vmul.f32 %v2252, %v625
      %v2269 = vmul.f32 %v2253, %v626
      %v2270 = vmul.f32 %v2254, %v625
      %v2271 = vmul.f32 %v2255, %v626
      %v2272 = vpack.c.bf16 %v2257, %v2256
      %v2273 = vpack.c.bf16 %v2259, %v2258
      %v2274 = vpack.c.bf16 %v2261, %v2260
      %v2275 = vpack.c.bf16 %v2263, %v2262
      %v2276 = vpack.c.bf16 %v2265, %v2264
      %v2277 = vpack.c.bf16 %v2267, %v2266
      %v2278 = vpack.c.bf16 %v2269, %v2268
      %v2279 = vpack.c.bf16 %v2271, %v2270
      %2280 = vrot.lane.b32.xlu0 %v2024, 1
      %v2281 = vpop.permute.xlu0 %2280
      %2282 = vrot.lane.b32.xlu0 %v2025, 1
      %v2283 = vpop.permute.xlu0 %2282
      %2284 = vrot.lane.b32.xlu0 %v2026, 1
      %v2285 = vpop.permute.xlu0 %2284
      %2286 = vrot.lane.b32.xlu0 %v2027, 1
      %v2287 = vpop.permute.xlu0 %2286
      %2288 = vrot.lane.b32.xlu0 %v2044, 1
      %v2289 = vpop.permute.xlu0 %2288
      %2290 = vrot.lane.b32.xlu0 %v2045, 1
      %v2291 = vpop.permute.xlu0 %2290
      %2292 = vrot.lane.b32.xlu0 %v2046, 1
      %v2293 = vpop.permute.xlu0 %2292
      %2294 = vrot.lane.b32.xlu0 %v2047, 1
      %v2295 = vpop.permute.xlu0 %2294
      %v2296 = vsel %vm644, %v2289, %v2281
      %v2297 = vsel %vm644, %v2291, %v2283
      %v2298 = vsel %vm644, %v2293, %v2285
      %v2299 = vsel %vm644, %v2295, %v2287
      %v2306 = vsel %vm647, %v2281, %v2289
      %v2310 = vsel %vm647, %v2283, %v2291
      %v2314 = vsel %vm647, %v2285, %v2293
      %v2318 = vsel %vm647, %v2287, %v2295
      %v2320 = vunpack.c.l.bf16 %v2306
      %v2321 = vunpack.c.l.bf16 %v2296
      %v2322 = vunpack.c.h.bf16 %v2306
      %v2323 = vunpack.c.h.bf16 %v2296
      %v2324 = vunpack.c.l.bf16 %v2310
      %v2325 = vunpack.c.l.bf16 %v2297
      %v2326 = vunpack.c.h.bf16 %v2310
      %v2327 = vunpack.c.h.bf16 %v2297
      %v2328 = vunpack.c.l.bf16 %v2314
      %v2329 = vunpack.c.l.bf16 %v2298
      %v2330 = vunpack.c.h.bf16 %v2314
      %v2331 = vunpack.c.h.bf16 %v2298
      %v2332 = vunpack.c.l.bf16 %v2318
      %v2333 = vunpack.c.l.bf16 %v2299
      %v2334 = vunpack.c.h.bf16 %v2318
      %v2335 = vunpack.c.h.bf16 %v2299
      %v2336 = vmul.f32 %v2320, %v656
      %v2337 = vmul.f32 %v2321, %v657
      %v2338 = vmul.f32 %v2322, %v656
      %v2339 = vmul.f32 %v2323, %v657
      %v2340 = vmul.f32 %v2324, %v656
      %v2341 = vmul.f32 %v2325, %v657
      %v2342 = vmul.f32 %v2326, %v656
      %v2343 = vmul.f32 %v2327, %v657
      %v2344 = vmul.f32 %v2328, %v656
      %v2345 = vmul.f32 %v2329, %v657
      %v2346 = vmul.f32 %v2330, %v656
      %v2347 = vmul.f32 %v2331, %v657
      %v2348 = vmul.f32 %v2332, %v656
      %v2349 = vmul.f32 %v2333, %v657
      %v2350 = vmul.f32 %v2334, %v656
      %v2351 = vmul.f32 %v2335, %v657
      %v2352 = vpack.c.bf16 %v2337, %v2336
      %v2353 = vpack.c.bf16 %v2339, %v2338
      %v2354 = vpack.c.bf16 %v2341, %v2340
      %v2355 = vpack.c.bf16 %v2343, %v2342
      %v2356 = vpack.c.bf16 %v2345, %v2344
      %v2357 = vpack.c.bf16 %v2347, %v2346
      %v2358 = vpack.c.bf16 %v2349, %v2348
      %v2359 = vpack.c.bf16 %v2351, %v2350
      %v2360 = vunpack.c.l.bf16 %v2000
      %v2361 = vunpack.c.h.bf16 %v2000
      %v2362 = vunpack.c.l.bf16 %v2001
      %v2363 = vunpack.c.h.bf16 %v2001
      %v2364 = vunpack.c.l.bf16 %v2002
      %v2365 = vunpack.c.h.bf16 %v2002
      %v2366 = vunpack.c.l.bf16 %v2003
      %v2367 = vunpack.c.h.bf16 %v2003
      %v2368 = vunpack.c.l.bf16 %v2004
      %v2369 = vunpack.c.h.bf16 %v2004
      %v2370 = vunpack.c.l.bf16 %v2005
      %v2371 = vunpack.c.h.bf16 %v2005
      %v2372 = vunpack.c.l.bf16 %v2006
      %v2373 = vunpack.c.h.bf16 %v2006
      %v2374 = vunpack.c.l.bf16 %v2007
      %v2375 = vunpack.c.h.bf16 %v2007
      %v2376 = vmul.f32 %v2360, %v664
      %v2377 = vmul.f32 %v2361, %v665
      %v2378 = vmul.f32 %v2362, %v664
      %v2379 = vmul.f32 %v2363, %v665
      %v2380 = vmul.f32 %v2364, %v664
      %v2381 = vmul.f32 %v2365, %v665
      %v2382 = vmul.f32 %v2366, %v664
      %v2383 = vmul.f32 %v2367, %v665
      %v2384 = vmul.f32 %v2368, %v664
      %v2385 = vmul.f32 %v2369, %v665
      %v2386 = vmul.f32 %v2370, %v664
      %v2387 = vmul.f32 %v2371, %v665
      %v2388 = vmul.f32 %v2372, %v664
      %v2389 = vmul.f32 %v2373, %v665
      %v2390 = vmul.f32 %v2374, %v664
      %v2391 = vmul.f32 %v2375, %v665
      %v2392 = vpack.c.bf16 %v2377, %v2376
      %v2393 = vpack.c.bf16 %v2379, %v2378
      %v2394 = vpack.c.bf16 %v2381, %v2380
      %v2395 = vpack.c.bf16 %v2383, %v2382
      %v2396 = vpack.c.bf16 %v2385, %v2384
      %v2397 = vpack.c.bf16 %v2387, %v2386
      %v2398 = vpack.c.bf16 %v2389, %v2388
      %v2399 = vpack.c.bf16 %v2391, %v2390
      %2400 = vrot.lane.b32.xlu0 %v2044, 127
      %v2401 = vpop.permute.xlu0 %2400
      %2402 = vrot.lane.b32.xlu0 %v2024, 127
      %v2403 = vpop.permute.xlu0 %2402
      %2404 = vrot.lane.b32.xlu0 %v2045, 127
      %v2405 = vpop.permute.xlu0 %2404
      %2406 = vrot.lane.b32.xlu0 %v2025, 127
      %v2407 = vpop.permute.xlu0 %2406
      %2408 = vrot.lane.b32.xlu0 %v2046, 127
      %v2409 = vpop.permute.xlu0 %2408
      %2410 = vrot.lane.b32.xlu0 %v2026, 127
      %v2411 = vpop.permute.xlu0 %2410
      %2412 = vrot.lane.b32.xlu0 %v2047, 127
      %v2413 = vpop.permute.xlu0 %2412
      %2414 = vrot.lane.b32.xlu0 %v2027, 127
      %v2415 = vpop.permute.xlu0 %2414
      %v2416 = vsel %vm689, %v2401, %v2403
      %v2417 = vsel %vm689, %v2405, %v2407
      %v2418 = vsel %vm689, %v2409, %v2411
      %v2419 = vsel %vm689, %v2413, %v2415
      %v2426 = vsel %vm697, %v2403, %v2401
      %v2430 = vsel %vm697, %v2407, %v2405
      %v2434 = vsel %vm697, %v2411, %v2409
      %v2438 = vsel %vm697, %v2415, %v2413
      %v2440 = vunpack.c.l.bf16 %v2416
      %v2441 = vunpack.c.l.bf16 %v2426
      %v2442 = vunpack.c.h.bf16 %v2416
      %v2443 = vunpack.c.h.bf16 %v2426
      %v2444 = vunpack.c.l.bf16 %v2417
      %v2445 = vunpack.c.l.bf16 %v2430
      %v2446 = vunpack.c.h.bf16 %v2417
      %v2447 = vunpack.c.h.bf16 %v2430
      %v2448 = vunpack.c.l.bf16 %v2418
      %v2449 = vunpack.c.l.bf16 %v2434
      %v2450 = vunpack.c.h.bf16 %v2418
      %v2451 = vunpack.c.h.bf16 %v2434
      %v2452 = vunpack.c.l.bf16 %v2419
      %v2453 = vunpack.c.l.bf16 %v2438
      %v2454 = vunpack.c.h.bf16 %v2419
      %v2455 = vunpack.c.h.bf16 %v2438
      %v2456 = vmul.f32 %v2440, %v706
      %v2457 = vmul.f32 %v2441, %v707
      %v2458 = vmul.f32 %v2442, %v706
      %v2459 = vmul.f32 %v2443, %v707
      %v2460 = vmul.f32 %v2444, %v706
      %v2461 = vmul.f32 %v2445, %v707
      %v2462 = vmul.f32 %v2446, %v706
      %v2463 = vmul.f32 %v2447, %v707
      %v2464 = vmul.f32 %v2448, %v706
      %v2465 = vmul.f32 %v2449, %v707
      %v2466 = vmul.f32 %v2450, %v706
      %v2467 = vmul.f32 %v2451, %v707
      %v2468 = vmul.f32 %v2452, %v706
      %v2469 = vmul.f32 %v2453, %v707
      %v2470 = vmul.f32 %v2454, %v706
      %v2471 = vmul.f32 %v2455, %v707
      %v2472 = vpack.c.bf16 %v2457, %v2456
      %v2473 = vpack.c.bf16 %v2459, %v2458
      %v2474 = vpack.c.bf16 %v2461, %v2460
      %v2475 = vpack.c.bf16 %v2463, %v2462
      %v2476 = vpack.c.bf16 %v2465, %v2464
      %v2477 = vpack.c.bf16 %v2467, %v2466
      %v2478 = vpack.c.bf16 %v2469, %v2468
      %v2479 = vpack.c.bf16 %v2471, %v2470
      %2480 = vrot.lane.b32.xlu0 %v2044, 113
      %v2481 = vpop.permute.xlu0 %2480
      %2482 = vrot.lane.b32.xlu0 %v2024, 113
      %v2483 = vpop.permute.xlu0 %2482
      %2484 = vrot.lane.b32.xlu0 %v2045, 113
      %v2485 = vpop.permute.xlu0 %2484
      %2486 = vrot.lane.b32.xlu0 %v2025, 113
      %v2487 = vpop.permute.xlu0 %2486
      %2488 = vrot.lane.b32.xlu0 %v2046, 113
      %v2489 = vpop.permute.xlu0 %2488
      %2490 = vrot.lane.b32.xlu0 %v2026, 113
      %v2491 = vpop.permute.xlu0 %2490
      %2492 = vrot.lane.b32.xlu0 %v2047, 113
      %v2493 = vpop.permute.xlu0 %2492
      %2494 = vrot.lane.b32.xlu0 %v2027, 113
      %v2495 = vpop.permute.xlu0 %2494
      %v2496 = vsel %vm720, %v2481, %v2483
      %v2497 = vsel %vm720, %v2485, %v2487
      %v2498 = vsel %vm720, %v2489, %v2491
      %v2499 = vsel %vm720, %v2493, %v2495
      %v2506 = vsel %vm728, %v2483, %v2481
      %v2510 = vsel %vm728, %v2487, %v2485
      %v2514 = vsel %vm728, %v2491, %v2489
      %v2518 = vsel %vm728, %v2495, %v2493
      %v2520 = vunpack.c.l.bf16 %v2496
      %v2521 = vunpack.c.l.bf16 %v2506
      %v2522 = vunpack.c.h.bf16 %v2496
      %v2523 = vunpack.c.h.bf16 %v2506
      %v2524 = vunpack.c.l.bf16 %v2497
      %v2525 = vunpack.c.l.bf16 %v2510
      %v2526 = vunpack.c.h.bf16 %v2497
      %v2527 = vunpack.c.h.bf16 %v2510
      %v2528 = vunpack.c.l.bf16 %v2498
      %v2529 = vunpack.c.l.bf16 %v2514
      %v2530 = vunpack.c.h.bf16 %v2498
      %v2531 = vunpack.c.h.bf16 %v2514
      %v2532 = vunpack.c.l.bf16 %v2499
      %v2533 = vunpack.c.l.bf16 %v2518
      %v2534 = vunpack.c.h.bf16 %v2499
      %v2535 = vunpack.c.h.bf16 %v2518
      %v2536 = vmul.f32 %v2520, %v737
      %v2537 = vmul.f32 %v2521, %v738
      %v2538 = vmul.f32 %v2522, %v737
      %v2539 = vmul.f32 %v2523, %v738
      %v2540 = vmul.f32 %v2524, %v737
      %v2541 = vmul.f32 %v2525, %v738
      %v2542 = vmul.f32 %v2526, %v737
      %v2543 = vmul.f32 %v2527, %v738
      %v2544 = vmul.f32 %v2528, %v737
      %v2545 = vmul.f32 %v2529, %v738
      %v2546 = vmul.f32 %v2530, %v737
      %v2547 = vmul.f32 %v2531, %v738
      %v2548 = vmul.f32 %v2532, %v737
      %v2549 = vmul.f32 %v2533, %v738
      %v2550 = vmul.f32 %v2534, %v737
      %v2551 = vmul.f32 %v2535, %v738
      %v2552 = vpack.c.bf16 %v2537, %v2536
      %v2553 = vpack.c.bf16 %v2539, %v2538
      %v2554 = vpack.c.bf16 %v2541, %v2540
      %v2555 = vpack.c.bf16 %v2543, %v2542
      %v2556 = vpack.c.bf16 %v2545, %v2544
      %v2557 = vpack.c.bf16 %v2547, %v2546
      %v2558 = vpack.c.bf16 %v2549, %v2548
      %v2559 = vpack.c.bf16 %v2551, %v2550
      %2560 = vrot.lane.b32.xlu0 %v2044, 112
      %v2561 = vpop.permute.xlu0 %2560
      %2562 = vrot.lane.b32.xlu0 %v2024, 112
      %v2563 = vpop.permute.xlu0 %2562
      %2564 = vrot.lane.b32.xlu0 %v2045, 112
      %v2565 = vpop.permute.xlu0 %2564
      %2566 = vrot.lane.b32.xlu0 %v2025, 112
      %v2567 = vpop.permute.xlu0 %2566
      %2568 = vrot.lane.b32.xlu0 %v2046, 112
      %v2569 = vpop.permute.xlu0 %2568
      %2570 = vrot.lane.b32.xlu0 %v2026, 112
      %v2571 = vpop.permute.xlu0 %2570
      %2572 = vrot.lane.b32.xlu0 %v2047, 112
      %v2573 = vpop.permute.xlu0 %2572
      %2574 = vrot.lane.b32.xlu0 %v2027, 112
      %v2575 = vpop.permute.xlu0 %2574
      %v2576 = vsel %vm751, %v2561, %v2563
      %v2577 = vsel %vm751, %v2565, %v2567
      %v2578 = vsel %vm751, %v2569, %v2571
      %v2579 = vsel %vm751, %v2573, %v2575
      %v2586 = vsel %vm759, %v2563, %v2561
      %v2590 = vsel %vm759, %v2567, %v2565
      %v2594 = vsel %vm759, %v2571, %v2569
      %v2598 = vsel %vm759, %v2575, %v2573
      %v2600 = vunpack.c.l.bf16 %v2576
      %v2601 = vunpack.c.l.bf16 %v2586
      %v2602 = vunpack.c.h.bf16 %v2576
      %v2603 = vunpack.c.h.bf16 %v2586
      %v2604 = vunpack.c.l.bf16 %v2577
      %v2605 = vunpack.c.l.bf16 %v2590
      %v2606 = vunpack.c.h.bf16 %v2577
      %v2607 = vunpack.c.h.bf16 %v2590
      %v2608 = vunpack.c.l.bf16 %v2578
      %v2609 = vunpack.c.l.bf16 %v2594
      %v2610 = vunpack.c.h.bf16 %v2578
      %v2611 = vunpack.c.h.bf16 %v2594
      %v2612 = vunpack.c.l.bf16 %v2579
      %v2613 = vunpack.c.l.bf16 %v2598
      %v2614 = vunpack.c.h.bf16 %v2579
      %v2615 = vunpack.c.h.bf16 %v2598
      %v2616 = vmul.f32 %v2600, %v768
      %v2617 = vmul.f32 %v2601, %v769
      %v2618 = vmul.f32 %v2602, %v768
      %v2619 = vmul.f32 %v2603, %v769
      %v2620 = vmul.f32 %v2604, %v768
      %v2621 = vmul.f32 %v2605, %v769
      %v2622 = vmul.f32 %v2606, %v768
      %v2623 = vmul.f32 %v2607, %v769
      %v2624 = vmul.f32 %v2608, %v768
      %v2625 = vmul.f32 %v2609, %v769
      %v2626 = vmul.f32 %v2610, %v768
      %v2627 = vmul.f32 %v2611, %v769
      %v2628 = vmul.f32 %v2612, %v768
      %v2629 = vmul.f32 %v2613, %v769
      %v2630 = vmul.f32 %v2614, %v768
      %v2631 = vmul.f32 %v2615, %v769
      %v2632 = vpack.c.bf16 %v2617, %v2616
      %v2633 = vpack.c.bf16 %v2619, %v2618
      %v2634 = vpack.c.bf16 %v2621, %v2620
      %v2635 = vpack.c.bf16 %v2623, %v2622
      %v2636 = vpack.c.bf16 %v2625, %v2624
      %v2637 = vpack.c.bf16 %v2627, %v2626
      %v2638 = vpack.c.bf16 %v2629, %v2628
      %v2639 = vpack.c.bf16 %v2631, %v2630
      %2640 = vrot.lane.b32.xlu0 %v2044, 111
      %v2641 = vpop.permute.xlu0 %2640
      %2642 = vrot.lane.b32.xlu0 %v2024, 111
      %v2643 = vpop.permute.xlu0 %2642
      %2644 = vrot.lane.b32.xlu0 %v2045, 111
      %v2645 = vpop.permute.xlu0 %2644
      %2646 = vrot.lane.b32.xlu0 %v2025, 111
      %v2647 = vpop.permute.xlu0 %2646
      %2648 = vrot.lane.b32.xlu0 %v2046, 111
      %v2649 = vpop.permute.xlu0 %2648
      %2650 = vrot.lane.b32.xlu0 %v2026, 111
      %v2651 = vpop.permute.xlu0 %2650
      %2652 = vrot.lane.b32.xlu0 %v2047, 111
      %v2653 = vpop.permute.xlu0 %2652
      %2654 = vrot.lane.b32.xlu0 %v2027, 111
      %v2655 = vpop.permute.xlu0 %2654
      %v2656 = vsel %vm782, %v2641, %v2643
      %v2657 = vsel %vm782, %v2645, %v2647
      %v2658 = vsel %vm782, %v2649, %v2651
      %v2659 = vsel %vm782, %v2653, %v2655
      %v2666 = vsel %vm790, %v2643, %v2641
      %v2670 = vsel %vm790, %v2647, %v2645
      %v2674 = vsel %vm790, %v2651, %v2649
      %v2678 = vsel %vm790, %v2655, %v2653
      %v2680 = vunpack.c.l.bf16 %v2656
      %v2681 = vunpack.c.l.bf16 %v2666
      %v2682 = vunpack.c.h.bf16 %v2656
      %v2683 = vunpack.c.h.bf16 %v2666
      %v2684 = vunpack.c.l.bf16 %v2657
      %v2685 = vunpack.c.l.bf16 %v2670
      %v2686 = vunpack.c.h.bf16 %v2657
      %v2687 = vunpack.c.h.bf16 %v2670
      %v2688 = vunpack.c.l.bf16 %v2658
      %v2689 = vunpack.c.l.bf16 %v2674
      %v2690 = vunpack.c.h.bf16 %v2658
      %v2691 = vunpack.c.h.bf16 %v2674
      %v2692 = vunpack.c.l.bf16 %v2659
      %v2693 = vunpack.c.l.bf16 %v2678
      %v2694 = vunpack.c.h.bf16 %v2659
      %v2695 = vunpack.c.h.bf16 %v2678
      %v2696 = vmul.f32 %v2680, %v810
      %v2697 = vmul.f32 %v2681, %v811
      %v2698 = vmul.f32 %v2682, %v810
      %v2699 = vmul.f32 %v2683, %v811
      %v2700 = vmul.f32 %v2684, %v810
      %v2701 = vmul.f32 %v2685, %v811
      %v2702 = vmul.f32 %v2686, %v810
      %v2703 = vmul.f32 %v2687, %v811
      %v2704 = vmul.f32 %v2688, %v810
      %v2705 = vmul.f32 %v2689, %v811
      %v2706 = vmul.f32 %v2690, %v810
      %v2707 = vmul.f32 %v2691, %v811
      %v2708 = vmul.f32 %v2692, %v810
      %v2709 = vmul.f32 %v2693, %v811
      %v2710 = vmul.f32 %v2694, %v810
      %v2711 = vmul.f32 %v2695, %v811
      %v2712 = vpack.c.bf16 %v2697, %v2696
      %v2713 = vpack.c.bf16 %v2699, %v2698
      %v2714 = vpack.c.bf16 %v2701, %v2700
      %v2715 = vpack.c.bf16 %v2703, %v2702
      %v2716 = vpack.c.bf16 %v2705, %v2704
      %v2717 = vpack.c.bf16 %v2707, %v2706
      %v2718 = vpack.c.bf16 %v2709, %v2708
      %v2719 = vpack.c.bf16 %v2711, %v2710
      %v2724 = vunpack.c.l.b16 %v2112
      %v2725 = vunpack.c.h.b16 %v2112
      %v2726 = vunpack.c.l.b16 %v2113
      %v2727 = vunpack.c.h.b16 %v2113
      %v2728 = vunpack.c.l.b16 %v2114
      %v2729 = vunpack.c.h.b16 %v2114
      %v2730 = vunpack.c.l.b16 %v2115
      %v2731 = vunpack.c.h.b16 %v2115
      %v2732 = vpack.c.b16 %v2726, %v2724
      %v2733 = vpack.c.b16 %v2727, %v2725
      %v2734 = vpack.c.b16 %v2730, %v2728
      %v2735 = vpack.c.b16 %v2731, %v2729
      %v2744 = vunpack.c.l.b16 %v2192
      %v2745 = vunpack.c.h.b16 %v2192
      %v2746 = vunpack.c.l.b16 %v2193
      %v2747 = vunpack.c.h.b16 %v2193
      %v2748 = vunpack.c.l.b16 %v2194
      %v2749 = vunpack.c.h.b16 %v2194
      %v2750 = vunpack.c.l.b16 %v2195
      %v2751 = vunpack.c.h.b16 %v2195
      %v2752 = vpack.c.b16 %v2746, %v2744
      %v2753 = vpack.c.b16 %v2747, %v2745
      %v2754 = vpack.c.b16 %v2750, %v2748
      %v2755 = vpack.c.b16 %v2751, %v2749
      %v2764 = vunpack.c.l.b16 %v2272
      %v2765 = vunpack.c.h.b16 %v2272
      %v2766 = vunpack.c.l.b16 %v2273
      %v2767 = vunpack.c.h.b16 %v2273
      %v2768 = vunpack.c.l.b16 %v2274
      %v2769 = vunpack.c.h.b16 %v2274
      %v2770 = vunpack.c.l.b16 %v2275
      %v2771 = vunpack.c.h.b16 %v2275
      %v2772 = vpack.c.b16 %v2766, %v2764
      %v2773 = vpack.c.b16 %v2767, %v2765
      %v2774 = vpack.c.b16 %v2770, %v2768
      %v2775 = vpack.c.b16 %v2771, %v2769
      %v2784 = vunpack.c.l.b16 %v2352
      %v2785 = vunpack.c.h.b16 %v2352
      %v2786 = vunpack.c.l.b16 %v2353
      %v2787 = vunpack.c.h.b16 %v2353
      %v2788 = vunpack.c.l.b16 %v2354
      %v2789 = vunpack.c.h.b16 %v2354
      %v2790 = vunpack.c.l.b16 %v2355
      %v2791 = vunpack.c.h.b16 %v2355
      %v2792 = vpack.c.b16 %v2786, %v2784
      %v2793 = vpack.c.b16 %v2787, %v2785
      %v2794 = vpack.c.b16 %v2790, %v2788
      %v2795 = vpack.c.b16 %v2791, %v2789
      %v2804 = vunpack.c.l.b16 %v2392
      %v2805 = vunpack.c.h.b16 %v2392
      %v2806 = vunpack.c.l.b16 %v2393
      %v2807 = vunpack.c.h.b16 %v2393
      %v2808 = vunpack.c.l.b16 %v2394
      %v2809 = vunpack.c.h.b16 %v2394
      %v2810 = vunpack.c.l.b16 %v2395
      %v2811 = vunpack.c.h.b16 %v2395
      %v2812 = vpack.c.b16 %v2806, %v2804
      %v2813 = vpack.c.b16 %v2807, %v2805
      %v2814 = vpack.c.b16 %v2810, %v2808
      %v2815 = vpack.c.b16 %v2811, %v2809
      %v2824 = vunpack.c.l.b16 %v2472
      %v2825 = vunpack.c.h.b16 %v2472
      %v2826 = vunpack.c.l.b16 %v2473
      %v2827 = vunpack.c.h.b16 %v2473
      %v2828 = vunpack.c.l.b16 %v2474
      %v2829 = vunpack.c.h.b16 %v2474
      %v2830 = vunpack.c.l.b16 %v2475
      %v2831 = vunpack.c.h.b16 %v2475
      %v2832 = vpack.c.b16 %v2826, %v2824
      %v2833 = vpack.c.b16 %v2827, %v2825
      %v2834 = vpack.c.b16 %v2830, %v2828
      %v2835 = vpack.c.b16 %v2831, %v2829
      %v2844 = vunpack.c.l.b16 %v2552
      %v2845 = vunpack.c.h.b16 %v2552
      %v2846 = vunpack.c.l.b16 %v2553
      %v2847 = vunpack.c.h.b16 %v2553
      %v2848 = vunpack.c.l.b16 %v2554
      %v2849 = vunpack.c.h.b16 %v2554
      %v2850 = vunpack.c.l.b16 %v2555
      %v2851 = vunpack.c.h.b16 %v2555
      %v2852 = vpack.c.b16 %v2846, %v2844
      %v2853 = vpack.c.b16 %v2847, %v2845
      %v2854 = vpack.c.b16 %v2850, %v2848
      %v2855 = vpack.c.b16 %v2851, %v2849
      %v2864 = vunpack.c.l.b16 %v2632
      %v2865 = vunpack.c.h.b16 %v2632
      %v2866 = vunpack.c.l.b16 %v2633
      %v2867 = vunpack.c.h.b16 %v2633
      %v2868 = vunpack.c.l.b16 %v2634
      %v2869 = vunpack.c.h.b16 %v2634
      %v2870 = vunpack.c.l.b16 %v2635
      %v2871 = vunpack.c.h.b16 %v2635
      %v2872 = vpack.c.b16 %v2866, %v2864
      %v2873 = vpack.c.b16 %v2867, %v2865
      %v2874 = vpack.c.b16 %v2870, %v2868
      %v2875 = vpack.c.b16 %v2871, %v2869
      %v2884 = vunpack.c.l.b16 %v2712
      %v2885 = vunpack.c.h.b16 %v2712
      %v2886 = vunpack.c.l.b16 %v2713
      %v2887 = vunpack.c.h.b16 %v2713
      %v2888 = vunpack.c.l.b16 %v2714
      %v2889 = vunpack.c.h.b16 %v2714
      %v2890 = vunpack.c.l.b16 %v2715
      %v2891 = vunpack.c.h.b16 %v2715
      %v2892 = vpack.c.b16 %v2886, %v2884
      %v2893 = vpack.c.b16 %v2887, %v2885
      %v2894 = vpack.c.b16 %v2890, %v2888
      %v2895 = vpack.c.b16 %v2891, %v2889
      %v2904 = vunpack.c.l.b16 %v2116
      %v2905 = vunpack.c.h.b16 %v2116
      %v2906 = vunpack.c.l.b16 %v2117
      %v2907 = vunpack.c.h.b16 %v2117
      %v2908 = vunpack.c.l.b16 %v2118
      %v2909 = vunpack.c.h.b16 %v2118
      %v2910 = vunpack.c.l.b16 %v2119
      %v2911 = vunpack.c.h.b16 %v2119
      %v2912 = vpack.c.b16 %v2906, %v2904
      %v2913 = vpack.c.b16 %v2907, %v2905
      %v2914 = vpack.c.b16 %v2910, %v2908
      %v2915 = vpack.c.b16 %v2911, %v2909
      %v2924 = vunpack.c.l.b16 %v2196
      %v2925 = vunpack.c.h.b16 %v2196
      %v2926 = vunpack.c.l.b16 %v2197
      %v2927 = vunpack.c.h.b16 %v2197
      %v2928 = vunpack.c.l.b16 %v2198
      %v2929 = vunpack.c.h.b16 %v2198
      %v2930 = vunpack.c.l.b16 %v2199
      %v2931 = vunpack.c.h.b16 %v2199
      %v2932 = vpack.c.b16 %v2926, %v2924
      %v2933 = vpack.c.b16 %v2927, %v2925
      %v2934 = vpack.c.b16 %v2930, %v2928
      %v2935 = vpack.c.b16 %v2931, %v2929
      %v2944 = vunpack.c.l.b16 %v2276
      %v2945 = vunpack.c.h.b16 %v2276
      %v2946 = vunpack.c.l.b16 %v2277
      %v2947 = vunpack.c.h.b16 %v2277
      %v2948 = vunpack.c.l.b16 %v2278
      %v2949 = vunpack.c.h.b16 %v2278
      %v2950 = vunpack.c.l.b16 %v2279
      %v2951 = vunpack.c.h.b16 %v2279
      %v2952 = vpack.c.b16 %v2946, %v2944
      %v2953 = vpack.c.b16 %v2947, %v2945
      %v2954 = vpack.c.b16 %v2950, %v2948
      %v2955 = vpack.c.b16 %v2951, %v2949
      %v2964 = vunpack.c.l.b16 %v2356
      %v2965 = vunpack.c.h.b16 %v2356
      %v2966 = vunpack.c.l.b16 %v2357
      %v2967 = vunpack.c.h.b16 %v2357
      %v2968 = vunpack.c.l.b16 %v2358
      %v2969 = vunpack.c.h.b16 %v2358
      %v2970 = vunpack.c.l.b16 %v2359
      %v2971 = vunpack.c.h.b16 %v2359
      %v2972 = vpack.c.b16 %v2966, %v2964
      %v2973 = vpack.c.b16 %v2967, %v2965
      %v2974 = vpack.c.b16 %v2970, %v2968
      %v2975 = vpack.c.b16 %v2971, %v2969
      %v2984 = vunpack.c.l.b16 %v2396
      %v2985 = vunpack.c.h.b16 %v2396
      %v2986 = vunpack.c.l.b16 %v2397
      %v2987 = vunpack.c.h.b16 %v2397
      %v2988 = vunpack.c.l.b16 %v2398
      %v2989 = vunpack.c.h.b16 %v2398
      %v2990 = vunpack.c.l.b16 %v2399
      %v2991 = vunpack.c.h.b16 %v2399
      %v2992 = vpack.c.b16 %v2986, %v2984
      %v2993 = vpack.c.b16 %v2987, %v2985
      %v2994 = vpack.c.b16 %v2990, %v2988
      %v2995 = vpack.c.b16 %v2991, %v2989
      %v3004 = vunpack.c.l.b16 %v2476
      %v3005 = vunpack.c.h.b16 %v2476
      %v3006 = vunpack.c.l.b16 %v2477
      %v3007 = vunpack.c.h.b16 %v2477
      %v3008 = vunpack.c.l.b16 %v2478
      %v3009 = vunpack.c.h.b16 %v2478
      %v3010 = vunpack.c.l.b16 %v2479
      %v3011 = vunpack.c.h.b16 %v2479
      %v3012 = vpack.c.b16 %v3006, %v3004
      %v3013 = vpack.c.b16 %v3007, %v3005
      %v3014 = vpack.c.b16 %v3010, %v3008
      %v3015 = vpack.c.b16 %v3011, %v3009
      %v3024 = vunpack.c.l.b16 %v2556
      %v3025 = vunpack.c.h.b16 %v2556
      %v3026 = vunpack.c.l.b16 %v2557
      %v3027 = vunpack.c.h.b16 %v2557
      %v3028 = vunpack.c.l.b16 %v2558
      %v3029 = vunpack.c.h.b16 %v2558
      %v3030 = vunpack.c.l.b16 %v2559
      %v3031 = vunpack.c.h.b16 %v2559
      %v3032 = vpack.c.b16 %v3026, %v3024
      %v3033 = vpack.c.b16 %v3027, %v3025
      %v3034 = vpack.c.b16 %v3030, %v3028
      %v3035 = vpack.c.b16 %v3031, %v3029
      %v3044 = vunpack.c.l.b16 %v2636
      %v3045 = vunpack.c.h.b16 %v2636
      %v3046 = vunpack.c.l.b16 %v2637
      %v3047 = vunpack.c.h.b16 %v2637
      %v3048 = vunpack.c.l.b16 %v2638
      %v3049 = vunpack.c.h.b16 %v2638
      %v3050 = vunpack.c.l.b16 %v2639
      %v3051 = vunpack.c.h.b16 %v2639
      %v3052 = vpack.c.b16 %v3046, %v3044
      %v3053 = vpack.c.b16 %v3047, %v3045
      %v3054 = vpack.c.b16 %v3050, %v3048
      %v3055 = vpack.c.b16 %v3051, %v3049
      %v3064 = vunpack.c.l.b16 %v2716
      %v3065 = vunpack.c.h.b16 %v2716
      %v3066 = vunpack.c.l.b16 %v2717
      %v3067 = vunpack.c.h.b16 %v2717
      %v3068 = vunpack.c.l.b16 %v2718
      %v3069 = vunpack.c.h.b16 %v2718
      %v3070 = vunpack.c.l.b16 %v2719
      %v3071 = vunpack.c.h.b16 %v2719
      %v3072 = vpack.c.b16 %v3066, %v3064
      %v3073 = vpack.c.b16 %v3067, %v3065
      %v3074 = vpack.c.b16 %v3070, %v3068
      %v3075 = vpack.c.b16 %v3071, %v3069
      %v3080 = vld [vmem:[%s6] sm:$0xff]
      %v3081 = vld [vmem:[%s6 + $0x8] sm:$0xf]
      %v3082 = vld [vmem:[%s6 + $0xc] sm:$0xff]
      %v3083 = vld [vmem:[%s6 + $0x14] sm:$0xf]
      %v3084 = vld [vmem:[%s6 + $0x18] sm:$0xff]
      %v3085 = vld [vmem:[%s6 + $0x20] sm:$0xf]
      %v3086 = vld [vmem:[%s6 + $0x24] sm:$0xff]
      %v3087 = vld [vmem:[%s6 + $0x2c] sm:$0xf]
      %v3088 = vld [vmem:[%s7] sm:$0xff]
      %v3089 = vld [vmem:[%s7 + $0x8] sm:$0xff]
      %v3090 = vld [vmem:[%s7 + $0x10] sm:$0xff]
      %v3091 = vld [vmem:[%s7 + $0x18] sm:$0xff]
      %3093 = vset.pattern.permute.xlu0 0
      %3094 = vperm.xlu0 %3093, %v3088
      %v3095 = vpop.permute.xlu0 %3094
      %3098 = vset.pattern.permute.xlu0 0
      %3099 = vperm.xlu0 %3098, %v3089
      %v3100 = vpop.permute.xlu0 %3099
      %3103 = vset.pattern.permute.xlu0 0
      %3104 = vperm.xlu0 %3103, %v3090
      %v3105 = vpop.permute.xlu0 %3104
      %3108 = vset.pattern.permute.xlu0 0
      %3109 = vperm.xlu0 %3108, %v3091
      %v3110 = vpop.permute.xlu0 %3109
      %v3120 = vunpack.c.l.b16 %v3080
      %v3121 = vunpack.c.h.b16 %v3080
      %v3122 = vunpack.c.l.b16 %v3081
      %v3123 = vunpack.c.l.b16 %v3082
      %v3124 = vunpack.c.h.b16 %v3082
      %v3125 = vunpack.c.l.b16 %v3083
      %v3126 = vunpack.c.l.b16 %v3084
      %v3127 = vunpack.c.h.b16 %v3084
      %v3128 = vunpack.c.l.b16 %v3085
      %v3129 = vunpack.c.l.b16 %v3086
      %v3130 = vunpack.c.h.b16 %v3086
      %v3131 = vunpack.c.l.b16 %v3087
      %v3132 = vpack.c.b16 %v3123, %v3120
      %v3133 = vpack.c.b16 %v3124, %v3121
      %v3134 = vpack.c.b16 %v3125, %v3122
      %v3135 = vpack.c.b16 %v3129, %v3126
      %v3136 = vpack.c.b16 %v3130, %v3127
      %v3137 = vpack.c.b16 %v3131, %v3128
      %vm3142 = vcmask 261120
      %v3144 = vsel %vm3142, %v3134, 0
      %v3147 = vsel %vm3142, %v3137, 0
      %3149 = vmatpush.bf16.msra.mxu0 %v2794
      %3150 = vmatpush.bf16.msra.mxu0 %v2792
      %3151 = vmatpush.bf16.msra.mxu0 %v2774
      %3152 = vmatpush.bf16.msra.mxu0 %v2772
      %3153 = vmatpush.bf16.msra.mxu0 %v2754
      %3154 = vmatpush.bf16.msra.mxu0 %v2752
      %3155 = vmatpush.bf16.msra.mxu0 %v2734
      %3156 = vmatpush.bf16.msra.mxu0 %v2732
      %3157 = vmatmul.bf16.gmra.mxu0 %v3132
      %v3158 = vpop.f32.mrf.mxu0
      %v3159 = vadd.f32 %v3095, %v3158
      %v3160 = vpop.f32.mrf.mxu0
      %v3161 = vadd.f32 %v3100, %v3160
      %3162 = vmatmul.bf16.gmra.mxu0 %v3135
      %v3163 = vpop.f32.mrf.mxu0
      %v3164 = vadd.f32 %v3105, %v3163
      %v3165 = vpop.f32.mrf.mxu0
      %v3166 = vadd.f32 %v3110, %v3165
      %3167 = vdwg.mxu0
      %3168 = vmatpush.bf16.msra.mxu0 %v2874
      %3169 = vmatpush.bf16.msra.mxu0 %v2872
      %3170 = vmatpush.bf16.msra.mxu0 %v2854
      %3171 = vmatpush.bf16.msra.mxu0 %v2852
      %3172 = vmatpush.bf16.msra.mxu0 %v2834
      %3173 = vmatpush.bf16.msra.mxu0 %v2832
      %3174 = vmatpush.bf16.msra.mxu0 %v2814
      %3175 = vmatpush.bf16.msra.mxu0 %v2812
      %3176 = vmatmul.bf16.gmra.mxu0 %v3133
      %v3177 = vpop.f32.mrf.mxu0
      %v3178 = vadd.f32 %v3159, %v3177
      %v3179 = vpop.f32.mrf.mxu0
      %v3180 = vadd.f32 %v3161, %v3179
      %3181 = vmatmul.bf16.gmra.mxu0 %v3136
      %v3182 = vpop.f32.mrf.mxu0
      %v3183 = vadd.f32 %v3164, %v3182
      %v3184 = vpop.f32.mrf.mxu0
      %v3185 = vadd.f32 %v3166, %v3184
      %3186 = vdwg.mxu0
      %3187 = vmatpush.bf16.msra.mxu0 0
      %3188 = vmatpush.bf16.msra.mxu0 0
      %3189 = vmatpush.bf16.msra.mxu0 0
      %3190 = vmatpush.bf16.msra.mxu0 0
      %3191 = vmatpush.bf16.msra.mxu0 0
      %3192 = vmatpush.bf16.msra.mxu0 0
      %3193 = vmatpush.bf16.msra.mxu0 %v2894
      %3194 = vmatpush.bf16.msra.mxu0 %v2892
      %3195 = vmatmul.bf16.gmra.mxu0 %v3144
      %v3196 = vpop.f32.mrf.mxu0
      %v3197 = vadd.f32 %v3178, %v3196
      %v3198 = vpop.f32.mrf.mxu0
      %v3199 = vadd.f32 %v3180, %v3198
      %3200 = vmatmul.bf16.gmra.mxu0 %v3147
      %v3201 = vpop.f32.mrf.mxu0
      %v3202 = vadd.f32 %v3183, %v3201
      %v3203 = vpop.f32.mrf.mxu0
      %v3204 = vadd.f32 %v3185, %v3203
      %3205 = vdwg.mxu0
      %3206 = vmatpush.bf16.msra.mxu0 %v2795
      %3207 = vmatpush.bf16.msra.mxu0 %v2793
      %3208 = vmatpush.bf16.msra.mxu0 %v2775
      %3209 = vmatpush.bf16.msra.mxu0 %v2773
      %3210 = vmatpush.bf16.msra.mxu0 %v2755
      %3211 = vmatpush.bf16.msra.mxu0 %v2753
      %3212 = vmatpush.bf16.msra.mxu0 %v2735
      %3213 = vmatpush.bf16.msra.mxu0 %v2733
      %3214 = vmatmul.bf16.gmra.mxu0 %v3132
      %v3215 = vpop.f32.mrf.mxu0
      %v3216 = vadd.f32 %v3095, %v3215
      %v3217 = vpop.f32.mrf.mxu0
      %v3218 = vadd.f32 %v3100, %v3217
      %3219 = vmatmul.bf16.gmra.mxu0 %v3135
      %v3220 = vpop.f32.mrf.mxu0
      %v3221 = vadd.f32 %v3105, %v3220
      %v3222 = vpop.f32.mrf.mxu0
      %v3223 = vadd.f32 %v3110, %v3222
      %3224 = vdwg.mxu0
      %3225 = vmatpush.bf16.msra.mxu0 %v2875
      %3226 = vmatpush.bf16.msra.mxu0 %v2873
      %3227 = vmatpush.bf16.msra.mxu0 %v2855
      %3228 = vmatpush.bf16.msra.mxu0 %v2853
      %3229 = vmatpush.bf16.msra.mxu0 %v2835
      %3230 = vmatpush.bf16.msra.mxu0 %v2833
      %3231 = vmatpush.bf16.msra.mxu0 %v2815
      %3232 = vmatpush.bf16.msra.mxu0 %v2813
      %3233 = vmatmul.bf16.gmra.mxu0 %v3133
      %v3234 = vpop.f32.mrf.mxu0
      %v3235 = vadd.f32 %v3216, %v3234
      %v3236 = vpop.f32.mrf.mxu0
      %v3237 = vadd.f32 %v3218, %v3236
      %3238 = vmatmul.bf16.gmra.mxu0 %v3136
      %v3239 = vpop.f32.mrf.mxu0
      %v3240 = vadd.f32 %v3221, %v3239
      %v3241 = vpop.f32.mrf.mxu0
      %v3242 = vadd.f32 %v3223, %v3241
      %3243 = vdwg.mxu0
      %3244 = vmatpush.bf16.msra.mxu0 0
      %3245 = vmatpush.bf16.msra.mxu0 0
      %3246 = vmatpush.bf16.msra.mxu0 0
      %3247 = vmatpush.bf16.msra.mxu0 0
      %3248 = vmatpush.bf16.msra.mxu0 0
      %3249 = vmatpush.bf16.msra.mxu0 0
      %3250 = vmatpush.bf16.msra.mxu0 %v2895
      %3251 = vmatpush.bf16.msra.mxu0 %v2893
      %3252 = vmatmul.bf16.gmra.mxu0 %v3144
      %v3253 = vpop.f32.mrf.mxu0
      %v3254 = vadd.f32 %v3235, %v3253
      %v3255 = vpop.f32.mrf.mxu0
      %v3256 = vadd.f32 %v3237, %v3255
      %3257 = vmatmul.bf16.gmra.mxu0 %v3147
      %v3258 = vpop.f32.mrf.mxu0
      %v3259 = vadd.f32 %v3240, %v3258
      %v3260 = vpop.f32.mrf.mxu0
      %v3261 = vadd.f32 %v3242, %v3260
      %3262 = vdwg.mxu0
      %v3263 = vld [vmem:[%s10] sm:$0xff]
      %v3264 = vld [vmem:[%s10 + $0x8] sm:$0xf]
      %v3265 = vld [vmem:[%s10 + $0xc] sm:$0xff]
      %v3266 = vld [vmem:[%s10 + $0x14] sm:$0xf]
      %v3267 = vld [vmem:[%s10 + $0x18] sm:$0xff]
      %v3268 = vld [vmem:[%s10 + $0x20] sm:$0xf]
      %v3269 = vld [vmem:[%s10 + $0x24] sm:$0xff]
      %v3270 = vld [vmem:[%s10 + $0x2c] sm:$0xf]
      %v3271 = vld [vmem:[%s11] sm:$0xff]
      %v3272 = vld [vmem:[%s11 + $0x8] sm:$0xff]
      %v3273 = vld [vmem:[%s11 + $0x10] sm:$0xff]
      %v3274 = vld [vmem:[%s11 + $0x18] sm:$0xff]
      %3276 = vset.pattern.permute.xlu0 0
      %3277 = vperm.xlu0 %3276, %v3271
      %v3278 = vpop.permute.xlu0 %3277
      %3281 = vset.pattern.permute.xlu0 0
      %3282 = vperm.xlu0 %3281, %v3272
      %v3283 = vpop.permute.xlu0 %3282
      %3286 = vset.pattern.permute.xlu0 0
      %3287 = vperm.xlu0 %3286, %v3273
      %v3288 = vpop.permute.xlu0 %3287
      %3291 = vset.pattern.permute.xlu0 0
      %3292 = vperm.xlu0 %3291, %v3274
      %v3293 = vpop.permute.xlu0 %3292
      %v3303 = vunpack.c.l.b16 %v3263
      %v3304 = vunpack.c.h.b16 %v3263
      %v3305 = vunpack.c.l.b16 %v3264
      %v3306 = vunpack.c.l.b16 %v3265
      %v3307 = vunpack.c.h.b16 %v3265
      %v3308 = vunpack.c.l.b16 %v3266
      %v3309 = vunpack.c.l.b16 %v3267
      %v3310 = vunpack.c.h.b16 %v3267
      %v3311 = vunpack.c.l.b16 %v3268
      %v3312 = vunpack.c.l.b16 %v3269
      %v3313 = vunpack.c.h.b16 %v3269
      %v3314 = vunpack.c.l.b16 %v3270
      %v3315 = vpack.c.b16 %v3306, %v3303
      %v3316 = vpack.c.b16 %v3307, %v3304
      %v3317 = vpack.c.b16 %v3308, %v3305
      %v3318 = vpack.c.b16 %v3312, %v3309
      %v3319 = vpack.c.b16 %v3313, %v3310
      %v3320 = vpack.c.b16 %v3314, %v3311
      %v3326 = vsel %vm3142, %v3317, 0
      %v3329 = vsel %vm3142, %v3320, 0
      %3331 = vmatpush.bf16.msra.mxu0 %v2974
      %3332 = vmatpush.bf16.msra.mxu0 %v2972
      %3333 = vmatpush.bf16.msra.mxu0 %v2954
      %3334 = vmatpush.bf16.msra.mxu0 %v2952
      %3335 = vmatpush.bf16.msra.mxu0 %v2934
      %3336 = vmatpush.bf16.msra.mxu0 %v2932
      %3337 = vmatpush.bf16.msra.mxu0 %v2914
      %3338 = vmatpush.bf16.msra.mxu0 %v2912
      %3339 = vmatmul.bf16.gmra.mxu0 %v3315
      %v3340 = vpop.f32.mrf.mxu0
      %v3341 = vadd.f32 %v3278, %v3340
      %v3342 = vpop.f32.mrf.mxu0
      %v3343 = vadd.f32 %v3283, %v3342
      %3344 = vmatmul.bf16.gmra.mxu0 %v3318
      %v3345 = vpop.f32.mrf.mxu0
      %v3346 = vadd.f32 %v3288, %v3345
      %v3347 = vpop.f32.mrf.mxu0
      %v3348 = vadd.f32 %v3293, %v3347
      %3349 = vdwg.mxu0
      %3350 = vmatpush.bf16.msra.mxu0 %v3054
      %3351 = vmatpush.bf16.msra.mxu0 %v3052
      %3352 = vmatpush.bf16.msra.mxu0 %v3034
      %3353 = vmatpush.bf16.msra.mxu0 %v3032
      %3354 = vmatpush.bf16.msra.mxu0 %v3014
      %3355 = vmatpush.bf16.msra.mxu0 %v3012
      %3356 = vmatpush.bf16.msra.mxu0 %v2994
      %3357 = vmatpush.bf16.msra.mxu0 %v2992
      %3358 = vmatmul.bf16.gmra.mxu0 %v3316
      %v3359 = vpop.f32.mrf.mxu0
      %v3360 = vadd.f32 %v3341, %v3359
      %v3361 = vpop.f32.mrf.mxu0
      %v3362 = vadd.f32 %v3343, %v3361
      %3363 = vmatmul.bf16.gmra.mxu0 %v3319
      %v3364 = vpop.f32.mrf.mxu0
      %v3365 = vadd.f32 %v3346, %v3364
      %v3366 = vpop.f32.mrf.mxu0
      %v3367 = vadd.f32 %v3348, %v3366
      %3368 = vdwg.mxu0
      %3369 = vmatpush.bf16.msra.mxu0 0
      %3370 = vmatpush.bf16.msra.mxu0 0
      %3371 = vmatpush.bf16.msra.mxu0 0
      %3372 = vmatpush.bf16.msra.mxu0 0
      %3373 = vmatpush.bf16.msra.mxu0 0
      %3374 = vmatpush.bf16.msra.mxu0 0
      %3375 = vmatpush.bf16.msra.mxu0 %v3074
      %3376 = vmatpush.bf16.msra.mxu0 %v3072
      %3377 = vmatmul.bf16.gmra.mxu0 %v3326
      %v3378 = vpop.f32.mrf.mxu0
      %v3379 = vadd.f32 %v3360, %v3378
      %v3380 = vpop.f32.mrf.mxu0
      %v3381 = vadd.f32 %v3362, %v3380
      %3382 = vmatmul.bf16.gmra.mxu0 %v3329
      %v3383 = vpop.f32.mrf.mxu0
      %v3384 = vadd.f32 %v3365, %v3383
      %v3385 = vpop.f32.mrf.mxu0
      %v3386 = vadd.f32 %v3367, %v3385
      %3387 = vdwg.mxu0
      %3388 = vmatpush.bf16.msra.mxu0 %v2975
      %3389 = vmatpush.bf16.msra.mxu0 %v2973
      %3390 = vmatpush.bf16.msra.mxu0 %v2955
      %3391 = vmatpush.bf16.msra.mxu0 %v2953
      %3392 = vmatpush.bf16.msra.mxu0 %v2935
      %3393 = vmatpush.bf16.msra.mxu0 %v2933
      %3394 = vmatpush.bf16.msra.mxu0 %v2915
      %3395 = vmatpush.bf16.msra.mxu0 %v2913
      %3396 = vmatmul.bf16.gmra.mxu0 %v3315
      %v3397 = vpop.f32.mrf.mxu0
      %v3398 = vadd.f32 %v3278, %v3397
      %v3399 = vpop.f32.mrf.mxu0
      %v3400 = vadd.f32 %v3283, %v3399
      %3401 = vmatmul.bf16.gmra.mxu0 %v3318
      %v3402 = vpop.f32.mrf.mxu0
      %v3403 = vadd.f32 %v3288, %v3402
      %v3404 = vpop.f32.mrf.mxu0
      %v3405 = vadd.f32 %v3293, %v3404
      %3406 = vdwg.mxu0
      %3407 = vmatpush.bf16.msra.mxu0 %v3055
      %3408 = vmatpush.bf16.msra.mxu0 %v3053
      %3409 = vmatpush.bf16.msra.mxu0 %v3035
      %3410 = vmatpush.bf16.msra.mxu0 %v3033
      %3411 = vmatpush.bf16.msra.mxu0 %v3015
      %3412 = vmatpush.bf16.msra.mxu0 %v3013
      %3413 = vmatpush.bf16.msra.mxu0 %v2995
      %3414 = vmatpush.bf16.msra.mxu0 %v2993
      %3415 = vmatmul.bf16.gmra.mxu0 %v3316
      %v3416 = vpop.f32.mrf.mxu0
      %v3417 = vadd.f32 %v3398, %v3416
      %v3418 = vpop.f32.mrf.mxu0
      %v3419 = vadd.f32 %v3400, %v3418
      %3420 = vmatmul.bf16.gmra.mxu0 %v3319
      %v3421 = vpop.f32.mrf.mxu0
      %v3422 = vadd.f32 %v3403, %v3421
      %v3423 = vpop.f32.mrf.mxu0
      %v3424 = vadd.f32 %v3405, %v3423
      %3425 = vdwg.mxu0
      %3426 = vmatpush.bf16.msra.mxu0 0
      %3427 = vmatpush.bf16.msra.mxu0 0
      %3428 = vmatpush.bf16.msra.mxu0 0
      %3429 = vmatpush.bf16.msra.mxu0 0
      %3430 = vmatpush.bf16.msra.mxu0 0
      %3431 = vmatpush.bf16.msra.mxu0 0
      %3432 = vmatpush.bf16.msra.mxu0 %v3075
      %3433 = vmatpush.bf16.msra.mxu0 %v3073
      %3434 = vmatmul.bf16.gmra.mxu0 %v3326
      %v3435 = vpop.f32.mrf.mxu0
      %v3436 = vadd.f32 %v3417, %v3435
      %v3437 = vpop.f32.mrf.mxu0
      %v3438 = vadd.f32 %v3419, %v3437
      %3439 = vmatmul.bf16.gmra.mxu0 %v3329
      %v3440 = vpop.f32.mrf.mxu0
      %v3441 = vadd.f32 %v3422, %v3440
      %v3442 = vpop.f32.mrf.mxu0
      %v3443 = vadd.f32 %v3424, %v3442
      %3444 = vdwg.mxu0
      %v3445 = vld [vmem:[%s8] sm:$0xff]
      %v3446 = vld [vmem:[%s8 + $0x8] sm:$0xff]
      %v3447 = vld [vmem:[%s8 + $0x10] sm:$0xff]
      %v3448 = vld [vmem:[%s8 + $0x18] sm:$0xff]
      %v3449 = vld [vmem:[%s9] sm:$0xff]
      %v3450 = vld [vmem:[%s9 + $0x8] sm:$0xff]
      %v3451 = vld [vmem:[%s9 + $0x10] sm:$0xff]
      %v3452 = vld [vmem:[%s9 + $0x18] sm:$0xff]
      %v3453 = vadd.f32 %v3197, %v3254
      %3454 = vadd.xlane.f32.xlu0 %v3453
      %v3455 = vpop.xlane.xlu0 %3454
      %v3456 = vadd.f32 %v3199, %v3256
      %3457 = vadd.xlane.f32.xlu0 %v3456
      %v3458 = vpop.xlane.xlu0 %3457
      %v3459 = vadd.f32 %v3202, %v3259
      %3460 = vadd.xlane.f32.xlu0 %v3459
      %v3461 = vpop.xlane.xlu0 %3460
      %v3462 = vadd.f32 %v3204, %v3261
      %3463 = vadd.xlane.f32.xlu0 %v3462
      %v3464 = vpop.xlane.xlu0 %3463
      %v3465 = vsel %vm1095, %v3455, 0.0
      %3466 = vadd.xlane.f32.xlu0 %v3465
      %v3467 = vpop.xlane.xlu0 %3466
      %v3468 = vrot.slane %v3467, 4
      %v3469 = vadd.f32 %v3467, %v3468
      %v3470 = vrot.slane %v3469, 2
      %v3471 = vadd.f32 %v3469, %v3470
      %v3472 = vrot.slane %v3471, 1
      %v3473 = vadd.f32 %v3471, %v3472
      %s3474 = vtos %v3473
      %v3475 = vstv %s3474
      %v3476 = vmul.f32 %v3475, 0.0009765625
      %v3478 = vrot.slane %v3455, 4
      %v3480 = vsel %vm1095, %v3478, 0.0
      %3481 = vadd.xlane.f32.xlu0 %v3480
      %v3482 = vpop.xlane.xlu0 %3481
      %v3483 = vrot.slane %v3482, 4
      %v3484 = vadd.f32 %v3482, %v3483
      %v3485 = vrot.slane %v3484, 2
      %v3486 = vadd.f32 %v3484, %v3485
      %v3487 = vrot.slane %v3486, 1
      %v3488 = vadd.f32 %v3486, %v3487
      %s3489 = vtos %v3488
      %v3490 = vstv %s3489
      %v3491 = vmul.f32 %v3490, 0.0009765625
      %v3492 = vsel %vm1095, %v3458, 0.0
      %3493 = vadd.xlane.f32.xlu0 %v3492
      %v3494 = vpop.xlane.xlu0 %3493
      %v3495 = vrot.slane %v3494, 4
      %v3496 = vadd.f32 %v3494, %v3495
      %v3497 = vrot.slane %v3496, 2
      %v3498 = vadd.f32 %v3496, %v3497
      %v3499 = vrot.slane %v3498, 1
      %v3500 = vadd.f32 %v3498, %v3499
      %s3501 = vtos %v3500
      %v3502 = vstv %s3501
      %v3503 = vmul.f32 %v3502, 0.0009765625
      %v3505 = vrot.slane %v3458, 4
      %v3507 = vsel %vm1095, %v3505, 0.0
      %3508 = vadd.xlane.f32.xlu0 %v3507
      %v3509 = vpop.xlane.xlu0 %3508
      %v3510 = vrot.slane %v3509, 4
      %v3511 = vadd.f32 %v3509, %v3510
      %v3512 = vrot.slane %v3511, 2
      %v3513 = vadd.f32 %v3511, %v3512
      %v3514 = vrot.slane %v3513, 1
      %v3515 = vadd.f32 %v3513, %v3514
      %s3516 = vtos %v3515
      %v3517 = vstv %s3516
      %v3518 = vmul.f32 %v3517, 0.0009765625
      %v3519 = vsel %vm1095, %v3461, 0.0
      %3520 = vadd.xlane.f32.xlu0 %v3519
      %v3521 = vpop.xlane.xlu0 %3520
      %v3522 = vrot.slane %v3521, 4
      %v3523 = vadd.f32 %v3521, %v3522
      %v3524 = vrot.slane %v3523, 2
      %v3525 = vadd.f32 %v3523, %v3524
      %v3526 = vrot.slane %v3525, 1
      %v3527 = vadd.f32 %v3525, %v3526
      %s3528 = vtos %v3527
      %v3529 = vstv %s3528
      %v3530 = vmul.f32 %v3529, 0.0009765625
      %v3532 = vrot.slane %v3461, 4
      %v3534 = vsel %vm1095, %v3532, 0.0
      %3535 = vadd.xlane.f32.xlu0 %v3534
      %v3536 = vpop.xlane.xlu0 %3535
      %v3537 = vrot.slane %v3536, 4
      %v3538 = vadd.f32 %v3536, %v3537
      %v3539 = vrot.slane %v3538, 2
      %v3540 = vadd.f32 %v3538, %v3539
      %v3541 = vrot.slane %v3540, 1
      %v3542 = vadd.f32 %v3540, %v3541
      %s3543 = vtos %v3542
      %v3544 = vstv %s3543
      %v3545 = vmul.f32 %v3544, 0.0009765625
      %v3546 = vsel %vm1095, %v3464, 0.0
      %3547 = vadd.xlane.f32.xlu0 %v3546
      %v3548 = vpop.xlane.xlu0 %3547
      %v3549 = vrot.slane %v3548, 4
      %v3550 = vadd.f32 %v3548, %v3549
      %v3551 = vrot.slane %v3550, 2
      %v3552 = vadd.f32 %v3550, %v3551
      %v3553 = vrot.slane %v3552, 1
      %v3554 = vadd.f32 %v3552, %v3553
      %s3555 = vtos %v3554
      %v3556 = vstv %s3555
      %v3557 = vmul.f32 %v3556, 0.0009765625
      %v3559 = vrot.slane %v3464, 4
      %v3561 = vsel %vm1095, %v3559, 0.0
      %3562 = vadd.xlane.f32.xlu0 %v3561
      %v3563 = vpop.xlane.xlu0 %3562
      %v3564 = vrot.slane %v3563, 4
      %v3565 = vadd.f32 %v3563, %v3564
      %v3566 = vrot.slane %v3565, 2
      %v3567 = vadd.f32 %v3565, %v3566
      %v3568 = vrot.slane %v3567, 1
      %v3569 = vadd.f32 %v3567, %v3568
      %s3570 = vtos %v3569
      %v3571 = vstv %s3570
      %v3572 = vmul.f32 %v3571, 0.0009765625
      %v3573 = vsel %vm669, %v3476, %v3491
      %v3574 = vsel %vm669, %v3503, %v3518
      %v3575 = vsel %vm669, %v3530, %v3545
      %v3576 = vsel %vm669, %v3557, %v3572
      %3578 = vset.pattern.permute.xlu0 0
      %3579 = vperm.xlu0 %3578, %v3573
      %v3580 = vpop.permute.xlu0 %3579
      %3583 = vset.pattern.permute.xlu0 0
      %3584 = vperm.xlu0 %3583, %v3574
      %v3585 = vpop.permute.xlu0 %3584
      %3588 = vset.pattern.permute.xlu0 0
      %3589 = vperm.xlu0 %3588, %v3575
      %v3590 = vpop.permute.xlu0 %3589
      %3593 = vset.pattern.permute.xlu0 0
      %3594 = vperm.xlu0 %3593, %v3576
      %v3595 = vpop.permute.xlu0 %3594
      %v3597 = vsub.f32 %v3197, %v3580
      %v3598 = vsub.f32 %v3254, %v3580
      %v3599 = vsub.f32 %v3199, %v3585
      %v3600 = vsub.f32 %v3256, %v3585
      %v3601 = vsub.f32 %v3202, %v3590
      %v3602 = vsub.f32 %v3259, %v3590
      %v3603 = vsub.f32 %v3204, %v3595
      %v3604 = vsub.f32 %v3261, %v3595
      %v3605 = vmul.f32 %v3597, %v3597
      %v3606 = vmul.f32 %v3598, %v3598
      %v3607 = vmul.f32 %v3599, %v3599
      %v3608 = vmul.f32 %v3600, %v3600
      %v3609 = vmul.f32 %v3601, %v3601
      %v3610 = vmul.f32 %v3602, %v3602
      %v3611 = vmul.f32 %v3603, %v3603
      %v3612 = vmul.f32 %v3604, %v3604
      %v3613 = vadd.f32 %v3605, %v3606
      %3614 = vadd.xlane.f32.xlu0 %v3613
      %v3615 = vpop.xlane.xlu0 %3614
      %v3616 = vadd.f32 %v3607, %v3608
      %3617 = vadd.xlane.f32.xlu0 %v3616
      %v3618 = vpop.xlane.xlu0 %3617
      %v3619 = vadd.f32 %v3609, %v3610
      %3620 = vadd.xlane.f32.xlu0 %v3619
      %v3621 = vpop.xlane.xlu0 %3620
      %v3622 = vadd.f32 %v3611, %v3612
      %3623 = vadd.xlane.f32.xlu0 %v3622
      %v3624 = vpop.xlane.xlu0 %3623
      %v3625 = vsel %vm1095, %v3615, 0.0
      %3626 = vadd.xlane.f32.xlu0 %v3625
      %v3627 = vpop.xlane.xlu0 %3626
      %v3628 = vrot.slane %v3627, 4
      %v3629 = vadd.f32 %v3627, %v3628
      %v3630 = vrot.slane %v3629, 2
      %v3631 = vadd.f32 %v3629, %v3630
      %v3632 = vrot.slane %v3631, 1
      %v3633 = vadd.f32 %v3631, %v3632
      %s3634 = vtos %v3633
      %v3635 = vstv %s3634
      %v3636 = vmul.f32 %v3635, 0.0009765625
      %v3637 = vadd.f32 %v3636, 1e-05
      %v3638 = vrsqrt.pop %v3637
      %v3639 = vmul.f32 %v3638, %v3637
      %v3640 = vmul.f32 %v3639, %v3638
      %v3641 = vmul.f32 0.5, %v3640
      %v3642 = vsub.f32 1.5, %v3641
      %v3643 = vmul.f32 %v3638, %v3642
      %vm3644 = vweird.f32 %v3637
      %vm3645 = vweird.f32 %v3638
      %vm3646 = vmor %vm3644, %vm3645
      %v3647 = vsel %vm3646, %v3638, %v3643
      %v3649 = vrot.slane %v3615, 4
      %v3651 = vsel %vm1095, %v3649, 0.0
      %3652 = vadd.xlane.f32.xlu0 %v3651
      %v3653 = vpop.xlane.xlu0 %3652
      %v3654 = vrot.slane %v3653, 4
      %v3655 = vadd.f32 %v3653, %v3654
      %v3656 = vrot.slane %v3655, 2
      %v3657 = vadd.f32 %v3655, %v3656
      %v3658 = vrot.slane %v3657, 1
      %v3659 = vadd.f32 %v3657, %v3658
      %s3660 = vtos %v3659
      %v3661 = vstv %s3660
      %v3662 = vmul.f32 %v3661, 0.0009765625
      %v3663 = vadd.f32 %v3662, 1e-05
      %v3664 = vrsqrt.pop %v3663
      %v3665 = vmul.f32 %v3664, %v3663
      %v3666 = vmul.f32 %v3665, %v3664
      %v3667 = vmul.f32 0.5, %v3666
      %v3668 = vsub.f32 1.5, %v3667
      %v3669 = vmul.f32 %v3664, %v3668
      %vm3670 = vweird.f32 %v3663
      %vm3671 = vweird.f32 %v3664
      %vm3672 = vmor %vm3670, %vm3671
      %v3673 = vsel %vm3672, %v3664, %v3669
      %v3674 = vsel %vm1095, %v3618, 0.0
      %3675 = vadd.xlane.f32.xlu0 %v3674
      %v3676 = vpop.xlane.xlu0 %3675
      %v3677 = vrot.slane %v3676, 4
      %v3678 = vadd.f32 %v3676, %v3677
      %v3679 = vrot.slane %v3678, 2
      %v3680 = vadd.f32 %v3678, %v3679
      %v3681 = vrot.slane %v3680, 1
      %v3682 = vadd.f32 %v3680, %v3681
      %s3683 = vtos %v3682
      %v3684 = vstv %s3683
      %v3685 = vmul.f32 %v3684, 0.0009765625
      %v3686 = vadd.f32 %v3685, 1e-05
      %v3687 = vrsqrt.pop %v3686
      %v3688 = vmul.f32 %v3687, %v3686
      %v3689 = vmul.f32 %v3688, %v3687
      %v3690 = vmul.f32 0.5, %v3689
      %v3691 = vsub.f32 1.5, %v3690
      %v3692 = vmul.f32 %v3687, %v3691
      %vm3693 = vweird.f32 %v3686
      %vm3694 = vweird.f32 %v3687
      %vm3695 = vmor %vm3693, %vm3694
      %v3696 = vsel %vm3695, %v3687, %v3692
      %v3698 = vrot.slane %v3618, 4
      %v3700 = vsel %vm1095, %v3698, 0.0
      %3701 = vadd.xlane.f32.xlu0 %v3700
      %v3702 = vpop.xlane.xlu0 %3701
      %v3703 = vrot.slane %v3702, 4
      %v3704 = vadd.f32 %v3702, %v3703
      %v3705 = vrot.slane %v3704, 2
      %v3706 = vadd.f32 %v3704, %v3705
      %v3707 = vrot.slane %v3706, 1
      %v3708 = vadd.f32 %v3706, %v3707
      %s3709 = vtos %v3708
      %v3710 = vstv %s3709
      %v3711 = vmul.f32 %v3710, 0.0009765625
      %v3712 = vadd.f32 %v3711, 1e-05
      %v3713 = vrsqrt.pop %v3712
      %v3714 = vmul.f32 %v3713, %v3712
      %v3715 = vmul.f32 %v3714, %v3713
      %v3716 = vmul.f32 0.5, %v3715
      %v3717 = vsub.f32 1.5, %v3716
      %v3718 = vmul.f32 %v3713, %v3717
      %vm3719 = vweird.f32 %v3712
      %vm3720 = vweird.f32 %v3713
      %vm3721 = vmor %vm3719, %vm3720
      %v3722 = vsel %vm3721, %v3713, %v3718
      %v3723 = vsel %vm1095, %v3621, 0.0
      %3724 = vadd.xlane.f32.xlu0 %v3723
      %v3725 = vpop.xlane.xlu0 %3724
      %v3726 = vrot.slane %v3725, 4
      %v3727 = vadd.f32 %v3725, %v3726
      %v3728 = vrot.slane %v3727, 2
      %v3729 = vadd.f32 %v3727, %v3728
      %v3730 = vrot.slane %v3729, 1
      %v3731 = vadd.f32 %v3729, %v3730
      %s3732 = vtos %v3731
      %v3733 = vstv %s3732
      %v3734 = vmul.f32 %v3733, 0.0009765625
      %v3735 = vadd.f32 %v3734, 1e-05
      %v3736 = vrsqrt.pop %v3735
      %v3737 = vmul.f32 %v3736, %v3735
      %v3738 = vmul.f32 %v3737, %v3736
      %v3739 = vmul.f32 0.5, %v3738
      %v3740 = vsub.f32 1.5, %v3739
      %v3741 = vmul.f32 %v3736, %v3740
      %vm3742 = vweird.f32 %v3735
      %vm3743 = vweird.f32 %v3736
      %vm3744 = vmor %vm3742, %vm3743
      %v3745 = vsel %vm3744, %v3736, %v3741
      %v3747 = vrot.slane %v3621, 4
      %v3749 = vsel %vm1095, %v3747, 0.0
      %3750 = vadd.xlane.f32.xlu0 %v3749
      %v3751 = vpop.xlane.xlu0 %3750
      %v3752 = vrot.slane %v3751, 4
      %v3753 = vadd.f32 %v3751, %v3752
      %v3754 = vrot.slane %v3753, 2
      %v3755 = vadd.f32 %v3753, %v3754
      %v3756 = vrot.slane %v3755, 1
      %v3757 = vadd.f32 %v3755, %v3756
      %s3758 = vtos %v3757
      %v3759 = vstv %s3758
      %v3760 = vmul.f32 %v3759, 0.0009765625
      %v3761 = vadd.f32 %v3760, 1e-05
      %v3762 = vrsqrt.pop %v3761
      %v3763 = vmul.f32 %v3762, %v3761
      %v3764 = vmul.f32 %v3763, %v3762
      %v3765 = vmul.f32 0.5, %v3764
      %v3766 = vsub.f32 1.5, %v3765
      %v3767 = vmul.f32 %v3762, %v3766
      %vm3768 = vweird.f32 %v3761
      %vm3769 = vweird.f32 %v3762
      %vm3770 = vmor %vm3768, %vm3769
      %v3771 = vsel %vm3770, %v3762, %v3767
      %v3772 = vsel %vm1095, %v3624, 0.0
      %3773 = vadd.xlane.f32.xlu0 %v3772
      %v3774 = vpop.xlane.xlu0 %3773
      %v3775 = vrot.slane %v3774, 4
      %v3776 = vadd.f32 %v3774, %v3775
      %v3777 = vrot.slane %v3776, 2
      %v3778 = vadd.f32 %v3776, %v3777
      %v3779 = vrot.slane %v3778, 1
      %v3780 = vadd.f32 %v3778, %v3779
      %s3781 = vtos %v3780
      %v3782 = vstv %s3781
      %v3783 = vmul.f32 %v3782, 0.0009765625
      %v3784 = vadd.f32 %v3783, 1e-05
      %v3785 = vrsqrt.pop %v3784
      %v3786 = vmul.f32 %v3785, %v3784
      %v3787 = vmul.f32 %v3786, %v3785
      %v3788 = vmul.f32 0.5, %v3787
      %v3789 = vsub.f32 1.5, %v3788
      %v3790 = vmul.f32 %v3785, %v3789
      %vm3791 = vweird.f32 %v3784
      %vm3792 = vweird.f32 %v3785
      %vm3793 = vmor %vm3791, %vm3792
      %v3794 = vsel %vm3793, %v3785, %v3790
      %v3796 = vrot.slane %v3624, 4
      %v3798 = vsel %vm1095, %v3796, 0.0
      %3799 = vadd.xlane.f32.xlu0 %v3798
      %v3800 = vpop.xlane.xlu0 %3799
      %v3801 = vrot.slane %v3800, 4
      %v3802 = vadd.f32 %v3800, %v3801
      %v3803 = vrot.slane %v3802, 2
      %v3804 = vadd.f32 %v3802, %v3803
      %v3805 = vrot.slane %v3804, 1
      %v3806 = vadd.f32 %v3804, %v3805
      %s3807 = vtos %v3806
      %v3808 = vstv %s3807
      %v3809 = vmul.f32 %v3808, 0.0009765625
      %v3810 = vadd.f32 %v3809, 1e-05
      %v3811 = vrsqrt.pop %v3810
      %v3812 = vmul.f32 %v3811, %v3810
      %v3813 = vmul.f32 %v3812, %v3811
      %v3814 = vmul.f32 0.5, %v3813
      %v3815 = vsub.f32 1.5, %v3814
      %v3816 = vmul.f32 %v3811, %v3815
      %vm3817 = vweird.f32 %v3810
      %vm3818 = vweird.f32 %v3811
      %vm3819 = vmor %vm3817, %vm3818
      %v3820 = vsel %vm3819, %v3811, %v3816
      %v3821 = vsel %vm669, %v3647, %v3673
      %v3822 = vsel %vm669, %v3696, %v3722
      %v3823 = vsel %vm669, %v3745, %v3771
      %v3824 = vsel %vm669, %v3794, %v3820
      %3826 = vset.pattern.permute.xlu0 0
      %3827 = vperm.xlu0 %3826, %v3821
      %v3828 = vpop.permute.xlu0 %3827
      %3831 = vset.pattern.permute.xlu0 0
      %3832 = vperm.xlu0 %3831, %v3822
      %v3833 = vpop.permute.xlu0 %3832
      %3836 = vset.pattern.permute.xlu0 0
      %3837 = vperm.xlu0 %3836, %v3823
      %v3838 = vpop.permute.xlu0 %3837
      %3841 = vset.pattern.permute.xlu0 0
      %3842 = vperm.xlu0 %3841, %v3824
      %v3843 = vpop.permute.xlu0 %3842
      %v3845 = vmul.f32 %v3597, %v3828
      %v3846 = vmul.f32 %v3598, %v3828
      %v3847 = vmul.f32 %v3599, %v3833
      %v3848 = vmul.f32 %v3600, %v3833
      %v3849 = vmul.f32 %v3601, %v3838
      %v3850 = vmul.f32 %v3602, %v3838
      %v3851 = vmul.f32 %v3603, %v3843
      %v3852 = vmul.f32 %v3604, %v3843
      %3854 = vset.pattern.permute.xlu0 0
      %3855 = vperm.xlu0 %3854, %v3445
      %v3856 = vpop.permute.xlu0 %3855
      %3859 = vset.pattern.permute.xlu0 0
      %3860 = vperm.xlu0 %3859, %v3446
      %v3861 = vpop.permute.xlu0 %3860
      %3864 = vset.pattern.permute.xlu0 0
      %3865 = vperm.xlu0 %3864, %v3447
      %v3866 = vpop.permute.xlu0 %3865
      %3869 = vset.pattern.permute.xlu0 0
      %3870 = vperm.xlu0 %3869, %v3448
      %v3871 = vpop.permute.xlu0 %3870
      %v3873 = vmul.f32 %v3845, %v3856
      %v3874 = vmul.f32 %v3846, %v3856
      %v3875 = vmul.f32 %v3847, %v3861
      %v3876 = vmul.f32 %v3848, %v3861
      %v3877 = vmul.f32 %v3849, %v3866
      %v3878 = vmul.f32 %v3850, %v3866
      %v3879 = vmul.f32 %v3851, %v3871
      %v3880 = vmul.f32 %v3852, %v3871
      %3882 = vset.pattern.permute.xlu0 0
      %3883 = vperm.xlu0 %3882, %v3449
      %v3884 = vpop.permute.xlu0 %3883
      %3887 = vset.pattern.permute.xlu0 0
      %3888 = vperm.xlu0 %3887, %v3450
      %v3889 = vpop.permute.xlu0 %3888
      %3892 = vset.pattern.permute.xlu0 0
      %3893 = vperm.xlu0 %3892, %v3451
      %v3894 = vpop.permute.xlu0 %3893
      %3897 = vset.pattern.permute.xlu0 0
      %3898 = vperm.xlu0 %3897, %v3452
      %v3899 = vpop.permute.xlu0 %3898
      %v3901 = vadd.f32 %v3873, %v3884
      %v3902 = vadd.f32 %v3874, %v3884
      %v3903 = vadd.f32 %v3875, %v3889
      %v3904 = vadd.f32 %v3876, %v3889
      %v3905 = vadd.f32 %v3877, %v3894
      %v3906 = vadd.f32 %v3878, %v3894
      %v3907 = vadd.f32 %v3879, %v3899
      %v3908 = vadd.f32 %v3880, %v3899
      %v3909 = vmax.f32 %v3901, 0.0
      %v3910 = vmax.f32 %v3902, 0.0
      %v3911 = vmax.f32 %v3903, 0.0
      %v3912 = vmax.f32 %v3904, 0.0
      %v3913 = vmax.f32 %v3905, 0.0
      %v3914 = vmax.f32 %v3906, 0.0
      %v3915 = vmax.f32 %v3907, 0.0
      %v3916 = vmax.f32 %v3908, 0.0
      %v3917 = vxor.u32 %v3909, 2147483648
      %v3918 = vxor.u32 %v3910, 2147483648
      %v3919 = vxor.u32 %v3911, 2147483648
      %v3920 = vxor.u32 %v3912, 2147483648
      %v3921 = vxor.u32 %v3913, 2147483648
      %v3922 = vxor.u32 %v3914, 2147483648
      %v3923 = vxor.u32 %v3915, 2147483648
      %v3924 = vxor.u32 %v3916, 2147483648
      %v3925 = vmul.f32 %v3917, 1.442695
      %v3926 = vpow.pop %v3925
      %v3927 = vmul.f32 %v3918, 1.442695
      %v3928 = vpow.pop %v3927
      %v3929 = vmul.f32 %v3919, 1.442695
      %v3930 = vpow.pop %v3929
      %v3931 = vmul.f32 %v3920, 1.442695
      %v3932 = vpow.pop %v3931
      %v3933 = vmul.f32 %v3921, 1.442695
      %v3934 = vpow.pop %v3933
      %v3935 = vmul.f32 %v3922, 1.442695
      %v3936 = vpow.pop %v3935
      %v3937 = vmul.f32 %v3923, 1.442695
      %v3938 = vpow.pop %v3937
      %v3939 = vmul.f32 %v3924, 1.442695
      %v3940 = vpow.pop %v3939
      %v3941 = vadd.f32 %v3926, 1.0
      %v3942 = vadd.f32 %v3928, 1.0
      %v3943 = vadd.f32 %v3930, 1.0
      %v3944 = vadd.f32 %v3932, 1.0
      %v3945 = vadd.f32 %v3934, 1.0
      %v3946 = vadd.f32 %v3936, 1.0
      %v3947 = vadd.f32 %v3938, 1.0
      %v3948 = vadd.f32 %v3940, 1.0
      %v3949 = vrcp.pop %v3941
      %v3950 = vmul.f32 %v3941, %v3949
      %v3951 = vsub.f32 1.0, %v3950
      %v3952 = vmul.f32 %v3949, %v3951
      %v3953 = vadd.f32 %v3949, %v3952
      %vm3954 = vweird.f32 %v3941
      %vm3955 = vweird.f32 %v3949
      %vm3956 = vmor %vm3954, %vm3955
      %v3957 = vsel %vm3956, %v3949, %v3953
      %v3958 = vand.u32 2147483647, %v3941
      %vm3959 = vcmp.eq.f32.partialorder %v3958, 8.507059e+37
      %v3960 = vand.u32 %v3941, 2147483648
      %v3961 = vor.u32 1.1754944e-38, %v3960
      %v3962 = vsel %vm3959, %v3961, %v3957
      %v3963 = vmul.f32 1.0, %v3962
      %v3964 = vrcp.pop %v3942
      %v3965 = vmul.f32 %v3942, %v3964
      %v3966 = vsub.f32 1.0, %v3965
      %v3967 = vmul.f32 %v3964, %v3966
      %v3968 = vadd.f32 %v3964, %v3967
      %vm3969 = vweird.f32 %v3942
      %vm3970 = vweird.f32 %v3964
      %vm3971 = vmor %vm3969, %vm3970
      %v3972 = vsel %vm3971, %v3964, %v3968
      %v3973 = vand.u32 2147483647, %v3942
      %vm3974 = vcmp.eq.f32.partialorder %v3973, 8.507059e+37
      %v3975 = vand.u32 %v3942, 2147483648
      %v3976 = vor.u32 1.1754944e-38, %v3975
      %v3977 = vsel %vm3974, %v3976, %v3972
      %v3978 = vmul.f32 1.0, %v3977
      %v3979 = vrcp.pop %v3943
      %v3980 = vmul.f32 %v3943, %v3979
      %v3981 = vsub.f32 1.0, %v3980
      %v3982 = vmul.f32 %v3979, %v3981
      %v3983 = vadd.f32 %v3979, %v3982
      %vm3984 = vweird.f32 %v3943
      %vm3985 = vweird.f32 %v3979
      %vm3986 = vmor %vm3984, %vm3985
      %v3987 = vsel %vm3986, %v3979, %v3983
      %v3988 = vand.u32 2147483647, %v3943
      %vm3989 = vcmp.eq.f32.partialorder %v3988, 8.507059e+37
      %v3990 = vand.u32 %v3943, 2147483648
      %v3991 = vor.u32 1.1754944e-38, %v3990
      %v3992 = vsel %vm3989, %v3991, %v3987
      %v3993 = vmul.f32 1.0, %v3992
      %v3994 = vrcp.pop %v3944
      %v3995 = vmul.f32 %v3944, %v3994
      %v3996 = vsub.f32 1.0, %v3995
      %v3997 = vmul.f32 %v3994, %v3996
      %v3998 = vadd.f32 %v3994, %v3997
      %vm3999 = vweird.f32 %v3944
      %vm4000 = vweird.f32 %v3994
      %vm4001 = vmor %vm3999, %vm4000
      %v4002 = vsel %vm4001, %v3994, %v3998
      %v4003 = vand.u32 2147483647, %v3944
      %vm4004 = vcmp.eq.f32.partialorder %v4003, 8.507059e+37
      %v4005 = vand.u32 %v3944, 2147483648
      %v4006 = vor.u32 1.1754944e-38, %v4005
      %v4007 = vsel %vm4004, %v4006, %v4002
      %v4008 = vmul.f32 1.0, %v4007
      %v4009 = vrcp.pop %v3945
      %v4010 = vmul.f32 %v3945, %v4009
      %v4011 = vsub.f32 1.0, %v4010
      %v4012 = vmul.f32 %v4009, %v4011
      %v4013 = vadd.f32 %v4009, %v4012
      %vm4014 = vweird.f32 %v3945
      %vm4015 = vweird.f32 %v4009
      %vm4016 = vmor %vm4014, %vm4015
      %v4017 = vsel %vm4016, %v4009, %v4013
      %v4018 = vand.u32 2147483647, %v3945
      %vm4019 = vcmp.eq.f32.partialorder %v4018, 8.507059e+37
      %v4020 = vand.u32 %v3945, 2147483648
      %v4021 = vor.u32 1.1754944e-38, %v4020
      %v4022 = vsel %vm4019, %v4021, %v4017
      %v4023 = vmul.f32 1.0, %v4022
      %v4024 = vrcp.pop %v3946
      %v4025 = vmul.f32 %v3946, %v4024
      %v4026 = vsub.f32 1.0, %v4025
      %v4027 = vmul.f32 %v4024, %v4026
      %v4028 = vadd.f32 %v4024, %v4027
      %vm4029 = vweird.f32 %v3946
      %vm4030 = vweird.f32 %v4024
      %vm4031 = vmor %vm4029, %vm4030
      %v4032 = vsel %vm4031, %v4024, %v4028
      %v4033 = vand.u32 2147483647, %v3946
      %vm4034 = vcmp.eq.f32.partialorder %v4033, 8.507059e+37
      %v4035 = vand.u32 %v3946, 2147483648
      %v4036 = vor.u32 1.1754944e-38, %v4035
      %v4037 = vsel %vm4034, %v4036, %v4032
      %v4038 = vmul.f32 1.0, %v4037
      %v4039 = vrcp.pop %v3947
      %v4040 = vmul.f32 %v3947, %v4039
      %v4041 = vsub.f32 1.0, %v4040
      %v4042 = vmul.f32 %v4039, %v4041
      %v4043 = vadd.f32 %v4039, %v4042
      %vm4044 = vweird.f32 %v3947
      %vm4045 = vweird.f32 %v4039
      %vm4046 = vmor %vm4044, %vm4045
      %v4047 = vsel %vm4046, %v4039, %v4043
      %v4048 = vand.u32 2147483647, %v3947
      %vm4049 = vcmp.eq.f32.partialorder %v4048, 8.507059e+37
      %v4050 = vand.u32 %v3947, 2147483648
      %v4051 = vor.u32 1.1754944e-38, %v4050
      %v4052 = vsel %vm4049, %v4051, %v4047
      %v4053 = vmul.f32 1.0, %v4052
      %v4054 = vrcp.pop %v3948
      %v4055 = vmul.f32 %v3948, %v4054
      %v4056 = vsub.f32 1.0, %v4055
      %v4057 = vmul.f32 %v4054, %v4056
      %v4058 = vadd.f32 %v4054, %v4057
      %vm4059 = vweird.f32 %v3948
      %vm4060 = vweird.f32 %v4054
      %vm4061 = vmor %vm4059, %vm4060
      %v4062 = vsel %vm4061, %v4054, %v4058
      %v4063 = vand.u32 2147483647, %v3948
      %vm4064 = vcmp.eq.f32.partialorder %v4063, 8.507059e+37
      %v4065 = vand.u32 %v3948, 2147483648
      %v4066 = vor.u32 1.1754944e-38, %v4065
      %v4067 = vsel %vm4064, %v4066, %v4062
      %v4068 = vmul.f32 1.0, %v4067
      %v4069 = vld [vmem:[%s12] sm:$0xff]
      %v4070 = vld [vmem:[%s12 + $0x8] sm:$0xff]
      %v4071 = vld [vmem:[%s12 + $0x10] sm:$0xff]
      %v4072 = vld [vmem:[%s12 + $0x18] sm:$0xff]
      %v4073 = vld [vmem:[%s13] sm:$0xff]
      %v4074 = vld [vmem:[%s13 + $0x8] sm:$0xff]
      %v4075 = vld [vmem:[%s13 + $0x10] sm:$0xff]
      %v4076 = vld [vmem:[%s13 + $0x18] sm:$0xff]
      %v4077 = vadd.f32 %v3379, %v3436
      %4078 = vadd.xlane.f32.xlu0 %v4077
      %v4079 = vpop.xlane.xlu0 %4078
      %v4080 = vadd.f32 %v3381, %v3438
      %4081 = vadd.xlane.f32.xlu0 %v4080
      %v4082 = vpop.xlane.xlu0 %4081
      %v4083 = vadd.f32 %v3384, %v3441
      %4084 = vadd.xlane.f32.xlu0 %v4083
      %v4085 = vpop.xlane.xlu0 %4084
      %v4086 = vadd.f32 %v3386, %v3443
      %4087 = vadd.xlane.f32.xlu0 %v4086
      %v4088 = vpop.xlane.xlu0 %4087
      %v4089 = vsel %vm1095, %v4079, 0.0
      %4090 = vadd.xlane.f32.xlu0 %v4089
      %v4091 = vpop.xlane.xlu0 %4090
      %v4092 = vrot.slane %v4091, 4
      %v4093 = vadd.f32 %v4091, %v4092
      %v4094 = vrot.slane %v4093, 2
      %v4095 = vadd.f32 %v4093, %v4094
      %v4096 = vrot.slane %v4095, 1
      %v4097 = vadd.f32 %v4095, %v4096
      %s4098 = vtos %v4097
      %v4099 = vstv %s4098
      %v4100 = vmul.f32 %v4099, 0.0009765625
      %v4102 = vrot.slane %v4079, 4
      %v4104 = vsel %vm1095, %v4102, 0.0
      %4105 = vadd.xlane.f32.xlu0 %v4104
      %v4106 = vpop.xlane.xlu0 %4105
      %v4107 = vrot.slane %v4106, 4
      %v4108 = vadd.f32 %v4106, %v4107
      %v4109 = vrot.slane %v4108, 2
      %v4110 = vadd.f32 %v4108, %v4109
      %v4111 = vrot.slane %v4110, 1
      %v4112 = vadd.f32 %v4110, %v4111
      %s4113 = vtos %v4112
      %v4114 = vstv %s4113
      %v4115 = vmul.f32 %v4114, 0.0009765625
      %v4116 = vsel %vm1095, %v4082, 0.0
      %4117 = vadd.xlane.f32.xlu0 %v4116
      %v4118 = vpop.xlane.xlu0 %4117
      %v4119 = vrot.slane %v4118, 4
      %v4120 = vadd.f32 %v4118, %v4119
      %v4121 = vrot.slane %v4120, 2
      %v4122 = vadd.f32 %v4120, %v4121
      %v4123 = vrot.slane %v4122, 1
      %v4124 = vadd.f32 %v4122, %v4123
      %s4125 = vtos %v4124
      %v4126 = vstv %s4125
      %v4127 = vmul.f32 %v4126, 0.0009765625
      %v4129 = vrot.slane %v4082, 4
      %v4131 = vsel %vm1095, %v4129, 0.0
      %4132 = vadd.xlane.f32.xlu0 %v4131
      %v4133 = vpop.xlane.xlu0 %4132
      %v4134 = vrot.slane %v4133, 4
      %v4135 = vadd.f32 %v4133, %v4134
      %v4136 = vrot.slane %v4135, 2
      %v4137 = vadd.f32 %v4135, %v4136
      %v4138 = vrot.slane %v4137, 1
      %v4139 = vadd.f32 %v4137, %v4138
      %s4140 = vtos %v4139
      %v4141 = vstv %s4140
      %v4142 = vmul.f32 %v4141, 0.0009765625
      %v4143 = vsel %vm1095, %v4085, 0.0
      %4144 = vadd.xlane.f32.xlu0 %v4143
      %v4145 = vpop.xlane.xlu0 %4144
      %v4146 = vrot.slane %v4145, 4
      %v4147 = vadd.f32 %v4145, %v4146
      %v4148 = vrot.slane %v4147, 2
      %v4149 = vadd.f32 %v4147, %v4148
      %v4150 = vrot.slane %v4149, 1
      %v4151 = vadd.f32 %v4149, %v4150
      %s4152 = vtos %v4151
      %v4153 = vstv %s4152
      %v4154 = vmul.f32 %v4153, 0.0009765625
      %v4156 = vrot.slane %v4085, 4
      %v4158 = vsel %vm1095, %v4156, 0.0
      %4159 = vadd.xlane.f32.xlu0 %v4158
      %v4160 = vpop.xlane.xlu0 %4159
      %v4161 = vrot.slane %v4160, 4
      %v4162 = vadd.f32 %v4160, %v4161
      %v4163 = vrot.slane %v4162, 2
      %v4164 = vadd.f32 %v4162, %v4163
      %v4165 = vrot.slane %v4164, 1
      %v4166 = vadd.f32 %v4164, %v4165
      %s4167 = vtos %v4166
      %v4168 = vstv %s4167
      %v4169 = vmul.f32 %v4168, 0.0009765625
      %v4170 = vsel %vm1095, %v4088, 0.0
      %4171 = vadd.xlane.f32.xlu0 %v4170
      %v4172 = vpop.xlane.xlu0 %4171
      %v4173 = vrot.slane %v4172, 4
      %v4174 = vadd.f32 %v4172, %v4173
      %v4175 = vrot.slane %v4174, 2
      %v4176 = vadd.f32 %v4174, %v4175
      %v4177 = vrot.slane %v4176, 1
      %v4178 = vadd.f32 %v4176, %v4177
      %s4179 = vtos %v4178
      %v4180 = vstv %s4179
      %v4181 = vmul.f32 %v4180, 0.0009765625
      %v4183 = vrot.slane %v4088, 4
      %v4185 = vsel %vm1095, %v4183, 0.0
      %4186 = vadd.xlane.f32.xlu0 %v4185
      %v4187 = vpop.xlane.xlu0 %4186
      %v4188 = vrot.slane %v4187, 4
      %v4189 = vadd.f32 %v4187, %v4188
      %v4190 = vrot.slane %v4189, 2
      %v4191 = vadd.f32 %v4189, %v4190
      %v4192 = vrot.slane %v4191, 1
      %v4193 = vadd.f32 %v4191, %v4192
      %s4194 = vtos %v4193
      %v4195 = vstv %s4194
      %v4196 = vmul.f32 %v4195, 0.0009765625
      %v4197 = vsel %vm669, %v4100, %v4115
      %v4198 = vsel %vm669, %v4127, %v4142
      %v4199 = vsel %vm669, %v4154, %v4169
      %v4200 = vsel %vm669, %v4181, %v4196
      %4202 = vset.pattern.permute.xlu0 0
      %4203 = vperm.xlu0 %4202, %v4197
      %v4204 = vpop.permute.xlu0 %4203
      %4207 = vset.pattern.permute.xlu0 0
      %4208 = vperm.xlu0 %4207, %v4198
      %v4209 = vpop.permute.xlu0 %4208
      %4212 = vset.pattern.permute.xlu0 0
      %4213 = vperm.xlu0 %4212, %v4199
      %v4214 = vpop.permute.xlu0 %4213
      %4217 = vset.pattern.permute.xlu0 0
      %4218 = vperm.xlu0 %4217, %v4200
      %v4219 = vpop.permute.xlu0 %4218
      %v4221 = vsub.f32 %v3379, %v4204
      %v4222 = vsub.f32 %v3436, %v4204
      %v4223 = vsub.f32 %v3381, %v4209
      %v4224 = vsub.f32 %v3438, %v4209
      %v4225 = vsub.f32 %v3384, %v4214
      %v4226 = vsub.f32 %v3441, %v4214
      %v4227 = vsub.f32 %v3386, %v4219
      %v4228 = vsub.f32 %v3443, %v4219
      %v4229 = vmul.f32 %v4221, %v4221
      %v4230 = vmul.f32 %v4222, %v4222
      %v4231 = vmul.f32 %v4223, %v4223
      %v4232 = vmul.f32 %v4224, %v4224
      %v4233 = vmul.f32 %v4225, %v4225
      %v4234 = vmul.f32 %v4226, %v4226
      %v4235 = vmul.f32 %v4227, %v4227
      %v4236 = vmul.f32 %v4228, %v4228
      %v4237 = vadd.f32 %v4229, %v4230
      %4238 = vadd.xlane.f32.xlu0 %v4237
      %v4239 = vpop.xlane.xlu0 %4238
      %v4240 = vadd.f32 %v4231, %v4232
      %4241 = vadd.xlane.f32.xlu0 %v4240
      %v4242 = vpop.xlane.xlu0 %4241
      %v4243 = vadd.f32 %v4233, %v4234
      %4244 = vadd.xlane.f32.xlu0 %v4243
      %v4245 = vpop.xlane.xlu0 %4244
      %v4246 = vadd.f32 %v4235, %v4236
      %4247 = vadd.xlane.f32.xlu0 %v4246
      %v4248 = vpop.xlane.xlu0 %4247
      %v4249 = vsel %vm1095, %v4239, 0.0
      %4250 = vadd.xlane.f32.xlu0 %v4249
      %v4251 = vpop.xlane.xlu0 %4250
      %v4252 = vrot.slane %v4251, 4
      %v4253 = vadd.f32 %v4251, %v4252
      %v4254 = vrot.slane %v4253, 2
      %v4255 = vadd.f32 %v4253, %v4254
      %v4256 = vrot.slane %v4255, 1
      %v4257 = vadd.f32 %v4255, %v4256
      %s4258 = vtos %v4257
      %v4259 = vstv %s4258
      %v4260 = vmul.f32 %v4259, 0.0009765625
      %v4261 = vadd.f32 %v4260, 1e-05
      %v4262 = vrsqrt.pop %v4261
      %v4263 = vmul.f32 %v4262, %v4261
      %v4264 = vmul.f32 %v4263, %v4262
      %v4265 = vmul.f32 0.5, %v4264
      %v4266 = vsub.f32 1.5, %v4265
      %v4267 = vmul.f32 %v4262, %v4266
      %vm4268 = vweird.f32 %v4261
      %vm4269 = vweird.f32 %v4262
      %vm4270 = vmor %vm4268, %vm4269
      %v4271 = vsel %vm4270, %v4262, %v4267
      %v4273 = vrot.slane %v4239, 4
      %v4275 = vsel %vm1095, %v4273, 0.0
      %4276 = vadd.xlane.f32.xlu0 %v4275
      %v4277 = vpop.xlane.xlu0 %4276
      %v4278 = vrot.slane %v4277, 4
      %v4279 = vadd.f32 %v4277, %v4278
      %v4280 = vrot.slane %v4279, 2
      %v4281 = vadd.f32 %v4279, %v4280
      %v4282 = vrot.slane %v4281, 1
      %v4283 = vadd.f32 %v4281, %v4282
      %s4284 = vtos %v4283
      %v4285 = vstv %s4284
      %v4286 = vmul.f32 %v4285, 0.0009765625
      %v4287 = vadd.f32 %v4286, 1e-05
      %v4288 = vrsqrt.pop %v4287
      %v4289 = vmul.f32 %v4288, %v4287
      %v4290 = vmul.f32 %v4289, %v4288
      %v4291 = vmul.f32 0.5, %v4290
      %v4292 = vsub.f32 1.5, %v4291
      %v4293 = vmul.f32 %v4288, %v4292
      %vm4294 = vweird.f32 %v4287
      %vm4295 = vweird.f32 %v4288
      %vm4296 = vmor %vm4294, %vm4295
      %v4297 = vsel %vm4296, %v4288, %v4293
      %v4298 = vsel %vm1095, %v4242, 0.0
      %4299 = vadd.xlane.f32.xlu0 %v4298
      %v4300 = vpop.xlane.xlu0 %4299
      %v4301 = vrot.slane %v4300, 4
      %v4302 = vadd.f32 %v4300, %v4301
      %v4303 = vrot.slane %v4302, 2
      %v4304 = vadd.f32 %v4302, %v4303
      %v4305 = vrot.slane %v4304, 1
      %v4306 = vadd.f32 %v4304, %v4305
      %s4307 = vtos %v4306
      %v4308 = vstv %s4307
      %v4309 = vmul.f32 %v4308, 0.0009765625
      %v4310 = vadd.f32 %v4309, 1e-05
      %v4311 = vrsqrt.pop %v4310
      %v4312 = vmul.f32 %v4311, %v4310
      %v4313 = vmul.f32 %v4312, %v4311
      %v4314 = vmul.f32 0.5, %v4313
      %v4315 = vsub.f32 1.5, %v4314
      %v4316 = vmul.f32 %v4311, %v4315
      %vm4317 = vweird.f32 %v4310
      %vm4318 = vweird.f32 %v4311
      %vm4319 = vmor %vm4317, %vm4318
      %v4320 = vsel %vm4319, %v4311, %v4316
      %v4322 = vrot.slane %v4242, 4
      %v4324 = vsel %vm1095, %v4322, 0.0
      %4325 = vadd.xlane.f32.xlu0 %v4324
      %v4326 = vpop.xlane.xlu0 %4325
      %v4327 = vrot.slane %v4326, 4
      %v4328 = vadd.f32 %v4326, %v4327
      %v4329 = vrot.slane %v4328, 2
      %v4330 = vadd.f32 %v4328, %v4329
      %v4331 = vrot.slane %v4330, 1
      %v4332 = vadd.f32 %v4330, %v4331
      %s4333 = vtos %v4332
      %v4334 = vstv %s4333
      %v4335 = vmul.f32 %v4334, 0.0009765625
      %v4336 = vadd.f32 %v4335, 1e-05
      %v4337 = vrsqrt.pop %v4336
      %v4338 = vmul.f32 %v4337, %v4336
      %v4339 = vmul.f32 %v4338, %v4337
      %v4340 = vmul.f32 0.5, %v4339
      %v4341 = vsub.f32 1.5, %v4340
      %v4342 = vmul.f32 %v4337, %v4341
      %vm4343 = vweird.f32 %v4336
      %vm4344 = vweird.f32 %v4337
      %vm4345 = vmor %vm4343, %vm4344
      %v4346 = vsel %vm4345, %v4337, %v4342
      %v4347 = vsel %vm1095, %v4245, 0.0
      %4348 = vadd.xlane.f32.xlu0 %v4347
      %v4349 = vpop.xlane.xlu0 %4348
      %v4350 = vrot.slane %v4349, 4
      %v4351 = vadd.f32 %v4349, %v4350
      %v4352 = vrot.slane %v4351, 2
      %v4353 = vadd.f32 %v4351, %v4352
      %v4354 = vrot.slane %v4353, 1
      %v4355 = vadd.f32 %v4353, %v4354
      %s4356 = vtos %v4355
      %v4357 = vstv %s4356
      %v4358 = vmul.f32 %v4357, 0.0009765625
      %v4359 = vadd.f32 %v4358, 1e-05
      %v4360 = vrsqrt.pop %v4359
      %v4361 = vmul.f32 %v4360, %v4359
      %v4362 = vmul.f32 %v4361, %v4360
      %v4363 = vmul.f32 0.5, %v4362
      %v4364 = vsub.f32 1.5, %v4363
      %v4365 = vmul.f32 %v4360, %v4364
      %vm4366 = vweird.f32 %v4359
      %vm4367 = vweird.f32 %v4360
      %vm4368 = vmor %vm4366, %vm4367
      %v4369 = vsel %vm4368, %v4360, %v4365
      %v4371 = vrot.slane %v4245, 4
      %v4373 = vsel %vm1095, %v4371, 0.0
      %4374 = vadd.xlane.f32.xlu0 %v4373
      %v4375 = vpop.xlane.xlu0 %4374
      %v4376 = vrot.slane %v4375, 4
      %v4377 = vadd.f32 %v4375, %v4376
      %v4378 = vrot.slane %v4377, 2
      %v4379 = vadd.f32 %v4377, %v4378
      %v4380 = vrot.slane %v4379, 1
      %v4381 = vadd.f32 %v4379, %v4380
      %s4382 = vtos %v4381
      %v4383 = vstv %s4382
      %v4384 = vmul.f32 %v4383, 0.0009765625
      %v4385 = vadd.f32 %v4384, 1e-05
      %v4386 = vrsqrt.pop %v4385
      %v4387 = vmul.f32 %v4386, %v4385
      %v4388 = vmul.f32 %v4387, %v4386
      %v4389 = vmul.f32 0.5, %v4388
      %v4390 = vsub.f32 1.5, %v4389
      %v4391 = vmul.f32 %v4386, %v4390
      %vm4392 = vweird.f32 %v4385
      %vm4393 = vweird.f32 %v4386
      %vm4394 = vmor %vm4392, %vm4393
      %v4395 = vsel %vm4394, %v4386, %v4391
      %v4396 = vsel %vm1095, %v4248, 0.0
      %4397 = vadd.xlane.f32.xlu0 %v4396
      %v4398 = vpop.xlane.xlu0 %4397
      %v4399 = vrot.slane %v4398, 4
      %v4400 = vadd.f32 %v4398, %v4399
      %v4401 = vrot.slane %v4400, 2
      %v4402 = vadd.f32 %v4400, %v4401
      %v4403 = vrot.slane %v4402, 1
      %v4404 = vadd.f32 %v4402, %v4403
      %s4405 = vtos %v4404
      %v4406 = vstv %s4405
      %v4407 = vmul.f32 %v4406, 0.0009765625
      %v4408 = vadd.f32 %v4407, 1e-05
      %v4409 = vrsqrt.pop %v4408
      %v4410 = vmul.f32 %v4409, %v4408
      %v4411 = vmul.f32 %v4410, %v4409
      %v4412 = vmul.f32 0.5, %v4411
      %v4413 = vsub.f32 1.5, %v4412
      %v4414 = vmul.f32 %v4409, %v4413
      %vm4415 = vweird.f32 %v4408
      %vm4416 = vweird.f32 %v4409
      %vm4417 = vmor %vm4415, %vm4416
      %v4418 = vsel %vm4417, %v4409, %v4414
      %v4420 = vrot.slane %v4248, 4
      %v4422 = vsel %vm1095, %v4420, 0.0
      %4423 = vadd.xlane.f32.xlu0 %v4422
      %v4424 = vpop.xlane.xlu0 %4423
      %v4425 = vrot.slane %v4424, 4
      %v4426 = vadd.f32 %v4424, %v4425
      %v4427 = vrot.slane %v4426, 2
      %v4428 = vadd.f32 %v4426, %v4427
      %v4429 = vrot.slane %v4428, 1
      %v4430 = vadd.f32 %v4428, %v4429
      %s4431 = vtos %v4430
      %v4432 = vstv %s4431
      %v4433 = vmul.f32 %v4432, 0.0009765625
      %v4434 = vadd.f32 %v4433, 1e-05
      %v4435 = vrsqrt.pop %v4434
      %v4436 = vmul.f32 %v4435, %v4434
      %v4437 = vmul.f32 %v4436, %v4435
      %v4438 = vmul.f32 0.5, %v4437
      %v4439 = vsub.f32 1.5, %v4438
      %v4440 = vmul.f32 %v4435, %v4439
      %vm4441 = vweird.f32 %v4434
      %vm4442 = vweird.f32 %v4435
      %vm4443 = vmor %vm4441, %vm4442
      %v4444 = vsel %vm4443, %v4435, %v4440
      %v4445 = vsel %vm669, %v4271, %v4297
      %v4446 = vsel %vm669, %v4320, %v4346
      %v4447 = vsel %vm669, %v4369, %v4395
      %v4448 = vsel %vm669, %v4418, %v4444
      %4450 = vset.pattern.permute.xlu0 0
      %4451 = vperm.xlu0 %4450, %v4445
      %v4452 = vpop.permute.xlu0 %4451
      %4455 = vset.pattern.permute.xlu0 0
      %4456 = vperm.xlu0 %4455, %v4446
      %v4457 = vpop.permute.xlu0 %4456
      %4460 = vset.pattern.permute.xlu0 0
      %4461 = vperm.xlu0 %4460, %v4447
      %v4462 = vpop.permute.xlu0 %4461
      %4465 = vset.pattern.permute.xlu0 0
      %4466 = vperm.xlu0 %4465, %v4448
      %v4467 = vpop.permute.xlu0 %4466
      %v4469 = vmul.f32 %v4221, %v4452
      %v4470 = vmul.f32 %v4222, %v4452
      %v4471 = vmul.f32 %v4223, %v4457
      %v4472 = vmul.f32 %v4224, %v4457
      %v4473 = vmul.f32 %v4225, %v4462
      %v4474 = vmul.f32 %v4226, %v4462
      %v4475 = vmul.f32 %v4227, %v4467
      %v4476 = vmul.f32 %v4228, %v4467
      %4478 = vset.pattern.permute.xlu0 0
      %4479 = vperm.xlu0 %4478, %v4069
      %v4480 = vpop.permute.xlu0 %4479
      %4483 = vset.pattern.permute.xlu0 0
      %4484 = vperm.xlu0 %4483, %v4070
      %v4485 = vpop.permute.xlu0 %4484
      %4488 = vset.pattern.permute.xlu0 0
      %4489 = vperm.xlu0 %4488, %v4071
      %v4490 = vpop.permute.xlu0 %4489
      %4493 = vset.pattern.permute.xlu0 0
      %4494 = vperm.xlu0 %4493, %v4072
      %v4495 = vpop.permute.xlu0 %4494
      %v4497 = vmul.f32 %v4469, %v4480
      %v4498 = vmul.f32 %v4470, %v4480
      %v4499 = vmul.f32 %v4471, %v4485
      %v4500 = vmul.f32 %v4472, %v4485
      %v4501 = vmul.f32 %v4473, %v4490
      %v4502 = vmul.f32 %v4474, %v4490
      %v4503 = vmul.f32 %v4475, %v4495
      %v4504 = vmul.f32 %v4476, %v4495
      %4506 = vset.pattern.permute.xlu0 0
      %4507 = vperm.xlu0 %4506, %v4073
      %v4508 = vpop.permute.xlu0 %4507
      %4511 = vset.pattern.permute.xlu0 0
      %4512 = vperm.xlu0 %4511, %v4074
      %v4513 = vpop.permute.xlu0 %4512
      %4516 = vset.pattern.permute.xlu0 0
      %4517 = vperm.xlu0 %4516, %v4075
      %v4518 = vpop.permute.xlu0 %4517
      %4521 = vset.pattern.permute.xlu0 0
      %4522 = vperm.xlu0 %4521, %v4076
      %v4523 = vpop.permute.xlu0 %4522
      %v4525 = vadd.f32 %v4497, %v4508
      %v4526 = vadd.f32 %v4498, %v4508
      %v4527 = vadd.f32 %v4499, %v4513
      %v4528 = vadd.f32 %v4500, %v4513
      %v4529 = vadd.f32 %v4501, %v4518
      %v4530 = vadd.f32 %v4502, %v4518
      %v4531 = vadd.f32 %v4503, %v4523
      %v4532 = vadd.f32 %v4504, %v4523
      %v4533 = vmax.f32 %v4525, 0.0
      %v4534 = vmax.f32 %v4526, 0.0
      %v4535 = vmax.f32 %v4527, 0.0
      %v4536 = vmax.f32 %v4528, 0.0
      %v4537 = vmax.f32 %v4529, 0.0
      %v4538 = vmax.f32 %v4530, 0.0
      %v4539 = vmax.f32 %v4531, 0.0
      %v4540 = vmax.f32 %v4532, 0.0
      %v4541 = vtanh.pop %v4533
      %v4542 = vtanh.pop %v4534
      %v4543 = vtanh.pop %v4535
      %v4544 = vtanh.pop %v4536
      %v4545 = vtanh.pop %v4537
      %v4546 = vtanh.pop %v4538
      %v4547 = vtanh.pop %v4539
      %v4548 = vtanh.pop %v4540
      %v4549 = vld [vmem:[%s509] sm:$0xff]
      %v4550 = vld [vmem:[%s509 + $0x8] sm:$0xff]
      %v4551 = vld [vmem:[%s509 + $0x10] sm:$0xff]
      %v4552 = vld [vmem:[%s509 + $0x18] sm:$0xff]
      %v4553 = vld [vmem:[%s509 + $0x20] sm:$0xff]
      %v4554 = vld [vmem:[%s509 + $0x28] sm:$0xff]
      %v4555 = vld [vmem:[%s509 + $0x30] sm:$0xff]
      %v4556 = vld [vmem:[%s509 + $0x38] sm:$0xff]
      %v4557 = vsub.f32 %v4541, %v4549
      %v4558 = vsub.f32 %v4542, %v4550
      %v4559 = vsub.f32 %v4543, %v4551
      %v4560 = vsub.f32 %v4544, %v4552
      %v4561 = vsub.f32 %v4545, %v4553
      %v4562 = vsub.f32 %v4546, %v4554
      %v4563 = vsub.f32 %v4547, %v4555
      %v4564 = vsub.f32 %v4548, %v4556
      %v4565 = vmul.f32 %v3963, %v4557
      %v4566 = vmul.f32 %v3978, %v4558
      %v4567 = vmul.f32 %v3993, %v4559
      %v4568 = vmul.f32 %v4008, %v4560
      %v4569 = vmul.f32 %v4023, %v4561
      %v4570 = vmul.f32 %v4038, %v4562
      %v4571 = vmul.f32 %v4053, %v4563
      %v4572 = vmul.f32 %v4068, %v4564
      %v4573 = vadd.f32 %v4549, %v4565
      %v4574 = vadd.f32 %v4550, %v4566
      %v4575 = vadd.f32 %v4551, %v4567
      %v4576 = vadd.f32 %v4552, %v4568
      %v4577 = vadd.f32 %v4553, %v4569
      %v4578 = vadd.f32 %v4554, %v4570
      %v4579 = vadd.f32 %v4555, %v4571
      %v4580 = vadd.f32 %v4556, %v4572
      %4581 = vst [vmem:[%s514] sm:$0xff] %v4573
      %4582 = vst [vmem:[%s514 + $0x8] sm:$0xff] %v4574
      %4583 = vst [vmem:[%s514 + $0x10] sm:$0xff] %v4575
      %4584 = vst [vmem:[%s514 + $0x18] sm:$0xff] %v4576
      %4585 = vst [vmem:[%s514 + $0x20] sm:$0xff] %v4577
      %4586 = vst [vmem:[%s514 + $0x28] sm:$0xff] %v4578
      %4587 = vst [vmem:[%s514 + $0x30] sm:$0xff] %v4579
      %4588 = vst [vmem:[%s514 + $0x38] sm:$0xff] %v4580
      %p4589 = scmp.lt.s32.totalorder %s26, 1
      %s4590 = scalar_select %p4589, %s26, 1
      %s4591 = smul.addr %s4590, 8
      %s4592 = smul.addr %s4591, 8
      %s4593 = scalar_lea.vmem %s15, %s4592
      // Predicated region
      $region81: #{conv_sru_forward.1} parent=79 // pred_check
        %p4594 = pneg %p369
      $region82: #{conv_sru_forward.1} parent=79 // pred_check_branch
        %4596 = sbr.rel (%p4594) target = $region84
      $region83: #{conv_sru_forward.1} parent=79 // pred_region
        _
      $region84: #{conv_sru_forward.1} parent=79 // pred_fallthru
        _
    $region80: #{conv_sru_forward.1} parent=5 // pred_fallthru
      _
    %p4597 = scmp.le.s32.totalorder 2, %s21
    // Predicated region
    $region85: #{conv_sru_forward.1} parent=5 // pred_check
      %p4598 = pneg %p4597
    $region86: #{conv_sru_forward.1} parent=5 // pred_check_branch
      %4600 = sbr.rel (%p4598) target = $region88
    $region87: #{conv_sru_forward.1} parent=5 // pred_region
      %s4601 = ssub.s32 %s21, 2
      // Predicated region
      $region89: #{conv_sru_forward.1} parent=87 // pred_check
        %p4602 = pneg %p375
      $region90: #{conv_sru_forward.1} parent=87 // pred_check_branch
        %4604 = sbr.rel (%p4602) target = $region92
      $region91: #{conv_sru_forward.1} parent=87 // pred_region
        %p4605 = scmp.lt.s32.totalorder %s27, 1
        %s4606 = scalar_select %p4605, %s27, 1
        %s4607 = smul.addr %s4606, 8
        %s4608 = smul.addr %s4607, 8
        %s4609 = scalar_lea.vmem %s15, %s4608
      $region92: #{conv_sru_forward.1} parent=87 // pred_fallthru
        _
    $region88: #{conv_sru_forward.1} parent=5 // pred_fallthru
      _
  $region6: #{conv_sru_forward.1} parent=0 // loop_footer
    %s25 = sadd.s32 1, %s21
  $region7: #{conv_sru_forward.1} parent=0 // loop_footer_branch
    %20 = sbr.rel target = $region3
  $region8: #{conv_sru_forward.1} parent=0 // loop_exit
    _

</llo_original>
